<compile_context>
chip_gen: v7x
topology: tpu7x:2x2x1
jax: 0.10.0
libtpu: 0.0.40
codegen_flags: <defaults>
</compile_context>

<pallas_src>
import math

import jax
import jax.numpy as jnp
from jax import lax
from jax.experimental import pallas as pl
from jax.experimental.pallas import tpu as pltpu


def _normal_render_kernel(n_ref, w_ref, rep_ref, sel_ref, o_ref):
    # n_ref:   (tR, G*S*C)   native-order normals, G rays per row
    # w_ref:   (tR, G*S)     native-order weights
    # rep_ref: (G*S, G*S*C)  constant 0/1: lane (g*S+s) -> lanes (g*S*C+s*C+c)
    # sel_ref: (G*S*C, G*C)  constant 0/1: sums over s, compacts to (g*C+c)
    # o_ref:   (tR, G*C)
    f32 = jnp.float32
    w_rep = jnp.dot(
        w_ref[...].astype(f32), rep_ref[...],
        preferred_element_type=f32, precision=lax.Precision.HIGHEST)
    p = n_ref[...].astype(f32) * w_rep
    out = jnp.dot(
        p, sel_ref[...],
        preferred_element_type=f32, precision=lax.Precision.HIGHEST)
    o_ref[...] = out.astype(o_ref.dtype)


def _selector_constants(G, S, C, dtype=jnp.float32):
    """0/1 matrices mapping weight lanes -> normals lanes, and normals lanes -> output lanes."""
    SC = S * C
    j = jnp.arange(G * SC)
    g_j = j // SC
    s_j = (j % SC) // C
    c_j = j % C

    k = jnp.arange(G * S)
    rep = (k[:, None] == (g_j * S + s_j)[None, :]).astype(dtype)        # (G*S, G*S*C)

    m = jnp.arange(G * C)
    sel = ((g_j[:, None] == (m // C)[None, :])
           & (c_j[:, None] == (m % C)[None, :])).astype(dtype)          # (G*S*C, G*C)
    return rep, sel


def _pick_tile_rows(rows, lane_width, itemsize, target_bytes=3 * 1024 * 1024):
    """Row tile: ~3 MiB of normals per block, multiple of 8, >=2 grid steps when possible."""
    if rows <= 8:
        return rows
    budget = max(8, (target_bytes // max(1, lane_width * itemsize)) // 8 * 8)
    tile = min(budget, 2048)
    if tile >= rows:
        # Keep at least 2 grid steps so both v7x TensorCores stream (neutral on v5e/v6e).
        tile = max(8, ((pl.cdiv(rows, 2) + 7) // 8) * 8)
    return min(tile, rows)


@jax.jit
def normal_renderer(normals: jax.Array, weights: jax.Array) -> jax.Array:
    """Pallas equivalent of NormalRenderer.forward.

    normals: (..., S, C);  weights: (..., S, 1)  ->  (..., C)
    """
    *batch, S, C = normals.shape
    assert S >= 1
    assert tuple(weights.shape) == (*batch, S, 1), "weights must be (..., S, 1)"
    out_dtype = jnp.promote_types(normals.dtype, weights.dtype)

    R = math.prod(batch) if batch else 1
    n_flat = normals.reshape(R, S, C)
    w_flat = weights.reshape(R, S)

    # Pack G rays per row so the lane width is a multiple of 128 (dense vregs,
    # dense DMA, no VMEM padding).  This reshape is layout-preserving (free).
    G = 128 // math.gcd(S * C, 128)
    rows = R // G
    R_main = rows * G

    pieces = []
    if rows > 0:
        W = G * S * C
        GS = G * S
        GC = G * C

        n_main = n_flat if R_main == R else n_flat[:R_main]
        w_main = w_flat if R_main == R else w_flat[:R_main]
        n2 = n_main.reshape(rows, W)
        w2 = w_main.reshape(rows, GS)
        rep, sel = _selector_constants(G, S, C)

        n_bytes = jnp.dtype(normals.dtype).itemsize
        w_bytes = jnp.dtype(weights.dtype).itemsize
        o_bytes = jnp.dtype(out_dtype).itemsize

        tile_rows = _pick_tile_rows(rows, W, n_bytes)
        grid = (pl.cdiv(rows, tile_rows),)   # ragged last block handled by Pallas masking

        out2 = pl.pallas_call(
            _normal_render_kernel,
            out_shape=jax.ShapeDtypeStruct((rows, GC), out_dtype),
            grid=grid,
            in_specs=[
                pl.BlockSpec((tile_rows, W), lambda i: (i, 0)),
                pl.BlockSpec((tile_rows, GS), lambda i: (i, 0)),
                pl.BlockSpec((GS, W), lambda i: (0, 0)),   # constant, fetched once
                pl.BlockSpec((W, GC), lambda i: (0, 0)),   # constant, fetched once
            ],
            out_specs=pl.BlockSpec((tile_rows, GC), lambda i: (i, 0)),
            compiler_params=pltpu.CompilerParams(
                dimension_semantics=("parallel",),
                vmem_limit_bytes=48 * 1024 * 1024,
            ),
            cost_estimate=pl.CostEstimate(
                flops=2 * R_main * S * C,
                transcendentals=0,
                bytes_accessed=R_main * (S * C * n_bytes + S * w_bytes + C * o_bytes),
            ),
        )(n2, w2, rep, sel)
        pieces.append(out2.reshape(R_main, C))

    if R_main < R:
        # < G leftover rays: negligible work, computed directly in jnp.
        tail = jnp.sum(w_flat[R_main:, :, None] * n_flat[R_main:], axis=-2)
        pieces.append(tail.astype(out_dtype))

    out = pieces[0] if len(pieces) == 1 else jnp.concatenate(pieces, axis=0)
    return out.reshape(*batch, C)


if __name__ == "__main__":
    key = jax.random.PRNGKey(0)
    ks = jax.random.split(key, 6)

    def ref(n, w):
        return jnp.sum(w * n, axis=-2)

    S, C = 8, 3

    # --- Test 1: flat rays; row count forces a ragged last block in the grid ---
    R = 640
    n1 = jax.random.normal(ks[0], (R, S, C), dtype=jnp.float32)
    w1 = jax.random.uniform(ks[1], (R, S, 1), dtype=jnp.float32)
    w1 = w1 / jnp.sum(w1, axis=-2, keepdims=True)
    o1 = jax.block_until_ready(normal_renderer(n1, w1))
    assert o1.shape == (R, C)
    assert jnp.allclose(o1, ref(n1, w1), atol=1e-5, rtol=1e-5)

    # --- Test 2: batched leading dims, tiny row count (full-extent block) ---
    B0, B1 = 2, 32
    n2 = jax.random.normal(ks[2], (B0, B1, S, C), dtype=jnp.float32)
    w2 = jax.random.uniform(ks[3], (B0, B1, S, 1), dtype=jnp.float32)
    w2 = w2 / jnp.sum(w2, axis=-2, keepdims=True)
    o2 = jax.block_until_ready(normal_renderer(n2, w2))
    assert o2.shape == (B0, B1, C)
    assert jnp.allclose(o2, ref(n2, w2), atol=1e-5, rtol=1e-5)

    # --- Test 3: ray count not divisible by the lane grouping (jnp tail path) ---
    R3 = 100
    n3 = jax.random.normal(ks[4], (R3, S, C), dtype=jnp.float32)
    w3 = jax.random.uniform(ks[5], (R3, S, 1), dtype=jnp.float32)
    w3 = w3 / jnp.sum(w3, axis=-2, keepdims=True)
    o3 = jax.block_until_ready(normal_renderer(n3, w3))
    assert o3.shape == (R3, C)
    assert jnp.allclose(o3, ref(n3, w3), atol=1e-5, rtol=1e-5)

    print("KERNEL_OK")
</pallas_src>

<mosaic_0001>
module attributes {stable_mosaic.version = 11 : i64} {
  func.func @_normal_render_kernel(%arg0: i32, %arg1: memref<24x384xf32, #tpu.memory_space<vmem>>, %arg2: memref<24x128xf32, #tpu.memory_space<vmem>>, %arg3: memref<128x384xf32, #tpu.memory_space<vmem>>, %arg4: memref<384x48xf32, #tpu.memory_space<vmem>>, %arg5: memref<24x48xf32, #tpu.memory_space<vmem>>) attributes {dimension_semantics = [#tpu.dimension_semantics<parallel>], iteration_bounds = array<i64: 2>, scalar_prefetch = 0 : i64, scratch_operands = 0 : i64, tpu.core_type = #tpu.core_type<tc>, window_params = [{transform_indices = @transform_0, window_bounds = array<i64: 24, 384>}, {transform_indices = @transform_1, window_bounds = array<i64: 24, 128>}, {pipeline_mode = #tpu.pipeline_mode<synchronous>, transform_indices = @transform_2, window_bounds = array<i64: 128, 384>}, {pipeline_mode = #tpu.pipeline_mode<synchronous>, transform_indices = @transform_3, window_bounds = array<i64: 384, 48>}, {transform_indices = @transform_4, window_bounds = array<i64: 24, 48>}]} {
    %c0 = arith.constant 0 : index
    %c0_0 = arith.constant 0 : index
    %0 = vector.load %arg2[%c0, %c0_0] : memref<24x128xf32, #tpu.memory_space<vmem>>, vector<24x128xf32>
    %c0_1 = arith.constant 0 : index
    %c0_2 = arith.constant 0 : index
    %1 = vector.load %arg3[%c0_1, %c0_2] : memref<128x384xf32, #tpu.memory_space<vmem>>, vector<128x384xf32>
    %cst = arith.constant dense<0.000000e+00> : vector<24x384xf32>
    %2 = tpu.matmul %0, %1, %cst {dimension_numbers = #tpu.dot_dimension_numbers<[1], [0], [0], [1], [0, 0, 1, 1], [], []>, precision = #tpu.contract_precision<fp32>} : vector<24x128xf32>, vector<128x384xf32>, vector<24x384xf32> -> vector<24x384xf32>
    %c0_3 = arith.constant 0 : index
    %c0_4 = arith.constant 0 : index
    %3 = vector.load %arg1[%c0_3, %c0_4] : memref<24x384xf32, #tpu.memory_space<vmem>>, vector<24x384xf32>
    %4 = arith.mulf %3, %2 : vector<24x384xf32>
    %c0_5 = arith.constant 0 : index
    %c0_6 = arith.constant 0 : index
    %5 = vector.load %arg4[%c0_5, %c0_6] : memref<384x48xf32, #tpu.memory_space<vmem>>, vector<384x48xf32>
    %cst_7 = arith.constant dense<0.000000e+00> : vector<24x48xf32>
    %6 = tpu.matmul %4, %5, %cst_7 {dimension_numbers = #tpu.dot_dimension_numbers<[1], [0], [0], [1], [0, 0, 1, 1], [], []>, precision = #tpu.contract_precision<fp32>} : vector<24x384xf32>, vector<384x48xf32>, vector<24x48xf32> -> vector<24x48xf32>
    %c0_8 = arith.constant 0 : index
    %c0_9 = arith.constant 0 : index
    %7 = vector.load %arg5[%c0_8, %c0_9] : memref<24x48xf32, #tpu.memory_space<vmem>>, vector<24x48xf32>
    tpu.vector_store %arg5[%c0_8, %c0_9], %6 {strides = array<i32>} : memref<24x48xf32, #tpu.memory_space<vmem>>, vector<24x48xf32>,
    return
  }
  func.func @transform_0(%arg0: i32) -> (i32, i32) {
    %c0_i32 = arith.constant 0 : i32
    %c0_i32_0 = arith.constant 0 : i32
    return %arg0, %c0_i32 : i32, i32
  }
  func.func @transform_1(%arg0: i32) -> (i32, i32) {
    %c0_i32 = arith.constant 0 : i32
    %c0_i32_0 = arith.constant 0 : i32
    return %arg0, %c0_i32 : i32, i32
  }
  func.func @transform_2(%arg0: i32) -> (i32, i32) {
    %c0_i32 = arith.constant 0 : i32
    %c0_i32_0 = arith.constant 0 : i32
    %c0_i32_1 = arith.constant 0 : i32
    return %c0_i32, %c0_i32_0 : i32, i32
  }
  func.func @transform_3(%arg0: i32) -> (i32, i32) {
    %c0_i32 = arith.constant 0 : i32
    %c0_i32_0 = arith.constant 0 : i32
    %c0_i32_1 = arith.constant 0 : i32
    return %c0_i32, %c0_i32_0 : i32, i32
  }
  func.func @transform_4(%arg0: i32) -> (i32, i32) {
    %c0_i32 = arith.constant 0 : i32
    %c0_i32_0 = arith.constant 0 : i32
    return %arg0, %c0_i32 : i32, i32
  }
}

</mosaic_0001>

<llo_original>
// kernel: normal_renderer.1
$region0: #{normal_renderer.1}
  #allocation0 [shape = 'u32[]', space=smem, size = 0x4, offset = 0x4, fixed_abs, tag = 'smem constant byte address 0x4 - core index']
  #allocation1 [shape = 'u32[144,128]{1,0:T(1,128)}', space=vmem, size = 0x12000, scoped, tag = 'internal scratch']
  %s0 = inlined_call_operand.vmem [shape: f32[40,384], index: 0, kind: input, shape index: {}]
  %s1 = inlined_call_operand.vmem [shape: f32[40,128], index: 1, kind: input, shape index: {}]
  %s2 = inlined_call_operand.vmem [shape: f32[128,384], index: 2, kind: input, shape index: {}]
  %s3 = inlined_call_operand.vmem [shape: f32[384,48], index: 3, kind: input, shape index: {}]
  %s4 = inlined_call_operand.vmem [shape: f32[40,48], index: 4, kind: output, shape index: {}]
  %s5 = sld [smem:[#allocation0]]
  $region97: #{normal_renderer.1} parent=0
    _
  %s7 = ssub.s32 1, %s5
  %s8 = scalar_select 0, %s7, %s5
  $region1: #{normal_renderer.1} parent=0
    #allocation2 [shape = 'u8[24576]{0}', space=vmem, size = 0x6000, scoped, tag = 'output window, operand 0']
    loop: start=0, step=1, limit=4
    $region2: #{normal_renderer.1} parent=1 // loop_pre_header
      _
    $region3: #{normal_renderer.1} parent=1 // loop_header
      %s10 = sphi 0, %s14
      %p11 = scmp.ge.s32.totalorder %s10, 4
      %s20 = sphi 0, %s22
      %s23 = sphi 0, %s20
      %s24 = sphi 0, %s23
      %s40 = sphi 0, %s24
      %s46 = sphi 0, %s48
      %s49 = sphi 0, %s46
      %s50 = sphi 0, %s49
      %s66 = sphi 0, %s50
      %s70 = sphi 0, %s70
      %s72 = sphi 0, %s70
      %s73 = sphi 0, %s72
      %s87 = sphi 0, %s73
      %s91 = sphi 0, %s91
      %s93 = sphi 0, %s91
      %s94 = sphi 0, %s93
      %s108 = sphi 0, %s94
      %s114 = sphi 0, %s116
      %s117 = sphi 0, %s114
      %s118 = sphi 0, %s117
      %s134 = sphi 0, %s118
    $region4: #{normal_renderer.1} parent=1 // loop_header_branch
      %13 = sbr.rel (%p11) target = $region8
    $region5: #{normal_renderer.1} parent=1 // loop_body
      %s15 = ssub.s32 %s10, 1
      %s16 = ssub.s32 %s10, 2
      %s17 = sadd.s32 %s10, 1
      %s18 = ssub.s32 %s10, %s17
      %p19 = scmp.eq.s32.totalorder %s18, 0
      %s21 = sadd.s32 %s20, 1
      %s22 = scalar_select %p19, %s20, %s21
      %p25 = pneg %p19
      %p26 = scmp.eq.s32.totalorder %s10, 1
      %p27 = por %p25, %p26
      %p28 = scmp.ne.s32.totalorder %s20, %s23
      %p29 = scmp.eq.s32.totalorder %s10, 0
      %p30 = por %p28, %p29
      %p31 = scmp.ne.s32.totalorder %s20, %s23
      %p32 = scmp.eq.s32.totalorder %s15, 1
      %p33 = por %p31, %p32
      %p34 = scmp.ne.s32.totalorder %s23, %s24
      %p35 = scmp.eq.s32.totalorder %s15, 0
      %p36 = por %p34, %p35
      %p37 = scmp.ne.s32.totalorder %s23, %s24
      %p38 = scmp.eq.s32.totalorder %s16, 1
      %p39 = por %p37, %p38
      %p41 = scmp.ne.s32.totalorder %s24, %s40
      %p42 = scmp.eq.s32.totalorder %s16, 0
      %p43 = por %p41, %p42
      %s44 = ssub.s32 %s10, %s17
      %p45 = scmp.eq.s32.totalorder %s44, 0
      %s47 = sadd.s32 %s46, 1
      %s48 = scalar_select %p45, %s46, %s47
      %p51 = pneg %p45
      %p52 = scmp.eq.s32.totalorder %s10, 1
      %p53 = por %p51, %p52
      %p54 = scmp.ne.s32.totalorder %s46, %s49
      %p55 = scmp.eq.s32.totalorder %s10, 0
      %p56 = por %p54, %p55
      %p57 = scmp.ne.s32.totalorder %s46, %s49
      %p58 = scmp.eq.s32.totalorder %s15, 1
      %p59 = por %p57, %p58
      %p60 = scmp.ne.s32.totalorder %s49, %s50
      %p61 = scmp.eq.s32.totalorder %s15, 0
      %p62 = por %p60, %p61
      %p63 = scmp.ne.s32.totalorder %s49, %s50
      %p64 = scmp.eq.s32.totalorder %s16, 1
      %p65 = por %p63, %p64
      %p67 = scmp.ne.s32.totalorder %s50, %s66
      %p68 = scmp.eq.s32.totalorder %s16, 0
      %p69 = por %p67, %p68
      %s71 = sadd.s32 %s70, 1
      %p74 = scmp.eq.s32.totalorder %s10, 1
      %p75 = scmp.ne.s32.totalorder %s70, %s72
      %p76 = scmp.eq.s32.totalorder %s10, 0
      %p77 = por %p75, %p76
      %p78 = scmp.ne.s32.totalorder %s70, %s72
      %p79 = scmp.eq.s32.totalorder %s15, 1
      %p80 = por %p78, %p79
      %p81 = scmp.ne.s32.totalorder %s72, %s73
      %p82 = scmp.eq.s32.totalorder %s15, 0
      %p83 = por %p81, %p82
      %p84 = scmp.ne.s32.totalorder %s72, %s73
      %p85 = scmp.eq.s32.totalorder %s16, 1
      %p86 = por %p84, %p85
      %p88 = scmp.ne.s32.totalorder %s73, %s87
      %p89 = scmp.eq.s32.totalorder %s16, 0
      %p90 = por %p88, %p89
      %s92 = sadd.s32 %s91, 1
      %p95 = scmp.eq.s32.totalorder %s10, 1
      %p96 = scmp.ne.s32.totalorder %s91, %s93
      %p97 = scmp.eq.s32.totalorder %s10, 0
      %p98 = por %p96, %p97
      %p99 = scmp.ne.s32.totalorder %s91, %s93
      %p100 = scmp.eq.s32.totalorder %s15, 1
      %p101 = por %p99, %p100
      %p102 = scmp.ne.s32.totalorder %s93, %s94
      %p103 = scmp.eq.s32.totalorder %s15, 0
      %p104 = por %p102, %p103
      %p105 = scmp.ne.s32.totalorder %s93, %s94
      %p106 = scmp.eq.s32.totalorder %s16, 1
      %p107 = por %p105, %p106
      %p109 = scmp.ne.s32.totalorder %s94, %s108
      %p110 = scmp.eq.s32.totalorder %s16, 0
      %p111 = por %p109, %p110
      %s112 = ssub.s32 %s10, %s17
      %p113 = scmp.eq.s32.totalorder %s112, 0
      %s115 = sadd.s32 %s114, 1
      %s116 = scalar_select %p113, %s114, %s115
      %p119 = pneg %p113
      %p120 = scmp.eq.s32.totalorder %s10, 1
      %p121 = por %p119, %p120
      %p122 = scmp.ne.s32.totalorder %s114, %s117
      %p123 = scmp.eq.s32.totalorder %s10, 0
      %p124 = por %p122, %p123
      %p125 = scmp.ne.s32.totalorder %s114, %s117
      %p126 = scmp.eq.s32.totalorder %s15, 1
      %p127 = por %p125, %p126
      %p128 = scmp.ne.s32.totalorder %s117, %s118
      %p129 = scmp.eq.s32.totalorder %s15, 0
      %p130 = por %p128, %p129
      %p131 = scmp.ne.s32.totalorder %s117, %s118
      %p132 = scmp.eq.s32.totalorder %s16, 1
      %p133 = por %p131, %p132
      %p135 = scmp.ne.s32.totalorder %s118, %s134
      %p136 = scmp.eq.s32.totalorder %s16, 0
      %p137 = por %p135, %p136
      %p138 = scmp.le.s32.totalorder 1, %s10
      %p139 = scmp.lt.s32.totalorder %s10, 3
      %p140 = pnand %p138, %p139
      %p141 = pneg %p140
      // Predicated region
      $region9: #{normal_renderer.1} parent=5 // pred_check
        _
      $region10: #{normal_renderer.1} parent=5 // pred_check_branch
        %143 = sbr.rel (%p140) target = $region12
      $region11: #{normal_renderer.1} parent=5 // pred_region
        %s144 = ssub.s32 %s10, 1
        // Predicated region
        $region13: #{normal_renderer.1} parent=11 // pred_check
          %p145 = pneg %p83
        $region14: #{normal_renderer.1} parent=11 // pred_check_branch
          %147 = sbr.rel (%p145) target = $region16
        $region15: #{normal_renderer.1} parent=11 // pred_region
          _
        $region16: #{normal_renderer.1} parent=11 // pred_fallthru
          _
        // Predicated region
        $region17: #{normal_renderer.1} parent=11 // pred_check
          %p148 = pneg %p104
        $region18: #{normal_renderer.1} parent=11 // pred_check_branch
          %150 = sbr.rel (%p148) target = $region20
        $region19: #{normal_renderer.1} parent=11 // pred_region
          _
        $region20: #{normal_renderer.1} parent=11 // pred_fallthru
          _
      $region12: #{normal_renderer.1} parent=5 // pred_fallthru
        _
      %p151 = scmp.lt.s32.totalorder %s10, 2
      // Predicated region
      $region21: #{normal_renderer.1} parent=5 // pred_check
        %p152 = pneg %p151
      $region22: #{normal_renderer.1} parent=5 // pred_check_branch
        %154 = sbr.rel (%p152) target = $region24
      $region23: #{normal_renderer.1} parent=5 // pred_region
        // Predicated region
        $region25: #{normal_renderer.1} parent=23 // pred_check
          %p155 = pneg %p30
        $region26: #{normal_renderer.1} parent=23 // pred_check_branch
          %157 = sbr.rel (%p155) target = $region28
        $region27: #{normal_renderer.1} parent=23 // pred_region
          %s158 = smul.u32 3, %s10
          %s159 = ssub.s32 5, %s158
          %p160 = scmp.lt.s32.totalorder %s159, 3
          %s161 = scalar_select %p160, %s159, 3
          %s162 = smul.u32 128, %s161
          %s163 = smul.u32 %s162, 3
          %p164 = scmp.lt.s32.totalorder %s158, 4
          %s165 = scalar_select %p164, %s158, 4
          %s166 = smul.addr %s165, 3
          %s167 = smul.addr %s166, 8
          %s168 = scalar_lea.vmem %s0, %s167
          %s169 = smul.u32 3, %s10
          %s170 = ssub.s32 5, %s169
          %p171 = scmp.lt.s32.totalorder %s170, 3
          %s172 = scalar_select %p171, %s170, 3
          %s173 = smul.u32 128, %s172
          %s174 = smul.u32 %s173, 3
        $region28: #{normal_renderer.1} parent=23 // pred_fallthru
          _
        // Predicated region
        $region29: #{normal_renderer.1} parent=23 // pred_check
          %p175 = pneg %p56
        $region30: #{normal_renderer.1} parent=23 // pred_check_branch
          %177 = sbr.rel (%p175) target = $region32
        $region31: #{normal_renderer.1} parent=23 // pred_region
          %s178 = smul.u32 3, %s10
          %s179 = ssub.s32 5, %s178
          %p180 = scmp.lt.s32.totalorder %s179, 3
          %s181 = scalar_select %p180, %s179, 3
          %s182 = smul.u32 128, %s181
          %p183 = scmp.lt.s32.totalorder %s178, 4
          %s184 = scalar_select %p183, %s178, 4
          %s185 = smul.addr %s184, 8
          %s186 = scalar_lea.vmem %s1, %s185
          %s187 = smul.u32 3, %s10
          %s188 = ssub.s32 5, %s187
          %p189 = scmp.lt.s32.totalorder %s188, 3
          %s190 = scalar_select %p189, %s188, 3
          %s191 = smul.u32 128, %s190
        $region32: #{normal_renderer.1} parent=23 // pred_fallthru
          _
      $region24: #{normal_renderer.1} parent=5 // pred_fallthru
        _
      %p192 = scmp.le.s32.totalorder 1, %s10
      %p193 = scmp.lt.s32.totalorder %s10, 3
      %p194 = pnand %p192, %p193
      %p195 = pneg %p194
      // Predicated region
      $region33: #{normal_renderer.1} parent=5 // pred_check
        _
      $region34: #{normal_renderer.1} parent=5 // pred_check_branch
        %197 = sbr.rel (%p194) target = $region36
      $region35: #{normal_renderer.1} parent=5 // pred_region
        %s198 = ssub.s32 %s10, 1
        %s199 = smul.u32 3, %s15
        %s200 = ssub.s32 5, %s199
        %p201 = scmp.lt.s32.totalorder %s200, 3
        %s202 = scalar_select %p201, %s200, 3
        %s203 = smul.u32 128, %s202
        %s204 = smul.u32 %s203, 3
        %p205 = scmp.lt.s32.totalorder %s199, 4
        %s206 = scalar_select %p205, %s199, 4
        %s207 = smul.addr %s206, 3
        %s208 = smul.addr %s207, 8
        %s209 = scalar_lea.vmem %s0, %s208
        %p210 = pneg %p36
        %p211 = pneg %p33
        %s212 = smul.u32 3, %s15
        %s213 = ssub.s32 5, %s212
        %p214 = scmp.lt.s32.totalorder %s213, 3
        %s215 = scalar_select %p214, %s213, 3
        %s216 = smul.u32 128, %s215
        %p217 = scmp.lt.s32.totalorder %s212, 4
        %s218 = scalar_select %p217, %s212, 4
        %s219 = smul.addr %s218, 8
        %s220 = scalar_lea.vmem %s1, %s219
        %p221 = pneg %p62
        %p222 = pneg %p59
        %p223 = pneg %p83
        %p224 = pneg %p80
        %p225 = pneg %p104
        %p226 = pneg %p101
        %p227 = pneg %p130
        %p228 = pneg %p127
        %s229 = sand.u32 %s117, 1
        %s230 = sand.u32 %s117, 1
        %s231 = smul.addr %s230, 24
        %s232 = scalar_lea.vmem [#allocation2], %s231
        %s233 = smul.u32 3, %s15
        %s234 = ssub.s32 5, %s233
        %p235 = scmp.lt.s32.totalorder %s234, 3
        %s236 = scalar_select %p235, %s234, 3
        %s237 = smul.u32 128, %s236
        %s238 = smul.u32 %s237, 3
        %p239 = scmp.lt.s32.totalorder %s233, 4
        %s240 = scalar_select %p239, %s233, 4
        %s241 = smul.addr %s240, 3
        %s242 = smul.addr %s241, 8
        %s243 = scalar_lea.vmem %s0, %s242
        %s244 = smul.u32 3, %s15
        %s245 = ssub.s32 5, %s244
        %p246 = scmp.lt.s32.totalorder %s245, 3
        %s247 = scalar_select %p246, %s245, 3
        %s248 = smul.u32 128, %s247
        %s249 = smul.u32 %s248, 3
        %s250 = smul.u32 3, %s15
        %s251 = ssub.s32 5, %s250
        %p252 = scmp.lt.s32.totalorder %s251, 3
        %s253 = scalar_select %p252, %s251, 3
        %s254 = smul.u32 128, %s253
        %p255 = scmp.lt.s32.totalorder %s250, 4
        %s256 = scalar_select %p255, %s250, 4
        %s257 = smul.addr %s256, 8
        %s258 = scalar_lea.vmem %s1, %s257
        %s259 = smul.u32 3, %s15
        %s260 = ssub.s32 5, %s259
        %p261 = scmp.lt.s32.totalorder %s260, 3
        %s262 = scalar_select %p261, %s260, 3
        %s263 = smul.u32 128, %s262
        %s264 = smul.u32 3, %s15
        %s265 = ssub.s32 5, %s264
        %p266 = scmp.lt.s32.totalorder %s265, 3
        %s267 = scalar_select %p266, %s265, 3
        %s268 = smul.u32 128, %s267
        %v269 = vld [vmem:[%s258] sm:$0xff]
        %v270 = vld [vmem:[%s258 + $0x8] sm:$0xff]
        %v271 = vld [vmem:[%s258 + $0x10] sm:$0xff]
        %v272 = vld [vmem:[%s2] sm:$0xff]
        %v273 = vld [vmem:[%s2 + $0x8] sm:$0xff]
        %v274 = vld [vmem:[%s2 + $0x10] sm:$0xff]
        %v275 = vld [vmem:[%s2 + $0x18] sm:$0xff]
        %v276 = vld [vmem:[%s2 + $0x20] sm:$0xff]
        %v277 = vld [vmem:[%s2 + $0x28] sm:$0xff]
        %v278 = vld [vmem:[%s2 + $0x30] sm:$0xff]
        %v279 = vld [vmem:[%s2 + $0x38] sm:$0xff]
        %v280 = vld [vmem:[%s2 + $0x40] sm:$0xff]
        %v281 = vld [vmem:[%s2 + $0x48] sm:$0xff]
        %v282 = vld [vmem:[%s2 + $0x50] sm:$0xff]
        %v283 = vld [vmem:[%s2 + $0x58] sm:$0xff]
        %v284 = vld [vmem:[%s2 + $0x60] sm:$0xff]
        %v285 = vld [vmem:[%s2 + $0x68] sm:$0xff]
        %v286 = vld [vmem:[%s2 + $0x70] sm:$0xff]
        %v287 = vld [vmem:[%s2 + $0x78] sm:$0xff]
        %v288 = vld [vmem:[%s2 + $0x80] sm:$0xff]
        %v289 = vld [vmem:[%s2 + $0x88] sm:$0xff]
        %v290 = vld [vmem:[%s2 + $0x90] sm:$0xff]
        %v291 = vld [vmem:[%s2 + $0x98] sm:$0xff]
        %v292 = vld [vmem:[%s2 + $0xa0] sm:$0xff]
        %v293 = vld [vmem:[%s2 + $0xa8] sm:$0xff]
        %v294 = vld [vmem:[%s2 + $0xb0] sm:$0xff]
        %v295 = vld [vmem:[%s2 + $0xb8] sm:$0xff]
        %v296 = vld [vmem:[%s2 + $0xc0] sm:$0xff]
        %v297 = vld [vmem:[%s2 + $0xc8] sm:$0xff]
        %v298 = vld [vmem:[%s2 + $0xd0] sm:$0xff]
        %v299 = vld [vmem:[%s2 + $0xd8] sm:$0xff]
        %v300 = vld [vmem:[%s2 + $0xe0] sm:$0xff]
        %v301 = vld [vmem:[%s2 + $0xe8] sm:$0xff]
        %v302 = vld [vmem:[%s2 + $0xf0] sm:$0xff]
        %v303 = vld [vmem:[%s2 + $0xf8] sm:$0xff]
        %v304 = vld [vmem:[%s2 + $0x100] sm:$0xff]
        %v305 = vld [vmem:[%s2 + $0x108] sm:$0xff]
        %v306 = vld [vmem:[%s2 + $0x110] sm:$0xff]
        %v307 = vld [vmem:[%s2 + $0x118] sm:$0xff]
        %v308 = vld [vmem:[%s2 + $0x120] sm:$0xff]
        %v309 = vld [vmem:[%s2 + $0x128] sm:$0xff]
        %v310 = vld [vmem:[%s2 + $0x130] sm:$0xff]
        %v311 = vld [vmem:[%s2 + $0x138] sm:$0xff]
        %v312 = vld [vmem:[%s2 + $0x140] sm:$0xff]
        %v313 = vld [vmem:[%s2 + $0x148] sm:$0xff]
        %v314 = vld [vmem:[%s2 + $0x150] sm:$0xff]
        %v315 = vld [vmem:[%s2 + $0x158] sm:$0xff]
        %v316 = vld [vmem:[%s2 + $0x160] sm:$0xff]
        %v317 = vld [vmem:[%s2 + $0x168] sm:$0xff]
        %v318 = vld [vmem:[%s2 + $0x170] sm:$0xff]
        %v319 = vld [vmem:[%s2 + $0x178] sm:$0xff]
        %v320 = vand.u32 %v273, 4294901760
        %321 = vmatprep.subr.mxu0 %v320
        %v322 = vand.u32 %v272, 4294901760
        %323 = vmatpush1.msra.mxu0 %v322
        %v324 = vand.u32 %v276, 4294901760
        %325 = vmatprep.subr.mxu0 %v324
        %v326 = vand.u32 %v275, 4294901760
        %327 = vmatpush1.msra.mxu0 %v326
        %v328 = vand.u32 %v279, 4294901760
        %329 = vmatprep.subr.mxu0 %v328
        %v330 = vand.u32 %v278, 4294901760
        %331 = vmatpush1.msra.mxu0 %v330
        %v332 = vand.u32 %v282, 4294901760
        %333 = vmatprep.subr.mxu0 %v332
        %v334 = vand.u32 %v281, 4294901760
        %335 = vmatpush1.msra.mxu0 %v334
        %v336 = vand.u32 %v285, 4294901760
        %337 = vmatprep.subr.mxu0 %v336
        %v338 = vand.u32 %v284, 4294901760
        %339 = vmatpush1.msra.mxu0 %v338
        %v340 = vand.u32 %v288, 4294901760
        %341 = vmatprep.subr.mxu0 %v340
        %v342 = vand.u32 %v287, 4294901760
        %343 = vmatpush1.msra.mxu0 %v342
        %v344 = vand.u32 %v291, 4294901760
        %345 = vmatprep.subr.mxu0 %v344
        %v346 = vand.u32 %v290, 4294901760
        %347 = vmatpush1.msra.mxu0 %v346
        %v348 = vand.u32 %v294, 4294901760
        %349 = vmatprep.subr.mxu0 %v348
        %v350 = vand.u32 %v293, 4294901760
        %351 = vmatpush1.msra.mxu0 %v350
        %v352 = vand.u32 %v297, 4294901760
        %353 = vmatprep.subr.mxu0 %v352
        %v354 = vand.u32 %v296, 4294901760
        %355 = vmatpush1.msra.mxu0 %v354
        %v356 = vand.u32 %v300, 4294901760
        %357 = vmatprep.subr.mxu0 %v356
        %v358 = vand.u32 %v299, 4294901760
        %359 = vmatpush1.msra.mxu0 %v358
        %v360 = vand.u32 %v303, 4294901760
        %361 = vmatprep.subr.mxu0 %v360
        %v362 = vand.u32 %v302, 4294901760
        %363 = vmatpush1.msra.mxu0 %v362
        %v364 = vand.u32 %v306, 4294901760
        %365 = vmatprep.subr.mxu0 %v364
        %v366 = vand.u32 %v305, 4294901760
        %367 = vmatpush1.msra.mxu0 %v366
        %v368 = vand.u32 %v309, 4294901760
        %369 = vmatprep.subr.mxu0 %v368
        %v370 = vand.u32 %v308, 4294901760
        %371 = vmatpush1.msra.mxu0 %v370
        %v372 = vand.u32 %v312, 4294901760
        %373 = vmatprep.subr.mxu0 %v372
        %v374 = vand.u32 %v311, 4294901760
        %375 = vmatpush1.msra.mxu0 %v374
        %v376 = vand.u32 %v315, 4294901760
        %377 = vmatprep.subr.mxu0 %v376
        %v378 = vand.u32 %v314, 4294901760
        %379 = vmatpush1.msra.mxu0 %v378
        %v380 = vand.u32 %v318, 4294901760
        %381 = vmatprep.subr.mxu0 %v380
        %v382 = vand.u32 %v317, 4294901760
        %383 = vmatpush1.msra.mxu0 %v382
        %384 = vmatprep.subr.mxu0 0.0
        %385 = vmatpush1.msra.mxu0 0.0
        %386 = vmatprep.subr.mxu0 0.0
        %387 = vmatpush1.msra.mxu0 0.0
        %388 = vmatprep.subr.mxu0 0.0
        %389 = vmatpush1.msra.mxu0 0.0
        %390 = vmatprep.subr.mxu0 0.0
        %391 = vmatpush1.msra.mxu0 0.0
        %392 = vmatprep.subr.mxu0 0.0
        %393 = vmatpush1.msra.mxu0 0.0
        %394 = vmatprep.subr.mxu0 0.0
        %395 = vmatpush1.msra.mxu0 0.0
        %396 = vmatprep.subr.mxu0 0.0
        %397 = vmatpush1.msra.mxu0 0.0
        %398 = vmatprep.subr.mxu0 0.0
        %399 = vmatpush1.msra.mxu0 0.0
        %400 = vmatprep.subr.mxu0 0.0
        %401 = vmatpush1.msra.mxu0 0.0
        %402 = vmatprep.subr.mxu0 0.0
        %403 = vmatpush1.msra.mxu0 0.0
        %404 = vmatprep.subr.mxu0 0.0
        %405 = vmatpush1.msra.mxu0 0.0
        %406 = vmatprep.subr.mxu0 0.0
        %407 = vmatpush1.msra.mxu0 0.0
        %408 = vmatprep.subr.mxu0 0.0
        %409 = vmatpush1.msra.mxu0 0.0
        %410 = vmatprep.subr.mxu0 0.0
        %411 = vmatpush1.msra.mxu0 0.0
        %412 = vmatprep.subr.mxu0 0.0
        %413 = vmatpush1.msra.mxu0 0.0
        %414 = vmatprep.subr.mxu0 0.0
        %415 = vmatpush1.msra.mxu0 0.0
        %416 = vmatprep.mubr.f32.mxu0 0.0
        %v417 = vand.u32 %v269, 4294901760
        %v418 = vsub.f32 %v269, %v417
        %v419 = vand.u32 %v418, 4294901760
        %v420 = vsub.f32 %v418, %v419
        %v421 = vand.u32 %v420, 4294901760
        %422 = vmatmul.mubr.f32.gmra.mrb[0].mxu0 %v421
        %v423 = vpop.f32.mrb[0].mxu0
        %v424 = vadd.f32 0.0, %v423
        %v425 = vpop.f32.mrb[0].mxu0
        %v426 = vadd.f32 0.0, %v425
        %427 = vmatprep.mubr.f32.mxu0 0.0
        %v428 = vand.u32 %v270, 4294901760
        %v429 = vsub.f32 %v270, %v428
        %v430 = vand.u32 %v429, 4294901760
        %v431 = vsub.f32 %v429, %v430
        %v432 = vand.u32 %v431, 4294901760
        %433 = vmatmul.mubr.f32.gmra.mrb[0].mxu0 %v432
        %v434 = vpop.f32.mrb[0].mxu0
        %v435 = vadd.f32 0.0, %v434
        %v436 = vpop.f32.mrb[0].mxu0
        %v437 = vadd.f32 0.0, %v436
        %438 = vmatprep.mubr.f32.mxu0 0.0
        %v439 = vand.u32 %v271, 4294901760
        %v440 = vsub.f32 %v271, %v439
        %v441 = vand.u32 %v440, 4294901760
        %v442 = vsub.f32 %v440, %v441
        %v443 = vand.u32 %v442, 4294901760
        %444 = vmatmul.mubr.f32.gmra.mrb[0].mxu0 %v443
        %v445 = vpop.f32.mrb[0].mxu0
        %v446 = vadd.f32 0.0, %v445
        %v447 = vpop.f32.mrb[0].mxu0
        %v448 = vadd.f32 0.0, %v447
        %449 = vdwg.mxu0
        %v450 = vand.u32 %v273, 4294901760
        %v451 = vsub.f32 %v273, %v450
        %v452 = vand.u32 %v451, 4294901760
        %v453 = vsub.f32 %v451, %v452
        %v454 = vand.u32 %v453, 4294901760
        %455 = vmatprep.subr.mxu0 %v454
        %v456 = vand.u32 %v272, 4294901760
        %v457 = vsub.f32 %v272, %v456
        %v458 = vand.u32 %v457, 4294901760
        %v459 = vsub.f32 %v457, %v458
        %v460 = vand.u32 %v459, 4294901760
        %461 = vmatpush1.msra.mxu0 %v460
        %v462 = vand.u32 %v276, 4294901760
        %v463 = vsub.f32 %v276, %v462
        %v464 = vand.u32 %v463, 4294901760
        %v465 = vsub.f32 %v463, %v464
        %v466 = vand.u32 %v465, 4294901760
        %467 = vmatprep.subr.mxu0 %v466
        %v468 = vand.u32 %v275, 4294901760
        %v469 = vsub.f32 %v275, %v468
        %v470 = vand.u32 %v469, 4294901760
        %v471 = vsub.f32 %v469, %v470
        %v472 = vand.u32 %v471, 4294901760
        %473 = vmatpush1.msra.mxu0 %v472
        %v474 = vand.u32 %v279, 4294901760
        %v475 = vsub.f32 %v279, %v474
        %v476 = vand.u32 %v475, 4294901760
        %v477 = vsub.f32 %v475, %v476
        %v478 = vand.u32 %v477, 4294901760
        %479 = vmatprep.subr.mxu0 %v478
        %v480 = vand.u32 %v278, 4294901760
        %v481 = vsub.f32 %v278, %v480
        %v482 = vand.u32 %v481, 4294901760
        %v483 = vsub.f32 %v481, %v482
        %v484 = vand.u32 %v483, 4294901760
        %485 = vmatpush1.msra.mxu0 %v484
        %v486 = vand.u32 %v282, 4294901760
        %v487 = vsub.f32 %v282, %v486
        %v488 = vand.u32 %v487, 4294901760
        %v489 = vsub.f32 %v487, %v488
        %v490 = vand.u32 %v489, 4294901760
        %491 = vmatprep.subr.mxu0 %v490
        %v492 = vand.u32 %v281, 4294901760
        %v493 = vsub.f32 %v281, %v492
        %v494 = vand.u32 %v493, 4294901760
        %v495 = vsub.f32 %v493, %v494
        %v496 = vand.u32 %v495, 4294901760
        %497 = vmatpush1.msra.mxu0 %v496
        %v498 = vand.u32 %v285, 4294901760
        %v499 = vsub.f32 %v285, %v498
        %v500 = vand.u32 %v499, 4294901760
        %v501 = vsub.f32 %v499, %v500
        %v502 = vand.u32 %v501, 4294901760
        %503 = vmatprep.subr.mxu0 %v502
        %v504 = vand.u32 %v284, 4294901760
        %v505 = vsub.f32 %v284, %v504
        %v506 = vand.u32 %v505, 4294901760
        %v507 = vsub.f32 %v505, %v506
        %v508 = vand.u32 %v507, 4294901760
        %509 = vmatpush1.msra.mxu0 %v508
        %v510 = vand.u32 %v288, 4294901760
        %v511 = vsub.f32 %v288, %v510
        %v512 = vand.u32 %v511, 4294901760
        %v513 = vsub.f32 %v511, %v512
        %v514 = vand.u32 %v513, 4294901760
        %515 = vmatprep.subr.mxu0 %v514
        %v516 = vand.u32 %v287, 4294901760
        %v517 = vsub.f32 %v287, %v516
        %v518 = vand.u32 %v517, 4294901760
        %v519 = vsub.f32 %v517, %v518
        %v520 = vand.u32 %v519, 4294901760
        %521 = vmatpush1.msra.mxu0 %v520
        %v522 = vand.u32 %v291, 4294901760
        %v523 = vsub.f32 %v291, %v522
        %v524 = vand.u32 %v523, 4294901760
        %v525 = vsub.f32 %v523, %v524
        %v526 = vand.u32 %v525, 4294901760
        %527 = vmatprep.subr.mxu0 %v526
        %v528 = vand.u32 %v290, 4294901760
        %v529 = vsub.f32 %v290, %v528
        %v530 = vand.u32 %v529, 4294901760
        %v531 = vsub.f32 %v529, %v530
        %v532 = vand.u32 %v531, 4294901760
        %533 = vmatpush1.msra.mxu0 %v532
        %v534 = vand.u32 %v294, 4294901760
        %v535 = vsub.f32 %v294, %v534
        %v536 = vand.u32 %v535, 4294901760
        %v537 = vsub.f32 %v535, %v536
        %v538 = vand.u32 %v537, 4294901760
        %539 = vmatprep.subr.mxu0 %v538
        %v540 = vand.u32 %v293, 4294901760
        %v541 = vsub.f32 %v293, %v540
        %v542 = vand.u32 %v541, 4294901760
        %v543 = vsub.f32 %v541, %v542
        %v544 = vand.u32 %v543, 4294901760
        %545 = vmatpush1.msra.mxu0 %v544
        %v546 = vand.u32 %v297, 4294901760
        %v547 = vsub.f32 %v297, %v546
        %v548 = vand.u32 %v547, 4294901760
        %v549 = vsub.f32 %v547, %v548
        %v550 = vand.u32 %v549, 4294901760
        %551 = vmatprep.subr.mxu0 %v550
        %v552 = vand.u32 %v296, 4294901760
        %v553 = vsub.f32 %v296, %v552
        %v554 = vand.u32 %v553, 4294901760
        %v555 = vsub.f32 %v553, %v554
        %v556 = vand.u32 %v555, 4294901760
        %557 = vmatpush1.msra.mxu0 %v556
        %v558 = vand.u32 %v300, 4294901760
        %v559 = vsub.f32 %v300, %v558
        %v560 = vand.u32 %v559, 4294901760
        %v561 = vsub.f32 %v559, %v560
        %v562 = vand.u32 %v561, 4294901760
        %563 = vmatprep.subr.mxu0 %v562
        %v564 = vand.u32 %v299, 4294901760
        %v565 = vsub.f32 %v299, %v564
        %v566 = vand.u32 %v565, 4294901760
        %v567 = vsub.f32 %v565, %v566
        %v568 = vand.u32 %v567, 4294901760
        %569 = vmatpush1.msra.mxu0 %v568
        %v570 = vand.u32 %v303, 4294901760
        %v571 = vsub.f32 %v303, %v570
        %v572 = vand.u32 %v571, 4294901760
        %v573 = vsub.f32 %v571, %v572
        %v574 = vand.u32 %v573, 4294901760
        %575 = vmatprep.subr.mxu0 %v574
        %v576 = vand.u32 %v302, 4294901760
        %v577 = vsub.f32 %v302, %v576
        %v578 = vand.u32 %v577, 4294901760
        %v579 = vsub.f32 %v577, %v578
        %v580 = vand.u32 %v579, 4294901760
        %581 = vmatpush1.msra.mxu0 %v580
        %v582 = vand.u32 %v306, 4294901760
        %v583 = vsub.f32 %v306, %v582
        %v584 = vand.u32 %v583, 4294901760
        %v585 = vsub.f32 %v583, %v584
        %v586 = vand.u32 %v585, 4294901760
        %587 = vmatprep.subr.mxu0 %v586
        %v588 = vand.u32 %v305, 4294901760
        %v589 = vsub.f32 %v305, %v588
        %v590 = vand.u32 %v589, 4294901760
        %v591 = vsub.f32 %v589, %v590
        %v592 = vand.u32 %v591, 4294901760
        %593 = vmatpush1.msra.mxu0 %v592
        %v594 = vand.u32 %v309, 4294901760
        %v595 = vsub.f32 %v309, %v594
        %v596 = vand.u32 %v595, 4294901760
        %v597 = vsub.f32 %v595, %v596
        %v598 = vand.u32 %v597, 4294901760
        %599 = vmatprep.subr.mxu0 %v598
        %v600 = vand.u32 %v308, 4294901760
        %v601 = vsub.f32 %v308, %v600
        %v602 = vand.u32 %v601, 4294901760
        %v603 = vsub.f32 %v601, %v602
        %v604 = vand.u32 %v603, 4294901760
        %605 = vmatpush1.msra.mxu0 %v604
        %v606 = vand.u32 %v312, 4294901760
        %v607 = vsub.f32 %v312, %v606
        %v608 = vand.u32 %v607, 4294901760
        %v609 = vsub.f32 %v607, %v608
        %v610 = vand.u32 %v609, 4294901760
        %611 = vmatprep.subr.mxu0 %v610
        %v612 = vand.u32 %v311, 4294901760
        %v613 = vsub.f32 %v311, %v612
        %v614 = vand.u32 %v613, 4294901760
        %v615 = vsub.f32 %v613, %v614
        %v616 = vand.u32 %v615, 4294901760
        %617 = vmatpush1.msra.mxu0 %v616
        %v618 = vand.u32 %v315, 4294901760
        %v619 = vsub.f32 %v315, %v618
        %v620 = vand.u32 %v619, 4294901760
        %v621 = vsub.f32 %v619, %v620
        %v622 = vand.u32 %v621, 4294901760
        %623 = vmatprep.subr.mxu0 %v622
        %v624 = vand.u32 %v314, 4294901760
        %v625 = vsub.f32 %v314, %v624
        %v626 = vand.u32 %v625, 4294901760
        %v627 = vsub.f32 %v625, %v626
        %v628 = vand.u32 %v627, 4294901760
        %629 = vmatpush1.msra.mxu0 %v628
        %v630 = vand.u32 %v318, 4294901760
        %v631 = vsub.f32 %v318, %v630
        %v632 = vand.u32 %v631, 4294901760
        %v633 = vsub.f32 %v631, %v632
        %v634 = vand.u32 %v633, 4294901760
        %635 = vmatprep.subr.mxu0 %v634
        %v636 = vand.u32 %v317, 4294901760
        %v637 = vsub.f32 %v317, %v636
        %v638 = vand.u32 %v637, 4294901760
        %v639 = vsub.f32 %v637, %v638
        %v640 = vand.u32 %v639, 4294901760
        %641 = vmatpush1.msra.mxu0 %v640
        %642 = vmatprep.subr.mxu0 0.0
        %643 = vmatpush1.msra.mxu0 0.0
        %644 = vmatprep.subr.mxu0 0.0
        %645 = vmatpush1.msra.mxu0 0.0
        %646 = vmatprep.subr.mxu0 0.0
        %647 = vmatpush1.msra.mxu0 0.0
        %648 = vmatprep.subr.mxu0 0.0
        %649 = vmatpush1.msra.mxu0 0.0
        %650 = vmatprep.subr.mxu0 0.0
        %651 = vmatpush1.msra.mxu0 0.0
        %652 = vmatprep.subr.mxu0 0.0
        %653 = vmatpush1.msra.mxu0 0.0
        %654 = vmatprep.subr.mxu0 0.0
        %655 = vmatpush1.msra.mxu0 0.0
        %656 = vmatprep.subr.mxu0 0.0
        %657 = vmatpush1.msra.mxu0 0.0
        %658 = vmatprep.subr.mxu0 0.0
        %659 = vmatpush1.msra.mxu0 0.0
        %660 = vmatprep.subr.mxu0 0.0
        %661 = vmatpush1.msra.mxu0 0.0
        %662 = vmatprep.subr.mxu0 0.0
        %663 = vmatpush1.msra.mxu0 0.0
        %664 = vmatprep.subr.mxu0 0.0
        %665 = vmatpush1.msra.mxu0 0.0
        %666 = vmatprep.subr.mxu0 0.0
        %667 = vmatpush1.msra.mxu0 0.0
        %668 = vmatprep.subr.mxu0 0.0
        %669 = vmatpush1.msra.mxu0 0.0
        %670 = vmatprep.subr.mxu0 0.0
        %671 = vmatpush1.msra.mxu0 0.0
        %672 = vmatprep.subr.mxu0 0.0
        %673 = vmatpush1.msra.mxu0 0.0
        %674 = vmatprep.mubr.f32.mxu0 0.0
        %v675 = vand.u32 %v269, 4294901760
        %676 = vmatmul.mubr.f32.gmra.mrb[0].mxu0 %v675
        %v677 = vpop.f32.mrb[0].mxu0
        %v678 = vadd.f32 %v424, %v677
        %v679 = vpop.f32.mrb[0].mxu0
        %v680 = vadd.f32 %v426, %v679
        %681 = vmatprep.mubr.f32.mxu0 0.0
        %v682 = vand.u32 %v270, 4294901760
        %683 = vmatmul.mubr.f32.gmra.mrb[0].mxu0 %v682
        %v684 = vpop.f32.mrb[0].mxu0
        %v685 = vadd.f32 %v435, %v684
        %v686 = vpop.f32.mrb[0].mxu0
        %v687 = vadd.f32 %v437, %v686
        %688 = vmatprep.mubr.f32.mxu0 0.0
        %v689 = vand.u32 %v271, 4294901760
        %690 = vmatmul.mubr.f32.gmra.mrb[0].mxu0 %v689
        %v691 = vpop.f32.mrb[0].mxu0
        %v692 = vadd.f32 %v446, %v691
        %v693 = vpop.f32.mrb[0].mxu0
        %v694 = vadd.f32 %v448, %v693
        %695 = vdwg.mxu0
        %v696 = vand.u32 %v273, 4294901760
        %v697 = vsub.f32 %v273, %v696
        %698 = vmatprep.subr.mxu0 %v697
        %v699 = vand.u32 %v272, 4294901760
        %v700 = vsub.f32 %v272, %v699
        %701 = vmatpush1.msra.mxu0 %v700
        %v702 = vand.u32 %v276, 4294901760
        %v703 = vsub.f32 %v276, %v702
        %704 = vmatprep.subr.mxu0 %v703
        %v705 = vand.u32 %v275, 4294901760
        %v706 = vsub.f32 %v275, %v705
        %707 = vmatpush1.msra.mxu0 %v706
        %v708 = vand.u32 %v279, 4294901760
        %v709 = vsub.f32 %v279, %v708
        %710 = vmatprep.subr.mxu0 %v709
        %v711 = vand.u32 %v278, 4294901760
        %v712 = vsub.f32 %v278, %v711
        %713 = vmatpush1.msra.mxu0 %v712
        %v714 = vand.u32 %v282, 4294901760
        %v715 = vsub.f32 %v282, %v714
        %716 = vmatprep.subr.mxu0 %v715
        %v717 = vand.u32 %v281, 4294901760
        %v718 = vsub.f32 %v281, %v717
        %719 = vmatpush1.msra.mxu0 %v718
        %v720 = vand.u32 %v285, 4294901760
        %v721 = vsub.f32 %v285, %v720
        %722 = vmatprep.subr.mxu0 %v721
        %v723 = vand.u32 %v284, 4294901760
        %v724 = vsub.f32 %v284, %v723
        %725 = vmatpush1.msra.mxu0 %v724
        %v726 = vand.u32 %v288, 4294901760
        %v727 = vsub.f32 %v288, %v726
        %728 = vmatprep.subr.mxu0 %v727
        %v729 = vand.u32 %v287, 4294901760
        %v730 = vsub.f32 %v287, %v729
        %731 = vmatpush1.msra.mxu0 %v730
        %v732 = vand.u32 %v291, 4294901760
        %v733 = vsub.f32 %v291, %v732
        %734 = vmatprep.subr.mxu0 %v733
        %v735 = vand.u32 %v290, 4294901760
        %v736 = vsub.f32 %v290, %v735
        %737 = vmatpush1.msra.mxu0 %v736
        %v738 = vand.u32 %v294, 4294901760
        %v739 = vsub.f32 %v294, %v738
        %740 = vmatprep.subr.mxu0 %v739
        %v741 = vand.u32 %v293, 4294901760
        %v742 = vsub.f32 %v293, %v741
        %743 = vmatpush1.msra.mxu0 %v742
        %v744 = vand.u32 %v297, 4294901760
        %v745 = vsub.f32 %v297, %v744
        %746 = vmatprep.subr.mxu0 %v745
        %v747 = vand.u32 %v296, 4294901760
        %v748 = vsub.f32 %v296, %v747
        %749 = vmatpush1.msra.mxu0 %v748
        %v750 = vand.u32 %v300, 4294901760
        %v751 = vsub.f32 %v300, %v750
        %752 = vmatprep.subr.mxu0 %v751
        %v753 = vand.u32 %v299, 4294901760
        %v754 = vsub.f32 %v299, %v753
        %755 = vmatpush1.msra.mxu0 %v754
        %v756 = vand.u32 %v303, 4294901760
        %v757 = vsub.f32 %v303, %v756
        %758 = vmatprep.subr.mxu0 %v757
        %v759 = vand.u32 %v302, 4294901760
        %v760 = vsub.f32 %v302, %v759
        %761 = vmatpush1.msra.mxu0 %v760
        %v762 = vand.u32 %v306, 4294901760
        %v763 = vsub.f32 %v306, %v762
        %764 = vmatprep.subr.mxu0 %v763
        %v765 = vand.u32 %v305, 4294901760
        %v766 = vsub.f32 %v305, %v765
        %767 = vmatpush1.msra.mxu0 %v766
        %v768 = vand.u32 %v309, 4294901760
        %v769 = vsub.f32 %v309, %v768
        %770 = vmatprep.subr.mxu0 %v769
        %v771 = vand.u32 %v308, 4294901760
        %v772 = vsub.f32 %v308, %v771
        %773 = vmatpush1.msra.mxu0 %v772
        %v774 = vand.u32 %v312, 4294901760
        %v775 = vsub.f32 %v312, %v774
        %776 = vmatprep.subr.mxu0 %v775
        %v777 = vand.u32 %v311, 4294901760
        %v778 = vsub.f32 %v311, %v777
        %779 = vmatpush1.msra.mxu0 %v778
        %v780 = vand.u32 %v315, 4294901760
        %v781 = vsub.f32 %v315, %v780
        %782 = vmatprep.subr.mxu0 %v781
        %v783 = vand.u32 %v314, 4294901760
        %v784 = vsub.f32 %v314, %v783
        %785 = vmatpush1.msra.mxu0 %v784
        %v786 = vand.u32 %v318, 4294901760
        %v787 = vsub.f32 %v318, %v786
        %788 = vmatprep.subr.mxu0 %v787
        %v789 = vand.u32 %v317, 4294901760
        %v790 = vsub.f32 %v317, %v789
        %791 = vmatpush1.msra.mxu0 %v790
        %792 = vmatprep.subr.mxu0 0.0
        %793 = vmatpush1.msra.mxu0 0.0
        %794 = vmatprep.subr.mxu0 0.0
        %795 = vmatpush1.msra.mxu0 0.0
        %796 = vmatprep.subr.mxu0 0.0
        %797 = vmatpush1.msra.mxu0 0.0
        %798 = vmatprep.subr.mxu0 0.0
        %799 = vmatpush1.msra.mxu0 0.0
        %800 = vmatprep.subr.mxu0 0.0
        %801 = vmatpush1.msra.mxu0 0.0
        %802 = vmatprep.subr.mxu0 0.0
        %803 = vmatpush1.msra.mxu0 0.0
        %804 = vmatprep.subr.mxu0 0.0
        %805 = vmatpush1.msra.mxu0 0.0
        %806 = vmatprep.subr.mxu0 0.0
        %807 = vmatpush1.msra.mxu0 0.0
        %808 = vmatprep.subr.mxu0 0.0
        %809 = vmatpush1.msra.mxu0 0.0
        %810 = vmatprep.subr.mxu0 0.0
        %811 = vmatpush1.msra.mxu0 0.0
        %812 = vmatprep.subr.mxu0 0.0
        %813 = vmatpush1.msra.mxu0 0.0
        %814 = vmatprep.subr.mxu0 0.0
        %815 = vmatpush1.msra.mxu0 0.0
        %816 = vmatprep.subr.mxu0 0.0
        %817 = vmatpush1.msra.mxu0 0.0
        %818 = vmatprep.subr.mxu0 0.0
        %819 = vmatpush1.msra.mxu0 0.0
        %820 = vmatprep.subr.mxu0 0.0
        %821 = vmatpush1.msra.mxu0 0.0
        %822 = vmatprep.subr.mxu0 0.0
        %823 = vmatpush1.msra.mxu0 0.0
        %824 = vmatprep.mubr.f32.mxu0 0.0
        %v825 = vand.u32 %v269, 4294901760
        %v826 = vsub.f32 %v269, %v825
        %827 = vmatmul.mubr.f32.gmra.mrb[0].mxu0 %v826
        %v828 = vpop.f32.mrb[0].mxu0
        %v829 = vadd.f32 %v678, %v828
        %v830 = vpop.f32.mrb[0].mxu0
        %v831 = vadd.f32 %v680, %v830
        %832 = vmatprep.mubr.f32.mxu0 0.0
        %v833 = vand.u32 %v270, 4294901760
        %v834 = vsub.f32 %v270, %v833
        %835 = vmatmul.mubr.f32.gmra.mrb[0].mxu0 %v834
        %v836 = vpop.f32.mrb[0].mxu0
        %v837 = vadd.f32 %v685, %v836
        %v838 = vpop.f32.mrb[0].mxu0
        %v839 = vadd.f32 %v687, %v838
        %840 = vmatprep.mubr.f32.mxu0 0.0
        %v841 = vand.u32 %v271, 4294901760
        %v842 = vsub.f32 %v271, %v841
        %843 = vmatmul.mubr.f32.gmra.mrb[0].mxu0 %v842
        %v844 = vpop.f32.mrb[0].mxu0
        %v845 = vadd.f32 %v692, %v844
        %v846 = vpop.f32.mrb[0].mxu0
        %v847 = vadd.f32 %v694, %v846
        %848 = vdwg.mxu0
        %v849 = vand.u32 %v273, 4294901760
        %850 = vmatprep.subr.mxu0 %v849
        %v851 = vand.u32 %v272, 4294901760
        %852 = vmatpush1.msra.mxu0 %v851
        %v853 = vand.u32 %v276, 4294901760
        %854 = vmatprep.subr.mxu0 %v853
        %v855 = vand.u32 %v275, 4294901760
        %856 = vmatpush1.msra.mxu0 %v855
        %v857 = vand.u32 %v279, 4294901760
        %858 = vmatprep.subr.mxu0 %v857
        %v859 = vand.u32 %v278, 4294901760
        %860 = vmatpush1.msra.mxu0 %v859
        %v861 = vand.u32 %v282, 4294901760
        %862 = vmatprep.subr.mxu0 %v861
        %v863 = vand.u32 %v281, 4294901760
        %864 = vmatpush1.msra.mxu0 %v863
        %v865 = vand.u32 %v285, 4294901760
        %866 = vmatprep.subr.mxu0 %v865
        %v867 = vand.u32 %v284, 4294901760
        %868 = vmatpush1.msra.mxu0 %v867
        %v869 = vand.u32 %v288, 4294901760
        %870 = vmatprep.subr.mxu0 %v869
        %v871 = vand.u32 %v287, 4294901760
        %872 = vmatpush1.msra.mxu0 %v871
        %v873 = vand.u32 %v291, 4294901760
        %874 = vmatprep.subr.mxu0 %v873
        %v875 = vand.u32 %v290, 4294901760
        %876 = vmatpush1.msra.mxu0 %v875
        %v877 = vand.u32 %v294, 4294901760
        %878 = vmatprep.subr.mxu0 %v877
        %v879 = vand.u32 %v293, 4294901760
        %880 = vmatpush1.msra.mxu0 %v879
        %v881 = vand.u32 %v297, 4294901760
        %882 = vmatprep.subr.mxu0 %v881
        %v883 = vand.u32 %v296, 4294901760
        %884 = vmatpush1.msra.mxu0 %v883
        %v885 = vand.u32 %v300, 4294901760
        %886 = vmatprep.subr.mxu0 %v885
        %v887 = vand.u32 %v299, 4294901760
        %888 = vmatpush1.msra.mxu0 %v887
        %v889 = vand.u32 %v303, 4294901760
        %890 = vmatprep.subr.mxu0 %v889
        %v891 = vand.u32 %v302, 4294901760
        %892 = vmatpush1.msra.mxu0 %v891
        %v893 = vand.u32 %v306, 4294901760
        %894 = vmatprep.subr.mxu0 %v893
        %v895 = vand.u32 %v305, 4294901760
        %896 = vmatpush1.msra.mxu0 %v895
        %v897 = vand.u32 %v309, 4294901760
        %898 = vmatprep.subr.mxu0 %v897
        %v899 = vand.u32 %v308, 4294901760
        %900 = vmatpush1.msra.mxu0 %v899
        %v901 = vand.u32 %v312, 4294901760
        %902 = vmatprep.subr.mxu0 %v901
        %v903 = vand.u32 %v311, 4294901760
        %904 = vmatpush1.msra.mxu0 %v903
        %v905 = vand.u32 %v315, 4294901760
        %906 = vmatprep.subr.mxu0 %v905
        %v907 = vand.u32 %v314, 4294901760
        %908 = vmatpush1.msra.mxu0 %v907
        %v909 = vand.u32 %v318, 4294901760
        %910 = vmatprep.subr.mxu0 %v909
        %v911 = vand.u32 %v317, 4294901760
        %912 = vmatpush1.msra.mxu0 %v911
        %913 = vmatprep.subr.mxu0 0.0
        %914 = vmatpush1.msra.mxu0 0.0
        %915 = vmatprep.subr.mxu0 0.0
        %916 = vmatpush1.msra.mxu0 0.0
        %917 = vmatprep.subr.mxu0 0.0
        %918 = vmatpush1.msra.mxu0 0.0
        %919 = vmatprep.subr.mxu0 0.0
        %920 = vmatpush1.msra.mxu0 0.0
        %921 = vmatprep.subr.mxu0 0.0
        %922 = vmatpush1.msra.mxu0 0.0
        %923 = vmatprep.subr.mxu0 0.0
        %924 = vmatpush1.msra.mxu0 0.0
        %925 = vmatprep.subr.mxu0 0.0
        %926 = vmatpush1.msra.mxu0 0.0
        %927 = vmatprep.subr.mxu0 0.0
        %928 = vmatpush1.msra.mxu0 0.0
        %929 = vmatprep.subr.mxu0 0.0
        %930 = vmatpush1.msra.mxu0 0.0
        %931 = vmatprep.subr.mxu0 0.0
        %932 = vmatpush1.msra.mxu0 0.0
        %933 = vmatprep.subr.mxu0 0.0
        %934 = vmatpush1.msra.mxu0 0.0
        %935 = vmatprep.subr.mxu0 0.0
        %936 = vmatpush1.msra.mxu0 0.0
        %937 = vmatprep.subr.mxu0 0.0
        %938 = vmatpush1.msra.mxu0 0.0
        %939 = vmatprep.subr.mxu0 0.0
        %940 = vmatpush1.msra.mxu0 0.0
        %941 = vmatprep.subr.mxu0 0.0
        %942 = vmatpush1.msra.mxu0 0.0
        %943 = vmatprep.subr.mxu0 0.0
        %944 = vmatpush1.msra.mxu0 0.0
        %945 = vmatprep.mubr.f32.mxu0 0.0
        %v946 = vand.u32 %v269, 4294901760
        %v947 = vsub.f32 %v269, %v946
        %v948 = vand.u32 %v947, 4294901760
        %949 = vmatmul.mubr.f32.gmra.mrb[0].mxu0 %v948
        %v950 = vpop.f32.mrb[0].mxu0
        %v951 = vadd.f32 %v829, %v950
        %v952 = vpop.f32.mrb[0].mxu0
        %v953 = vadd.f32 %v831, %v952
        %954 = vmatprep.mubr.f32.mxu0 0.0
        %v955 = vand.u32 %v270, 4294901760
        %v956 = vsub.f32 %v270, %v955
        %v957 = vand.u32 %v956, 4294901760
        %958 = vmatmul.mubr.f32.gmra.mrb[0].mxu0 %v957
        %v959 = vpop.f32.mrb[0].mxu0
        %v960 = vadd.f32 %v837, %v959
        %v961 = vpop.f32.mrb[0].mxu0
        %v962 = vadd.f32 %v839, %v961
        %963 = vmatprep.mubr.f32.mxu0 0.0
        %v964 = vand.u32 %v271, 4294901760
        %v965 = vsub.f32 %v271, %v964
        %v966 = vand.u32 %v965, 4294901760
        %967 = vmatmul.mubr.f32.gmra.mrb[0].mxu0 %v966
        %v968 = vpop.f32.mrb[0].mxu0
        %v969 = vadd.f32 %v845, %v968
        %v970 = vpop.f32.mrb[0].mxu0
        %v971 = vadd.f32 %v847, %v970
        %972 = vdwg.mxu0
        %v973 = vand.u32 %v273, 4294901760
        %v974 = vsub.f32 %v273, %v973
        %v975 = vand.u32 %v974, 4294901760
        %976 = vmatprep.subr.mxu0 %v975
        %v977 = vand.u32 %v272, 4294901760
        %v978 = vsub.f32 %v272, %v977
        %v979 = vand.u32 %v978, 4294901760
        %980 = vmatpush1.msra.mxu0 %v979
        %v981 = vand.u32 %v276, 4294901760
        %v982 = vsub.f32 %v276, %v981
        %v983 = vand.u32 %v982, 4294901760
        %984 = vmatprep.subr.mxu0 %v983
        %v985 = vand.u32 %v275, 4294901760
        %v986 = vsub.f32 %v275, %v985
        %v987 = vand.u32 %v986, 4294901760
        %988 = vmatpush1.msra.mxu0 %v987
        %v989 = vand.u32 %v279, 4294901760
        %v990 = vsub.f32 %v279, %v989
        %v991 = vand.u32 %v990, 4294901760
        %992 = vmatprep.subr.mxu0 %v991
        %v993 = vand.u32 %v278, 4294901760
        %v994 = vsub.f32 %v278, %v993
        %v995 = vand.u32 %v994, 4294901760
        %996 = vmatpush1.msra.mxu0 %v995
        %v997 = vand.u32 %v282, 4294901760
        %v998 = vsub.f32 %v282, %v997
        %v999 = vand.u32 %v998, 4294901760
        %1000 = vmatprep.subr.mxu0 %v999
        %v1001 = vand.u32 %v281, 4294901760
        %v1002 = vsub.f32 %v281, %v1001
        %v1003 = vand.u32 %v1002, 4294901760
        %1004 = vmatpush1.msra.mxu0 %v1003
        %v1005 = vand.u32 %v285, 4294901760
        %v1006 = vsub.f32 %v285, %v1005
        %v1007 = vand.u32 %v1006, 4294901760
        %1008 = vmatprep.subr.mxu0 %v1007
        %v1009 = vand.u32 %v284, 4294901760
        %v1010 = vsub.f32 %v284, %v1009
        %v1011 = vand.u32 %v1010, 4294901760
        %1012 = vmatpush1.msra.mxu0 %v1011
        %v1013 = vand.u32 %v288, 4294901760
        %v1014 = vsub.f32 %v288, %v1013
        %v1015 = vand.u32 %v1014, 4294901760
        %1016 = vmatprep.subr.mxu0 %v1015
        %v1017 = vand.u32 %v287, 4294901760
        %v1018 = vsub.f32 %v287, %v1017
        %v1019 = vand.u32 %v1018, 4294901760
        %1020 = vmatpush1.msra.mxu0 %v1019
        %v1021 = vand.u32 %v291, 4294901760
        %v1022 = vsub.f32 %v291, %v1021
        %v1023 = vand.u32 %v1022, 4294901760
        %1024 = vmatprep.subr.mxu0 %v1023
        %v1025 = vand.u32 %v290, 4294901760
        %v1026 = vsub.f32 %v290, %v1025
        %v1027 = vand.u32 %v1026, 4294901760
        %1028 = vmatpush1.msra.mxu0 %v1027
        %v1029 = vand.u32 %v294, 4294901760
        %v1030 = vsub.f32 %v294, %v1029
        %v1031 = vand.u32 %v1030, 4294901760
        %1032 = vmatprep.subr.mxu0 %v1031
        %v1033 = vand.u32 %v293, 4294901760
        %v1034 = vsub.f32 %v293, %v1033
        %v1035 = vand.u32 %v1034, 4294901760
        %1036 = vmatpush1.msra.mxu0 %v1035
        %v1037 = vand.u32 %v297, 4294901760
        %v1038 = vsub.f32 %v297, %v1037
        %v1039 = vand.u32 %v1038, 4294901760
        %1040 = vmatprep.subr.mxu0 %v1039
        %v1041 = vand.u32 %v296, 4294901760
        %v1042 = vsub.f32 %v296, %v1041
        %v1043 = vand.u32 %v1042, 4294901760
        %1044 = vmatpush1.msra.mxu0 %v1043
        %v1045 = vand.u32 %v300, 4294901760
        %v1046 = vsub.f32 %v300, %v1045
        %v1047 = vand.u32 %v1046, 4294901760
        %1048 = vmatprep.subr.mxu0 %v1047
        %v1049 = vand.u32 %v299, 4294901760
        %v1050 = vsub.f32 %v299, %v1049
        %v1051 = vand.u32 %v1050, 4294901760
        %1052 = vmatpush1.msra.mxu0 %v1051
        %v1053 = vand.u32 %v303, 4294901760
        %v1054 = vsub.f32 %v303, %v1053
        %v1055 = vand.u32 %v1054, 4294901760
        %1056 = vmatprep.subr.mxu0 %v1055
        %v1057 = vand.u32 %v302, 4294901760
        %v1058 = vsub.f32 %v302, %v1057
        %v1059 = vand.u32 %v1058, 4294901760
        %1060 = vmatpush1.msra.mxu0 %v1059
        %v1061 = vand.u32 %v306, 4294901760
        %v1062 = vsub.f32 %v306, %v1061
        %v1063 = vand.u32 %v1062, 4294901760
        %1064 = vmatprep.subr.mxu0 %v1063
        %v1065 = vand.u32 %v305, 4294901760
        %v1066 = vsub.f32 %v305, %v1065
        %v1067 = vand.u32 %v1066, 4294901760
        %1068 = vmatpush1.msra.mxu0 %v1067
        %v1069 = vand.u32 %v309, 4294901760
        %v1070 = vsub.f32 %v309, %v1069
        %v1071 = vand.u32 %v1070, 4294901760
        %1072 = vmatprep.subr.mxu0 %v1071
        %v1073 = vand.u32 %v308, 4294901760
        %v1074 = vsub.f32 %v308, %v1073
        %v1075 = vand.u32 %v1074, 4294901760
        %1076 = vmatpush1.msra.mxu0 %v1075
        %v1077 = vand.u32 %v312, 4294901760
        %v1078 = vsub.f32 %v312, %v1077
        %v1079 = vand.u32 %v1078, 4294901760
        %1080 = vmatprep.subr.mxu0 %v1079
        %v1081 = vand.u32 %v311, 4294901760
        %v1082 = vsub.f32 %v311, %v1081
        %v1083 = vand.u32 %v1082, 4294901760
        %1084 = vmatpush1.msra.mxu0 %v1083
        %v1085 = vand.u32 %v315, 4294901760
        %v1086 = vsub.f32 %v315, %v1085
        %v1087 = vand.u32 %v1086, 4294901760
        %1088 = vmatprep.subr.mxu0 %v1087
        %v1089 = vand.u32 %v314, 4294901760
        %v1090 = vsub.f32 %v314, %v1089
        %v1091 = vand.u32 %v1090, 4294901760
        %1092 = vmatpush1.msra.mxu0 %v1091
        %v1093 = vand.u32 %v318, 4294901760
        %v1094 = vsub.f32 %v318, %v1093
        %v1095 = vand.u32 %v1094, 4294901760
        %1096 = vmatprep.subr.mxu0 %v1095
        %v1097 = vand.u32 %v317, 4294901760
        %v1098 = vsub.f32 %v317, %v1097
        %v1099 = vand.u32 %v1098, 4294901760
        %1100 = vmatpush1.msra.mxu0 %v1099
        %1101 = vmatprep.subr.mxu0 0.0
        %1102 = vmatpush1.msra.mxu0 0.0
        %1103 = vmatprep.subr.mxu0 0.0
        %1104 = vmatpush1.msra.mxu0 0.0
        %1105 = vmatprep.subr.mxu0 0.0
        %1106 = vmatpush1.msra.mxu0 0.0
        %1107 = vmatprep.subr.mxu0 0.0
        %1108 = vmatpush1.msra.mxu0 0.0
        %1109 = vmatprep.subr.mxu0 0.0
        %1110 = vmatpush1.msra.mxu0 0.0
        %1111 = vmatprep.subr.mxu0 0.0
        %1112 = vmatpush1.msra.mxu0 0.0
        %1113 = vmatprep.subr.mxu0 0.0
        %1114 = vmatpush1.msra.mxu0 0.0
        %1115 = vmatprep.subr.mxu0 0.0
        %1116 = vmatpush1.msra.mxu0 0.0
        %1117 = vmatprep.subr.mxu0 0.0
        %1118 = vmatpush1.msra.mxu0 0.0
        %1119 = vmatprep.subr.mxu0 0.0
        %1120 = vmatpush1.msra.mxu0 0.0
        %1121 = vmatprep.subr.mxu0 0.0
        %1122 = vmatpush1.msra.mxu0 0.0
        %1123 = vmatprep.subr.mxu0 0.0
        %1124 = vmatpush1.msra.mxu0 0.0
        %1125 = vmatprep.subr.mxu0 0.0
        %1126 = vmatpush1.msra.mxu0 0.0
        %1127 = vmatprep.subr.mxu0 0.0
        %1128 = vmatpush1.msra.mxu0 0.0
        %1129 = vmatprep.subr.mxu0 0.0
        %1130 = vmatpush1.msra.mxu0 0.0
        %1131 = vmatprep.subr.mxu0 0.0
        %1132 = vmatpush1.msra.mxu0 0.0
        %1133 = vmatprep.mubr.f32.mxu0 0.0
        %v1134 = vand.u32 %v269, 4294901760
        %1135 = vmatmul.mubr.f32.gmra.mrb[0].mxu0 %v1134
        %v1136 = vpop.f32.mrb[0].mxu0
        %v1137 = vadd.f32 %v951, %v1136
        %v1138 = vpop.f32.mrb[0].mxu0
        %v1139 = vadd.f32 %v953, %v1138
        %1140 = vmatprep.mubr.f32.mxu0 0.0
        %v1141 = vand.u32 %v270, 4294901760
        %1142 = vmatmul.mubr.f32.gmra.mrb[0].mxu0 %v1141
        %v1143 = vpop.f32.mrb[0].mxu0
        %v1144 = vadd.f32 %v960, %v1143
        %v1145 = vpop.f32.mrb[0].mxu0
        %v1146 = vadd.f32 %v962, %v1145
        %1147 = vmatprep.mubr.f32.mxu0 0.0
        %v1148 = vand.u32 %v271, 4294901760
        %1149 = vmatmul.mubr.f32.gmra.mrb[0].mxu0 %v1148
        %v1150 = vpop.f32.mrb[0].mxu0
        %v1151 = vadd.f32 %v969, %v1150
        %v1152 = vpop.f32.mrb[0].mxu0
        %v1153 = vadd.f32 %v971, %v1152
        %1154 = vdwg.mxu0
        %v1155 = vand.u32 %v273, 4294901760
        %1156 = vmatprep.subr.mxu0 %v1155
        %v1157 = vand.u32 %v272, 4294901760
        %1158 = vmatpush1.msra.mxu0 %v1157
        %v1159 = vand.u32 %v276, 4294901760
        %1160 = vmatprep.subr.mxu0 %v1159
        %v1161 = vand.u32 %v275, 4294901760
        %1162 = vmatpush1.msra.mxu0 %v1161
        %v1163 = vand.u32 %v279, 4294901760
        %1164 = vmatprep.subr.mxu0 %v1163
        %v1165 = vand.u32 %v278, 4294901760
        %1166 = vmatpush1.msra.mxu0 %v1165
        %v1167 = vand.u32 %v282, 4294901760
        %1168 = vmatprep.subr.mxu0 %v1167
        %v1169 = vand.u32 %v281, 4294901760
        %1170 = vmatpush1.msra.mxu0 %v1169
        %v1171 = vand.u32 %v285, 4294901760
        %1172 = vmatprep.subr.mxu0 %v1171
        %v1173 = vand.u32 %v284, 4294901760
        %1174 = vmatpush1.msra.mxu0 %v1173
        %v1175 = vand.u32 %v288, 4294901760
        %1176 = vmatprep.subr.mxu0 %v1175
        %v1177 = vand.u32 %v287, 4294901760
        %1178 = vmatpush1.msra.mxu0 %v1177
        %v1179 = vand.u32 %v291, 4294901760
        %1180 = vmatprep.subr.mxu0 %v1179
        %v1181 = vand.u32 %v290, 4294901760
        %1182 = vmatpush1.msra.mxu0 %v1181
        %v1183 = vand.u32 %v294, 4294901760
        %1184 = vmatprep.subr.mxu0 %v1183
        %v1185 = vand.u32 %v293, 4294901760
        %1186 = vmatpush1.msra.mxu0 %v1185
        %v1187 = vand.u32 %v297, 4294901760
        %1188 = vmatprep.subr.mxu0 %v1187
        %v1189 = vand.u32 %v296, 4294901760
        %1190 = vmatpush1.msra.mxu0 %v1189
        %v1191 = vand.u32 %v300, 4294901760
        %1192 = vmatprep.subr.mxu0 %v1191
        %v1193 = vand.u32 %v299, 4294901760
        %1194 = vmatpush1.msra.mxu0 %v1193
        %v1195 = vand.u32 %v303, 4294901760
        %1196 = vmatprep.subr.mxu0 %v1195
        %v1197 = vand.u32 %v302, 4294901760
        %1198 = vmatpush1.msra.mxu0 %v1197
        %v1199 = vand.u32 %v306, 4294901760
        %1200 = vmatprep.subr.mxu0 %v1199
        %v1201 = vand.u32 %v305, 4294901760
        %1202 = vmatpush1.msra.mxu0 %v1201
        %v1203 = vand.u32 %v309, 4294901760
        %1204 = vmatprep.subr.mxu0 %v1203
        %v1205 = vand.u32 %v308, 4294901760
        %1206 = vmatpush1.msra.mxu0 %v1205
        %v1207 = vand.u32 %v312, 4294901760
        %1208 = vmatprep.subr.mxu0 %v1207
        %v1209 = vand.u32 %v311, 4294901760
        %1210 = vmatpush1.msra.mxu0 %v1209
        %v1211 = vand.u32 %v315, 4294901760
        %1212 = vmatprep.subr.mxu0 %v1211
        %v1213 = vand.u32 %v314, 4294901760
        %1214 = vmatpush1.msra.mxu0 %v1213
        %v1215 = vand.u32 %v318, 4294901760
        %1216 = vmatprep.subr.mxu0 %v1215
        %v1217 = vand.u32 %v317, 4294901760
        %1218 = vmatpush1.msra.mxu0 %v1217
        %1219 = vmatprep.subr.mxu0 0.0
        %1220 = vmatpush1.msra.mxu0 0.0
        %1221 = vmatprep.subr.mxu0 0.0
        %1222 = vmatpush1.msra.mxu0 0.0
        %1223 = vmatprep.subr.mxu0 0.0
        %1224 = vmatpush1.msra.mxu0 0.0
        %1225 = vmatprep.subr.mxu0 0.0
        %1226 = vmatpush1.msra.mxu0 0.0
        %1227 = vmatprep.subr.mxu0 0.0
        %1228 = vmatpush1.msra.mxu0 0.0
        %1229 = vmatprep.subr.mxu0 0.0
        %1230 = vmatpush1.msra.mxu0 0.0
        %1231 = vmatprep.subr.mxu0 0.0
        %1232 = vmatpush1.msra.mxu0 0.0
        %1233 = vmatprep.subr.mxu0 0.0
        %1234 = vmatpush1.msra.mxu0 0.0
        %1235 = vmatprep.subr.mxu0 0.0
        %1236 = vmatpush1.msra.mxu0 0.0
        %1237 = vmatprep.subr.mxu0 0.0
        %1238 = vmatpush1.msra.mxu0 0.0
        %1239 = vmatprep.subr.mxu0 0.0
        %1240 = vmatpush1.msra.mxu0 0.0
        %1241 = vmatprep.subr.mxu0 0.0
        %1242 = vmatpush1.msra.mxu0 0.0
        %1243 = vmatprep.subr.mxu0 0.0
        %1244 = vmatpush1.msra.mxu0 0.0
        %1245 = vmatprep.subr.mxu0 0.0
        %1246 = vmatpush1.msra.mxu0 0.0
        %1247 = vmatprep.subr.mxu0 0.0
        %1248 = vmatpush1.msra.mxu0 0.0
        %1249 = vmatprep.subr.mxu0 0.0
        %1250 = vmatpush1.msra.mxu0 0.0
        %1251 = vmatprep.mubr.f32.mxu0 0.0
        %v1252 = vand.u32 %v269, 4294901760
        %1253 = vmatmul.mubr.f32.gmra.mrb[0].mxu0 %v1252
        %v1254 = vpop.f32.mrb[0].mxu0
        %v1255 = vadd.f32 %v1137, %v1254
        %v1256 = vpop.f32.mrb[0].mxu0
        %v1257 = vadd.f32 %v1139, %v1256
        %1258 = vmatprep.mubr.f32.mxu0 0.0
        %v1259 = vand.u32 %v270, 4294901760
        %1260 = vmatmul.mubr.f32.gmra.mrb[0].mxu0 %v1259
        %v1261 = vpop.f32.mrb[0].mxu0
        %v1262 = vadd.f32 %v1144, %v1261
        %v1263 = vpop.f32.mrb[0].mxu0
        %v1264 = vadd.f32 %v1146, %v1263
        %1265 = vmatprep.mubr.f32.mxu0 0.0
        %v1266 = vand.u32 %v271, 4294901760
        %1267 = vmatmul.mubr.f32.gmra.mrb[0].mxu0 %v1266
        %v1268 = vpop.f32.mrb[0].mxu0
        %v1269 = vadd.f32 %v1151, %v1268
        %v1270 = vpop.f32.mrb[0].mxu0
        %v1271 = vadd.f32 %v1153, %v1270
        %1272 = vdwg.mxu0
        %1273 = vmatprep.subr.mxu0 0.0
        %v1274 = vand.u32 %v274, 4294901760
        %1275 = vmatpush1.msra.mxu0 %v1274
        %1276 = vmatprep.subr.mxu0 0.0
        %v1277 = vand.u32 %v277, 4294901760
        %1278 = vmatpush1.msra.mxu0 %v1277
        %1279 = vmatprep.subr.mxu0 0.0
        %v1280 = vand.u32 %v280, 4294901760
        %1281 = vmatpush1.msra.mxu0 %v1280
        %1282 = vmatprep.subr.mxu0 0.0
        %v1283 = vand.u32 %v283, 4294901760
        %1284 = vmatpush1.msra.mxu0 %v1283
        %1285 = vmatprep.subr.mxu0 0.0
        %v1286 = vand.u32 %v286, 4294901760
        %1287 = vmatpush1.msra.mxu0 %v1286
        %1288 = vmatprep.subr.mxu0 0.0
        %v1289 = vand.u32 %v289, 4294901760
        %1290 = vmatpush1.msra.mxu0 %v1289
        %1291 = vmatprep.subr.mxu0 0.0
        %v1292 = vand.u32 %v292, 4294901760
        %1293 = vmatpush1.msra.mxu0 %v1292
        %1294 = vmatprep.subr.mxu0 0.0
        %v1295 = vand.u32 %v295, 4294901760
        %1296 = vmatpush1.msra.mxu0 %v1295
        %1297 = vmatprep.subr.mxu0 0.0
        %v1298 = vand.u32 %v298, 4294901760
        %1299 = vmatpush1.msra.mxu0 %v1298
        %1300 = vmatprep.subr.mxu0 0.0
        %v1301 = vand.u32 %v301, 4294901760
        %1302 = vmatpush1.msra.mxu0 %v1301
        %1303 = vmatprep.subr.mxu0 0.0
        %v1304 = vand.u32 %v304, 4294901760
        %1305 = vmatpush1.msra.mxu0 %v1304
        %1306 = vmatprep.subr.mxu0 0.0
        %v1307 = vand.u32 %v307, 4294901760
        %1308 = vmatpush1.msra.mxu0 %v1307
        %1309 = vmatprep.subr.mxu0 0.0
        %v1310 = vand.u32 %v310, 4294901760
        %1311 = vmatpush1.msra.mxu0 %v1310
        %1312 = vmatprep.subr.mxu0 0.0
        %v1313 = vand.u32 %v313, 4294901760
        %1314 = vmatpush1.msra.mxu0 %v1313
        %1315 = vmatprep.subr.mxu0 0.0
        %v1316 = vand.u32 %v316, 4294901760
        %1317 = vmatpush1.msra.mxu0 %v1316
        %1318 = vmatprep.subr.mxu0 0.0
        %v1319 = vand.u32 %v319, 4294901760
        %1320 = vmatpush1.msra.mxu0 %v1319
        %1321 = vmatprep.subr.mxu0 0.0
        %1322 = vmatpush1.msra.mxu0 0.0
        %1323 = vmatprep.subr.mxu0 0.0
        %1324 = vmatpush1.msra.mxu0 0.0
        %1325 = vmatprep.subr.mxu0 0.0
        %1326 = vmatpush1.msra.mxu0 0.0
        %1327 = vmatprep.subr.mxu0 0.0
        %1328 = vmatpush1.msra.mxu0 0.0
        %1329 = vmatprep.subr.mxu0 0.0
        %1330 = vmatpush1.msra.mxu0 0.0
        %1331 = vmatprep.subr.mxu0 0.0
        %1332 = vmatpush1.msra.mxu0 0.0
        %1333 = vmatprep.subr.mxu0 0.0
        %1334 = vmatpush1.msra.mxu0 0.0
        %1335 = vmatprep.subr.mxu0 0.0
        %1336 = vmatpush1.msra.mxu0 0.0
        %1337 = vmatprep.subr.mxu0 0.0
        %1338 = vmatpush1.msra.mxu0 0.0
        %1339 = vmatprep.subr.mxu0 0.0
        %1340 = vmatpush1.msra.mxu0 0.0
        %1341 = vmatprep.subr.mxu0 0.0
        %1342 = vmatpush1.msra.mxu0 0.0
        %1343 = vmatprep.subr.mxu0 0.0
        %1344 = vmatpush1.msra.mxu0 0.0
        %1345 = vmatprep.subr.mxu0 0.0
        %1346 = vmatpush1.msra.mxu0 0.0
        %1347 = vmatprep.subr.mxu0 0.0
        %1348 = vmatpush1.msra.mxu0 0.0
        %1349 = vmatprep.subr.mxu0 0.0
        %1350 = vmatpush1.msra.mxu0 0.0
        %1351 = vmatprep.subr.mxu0 0.0
        %1352 = vmatpush1.msra.mxu0 0.0
        %1353 = vmatprep.mubr.f32.mxu0 0.0
        %v1354 = vand.u32 %v269, 4294901760
        %v1355 = vsub.f32 %v269, %v1354
        %v1356 = vand.u32 %v1355, 4294901760
        %v1357 = vsub.f32 %v1355, %v1356
        %v1358 = vand.u32 %v1357, 4294901760
        %1359 = vmatmul.mubr.f32.gmra.mrb[0].mxu0 %v1358
        %v1360 = vpop.f32.mrb[0].mxu0
        %v1361 = vadd.f32 0.0, %v1360
        %v1362 = vpop.f32.mrb[0].mxu0
        %1363 = vmatprep.mubr.f32.mxu0 0.0
        %v1364 = vand.u32 %v270, 4294901760
        %v1365 = vsub.f32 %v270, %v1364
        %v1366 = vand.u32 %v1365, 4294901760
        %v1367 = vsub.f32 %v1365, %v1366
        %v1368 = vand.u32 %v1367, 4294901760
        %1369 = vmatmul.mubr.f32.gmra.mrb[0].mxu0 %v1368
        %v1370 = vpop.f32.mrb[0].mxu0
        %v1371 = vadd.f32 0.0, %v1370
        %v1372 = vpop.f32.mrb[0].mxu0
        %1373 = vmatprep.mubr.f32.mxu0 0.0
        %v1374 = vand.u32 %v271, 4294901760
        %v1375 = vsub.f32 %v271, %v1374
        %v1376 = vand.u32 %v1375, 4294901760
        %v1377 = vsub.f32 %v1375, %v1376
        %v1378 = vand.u32 %v1377, 4294901760
        %1379 = vmatmul.mubr.f32.gmra.mrb[0].mxu0 %v1378
        %v1380 = vpop.f32.mrb[0].mxu0
        %v1381 = vadd.f32 0.0, %v1380
        %v1382 = vpop.f32.mrb[0].mxu0
        %1383 = vdwg.mxu0
        %1384 = vmatprep.subr.mxu0 0.0
        %v1385 = vand.u32 %v274, 4294901760
        %v1386 = vsub.f32 %v274, %v1385
        %v1387 = vand.u32 %v1386, 4294901760
        %v1388 = vsub.f32 %v1386, %v1387
        %v1389 = vand.u32 %v1388, 4294901760
        %1390 = vmatpush1.msra.mxu0 %v1389
        %1391 = vmatprep.subr.mxu0 0.0
        %v1392 = vand.u32 %v277, 4294901760
        %v1393 = vsub.f32 %v277, %v1392
        %v1394 = vand.u32 %v1393, 4294901760
        %v1395 = vsub.f32 %v1393, %v1394
        %v1396 = vand.u32 %v1395, 4294901760
        %1397 = vmatpush1.msra.mxu0 %v1396
        %1398 = vmatprep.subr.mxu0 0.0
        %v1399 = vand.u32 %v280, 4294901760
        %v1400 = vsub.f32 %v280, %v1399
        %v1401 = vand.u32 %v1400, 4294901760
        %v1402 = vsub.f32 %v1400, %v1401
        %v1403 = vand.u32 %v1402, 4294901760
        %1404 = vmatpush1.msra.mxu0 %v1403
        %1405 = vmatprep.subr.mxu0 0.0
        %v1406 = vand.u32 %v283, 4294901760
        %v1407 = vsub.f32 %v283, %v1406
        %v1408 = vand.u32 %v1407, 4294901760
        %v1409 = vsub.f32 %v1407, %v1408
        %v1410 = vand.u32 %v1409, 4294901760
        %1411 = vmatpush1.msra.mxu0 %v1410
        %1412 = vmatprep.subr.mxu0 0.0
        %v1413 = vand.u32 %v286, 4294901760
        %v1414 = vsub.f32 %v286, %v1413
        %v1415 = vand.u32 %v1414, 4294901760
        %v1416 = vsub.f32 %v1414, %v1415
        %v1417 = vand.u32 %v1416, 4294901760
        %1418 = vmatpush1.msra.mxu0 %v1417
        %1419 = vmatprep.subr.mxu0 0.0
        %v1420 = vand.u32 %v289, 4294901760
        %v1421 = vsub.f32 %v289, %v1420
        %v1422 = vand.u32 %v1421, 4294901760
        %v1423 = vsub.f32 %v1421, %v1422
        %v1424 = vand.u32 %v1423, 4294901760
        %1425 = vmatpush1.msra.mxu0 %v1424
        %1426 = vmatprep.subr.mxu0 0.0
        %v1427 = vand.u32 %v292, 4294901760
        %v1428 = vsub.f32 %v292, %v1427
        %v1429 = vand.u32 %v1428, 4294901760
        %v1430 = vsub.f32 %v1428, %v1429
        %v1431 = vand.u32 %v1430, 4294901760
        %1432 = vmatpush1.msra.mxu0 %v1431
        %1433 = vmatprep.subr.mxu0 0.0
        %v1434 = vand.u32 %v295, 4294901760
        %v1435 = vsub.f32 %v295, %v1434
        %v1436 = vand.u32 %v1435, 4294901760
        %v1437 = vsub.f32 %v1435, %v1436
        %v1438 = vand.u32 %v1437, 4294901760
        %1439 = vmatpush1.msra.mxu0 %v1438
        %1440 = vmatprep.subr.mxu0 0.0
        %v1441 = vand.u32 %v298, 4294901760
        %v1442 = vsub.f32 %v298, %v1441
        %v1443 = vand.u32 %v1442, 4294901760
        %v1444 = vsub.f32 %v1442, %v1443
        %v1445 = vand.u32 %v1444, 4294901760
        %1446 = vmatpush1.msra.mxu0 %v1445
        %1447 = vmatprep.subr.mxu0 0.0
        %v1448 = vand.u32 %v301, 4294901760
        %v1449 = vsub.f32 %v301, %v1448
        %v1450 = vand.u32 %v1449, 4294901760
        %v1451 = vsub.f32 %v1449, %v1450
        %v1452 = vand.u32 %v1451, 4294901760
        %1453 = vmatpush1.msra.mxu0 %v1452
        %1454 = vmatprep.subr.mxu0 0.0
        %v1455 = vand.u32 %v304, 4294901760
        %v1456 = vsub.f32 %v304, %v1455
        %v1457 = vand.u32 %v1456, 4294901760
        %v1458 = vsub.f32 %v1456, %v1457
        %v1459 = vand.u32 %v1458, 4294901760
        %1460 = vmatpush1.msra.mxu0 %v1459
        %1461 = vmatprep.subr.mxu0 0.0
        %v1462 = vand.u32 %v307, 4294901760
        %v1463 = vsub.f32 %v307, %v1462
        %v1464 = vand.u32 %v1463, 4294901760
        %v1465 = vsub.f32 %v1463, %v1464
        %v1466 = vand.u32 %v1465, 4294901760
        %1467 = vmatpush1.msra.mxu0 %v1466
        %1468 = vmatprep.subr.mxu0 0.0
        %v1469 = vand.u32 %v310, 4294901760
        %v1470 = vsub.f32 %v310, %v1469
        %v1471 = vand.u32 %v1470, 4294901760
        %v1472 = vsub.f32 %v1470, %v1471
        %v1473 = vand.u32 %v1472, 4294901760
        %1474 = vmatpush1.msra.mxu0 %v1473
        %1475 = vmatprep.subr.mxu0 0.0
        %v1476 = vand.u32 %v313, 4294901760
        %v1477 = vsub.f32 %v313, %v1476
        %v1478 = vand.u32 %v1477, 4294901760
        %v1479 = vsub.f32 %v1477, %v1478
        %v1480 = vand.u32 %v1479, 4294901760
        %1481 = vmatpush1.msra.mxu0 %v1480
        %1482 = vmatprep.subr.mxu0 0.0
        %v1483 = vand.u32 %v316, 4294901760
        %v1484 = vsub.f32 %v316, %v1483
        %v1485 = vand.u32 %v1484, 4294901760
        %v1486 = vsub.f32 %v1484, %v1485
        %v1487 = vand.u32 %v1486, 4294901760
        %1488 = vmatpush1.msra.mxu0 %v1487
        %1489 = vmatprep.subr.mxu0 0.0
        %v1490 = vand.u32 %v319, 4294901760
        %v1491 = vsub.f32 %v319, %v1490
        %v1492 = vand.u32 %v1491, 4294901760
        %v1493 = vsub.f32 %v1491, %v1492
        %v1494 = vand.u32 %v1493, 4294901760
        %1495 = vmatpush1.msra.mxu0 %v1494
        %1496 = vmatprep.subr.mxu0 0.0
        %1497 = vmatpush1.msra.mxu0 0.0
        %1498 = vmatprep.subr.mxu0 0.0
        %1499 = vmatpush1.msra.mxu0 0.0
        %1500 = vmatprep.subr.mxu0 0.0
        %1501 = vmatpush1.msra.mxu0 0.0
        %1502 = vmatprep.subr.mxu0 0.0
        %1503 = vmatpush1.msra.mxu0 0.0
        %1504 = vmatprep.subr.mxu0 0.0
        %1505 = vmatpush1.msra.mxu0 0.0
        %1506 = vmatprep.subr.mxu0 0.0
        %1507 = vmatpush1.msra.mxu0 0.0
        %1508 = vmatprep.subr.mxu0 0.0
        %1509 = vmatpush1.msra.mxu0 0.0
        %1510 = vmatprep.subr.mxu0 0.0
        %1511 = vmatpush1.msra.mxu0 0.0
        %1512 = vmatprep.subr.mxu0 0.0
        %1513 = vmatpush1.msra.mxu0 0.0
        %1514 = vmatprep.subr.mxu0 0.0
        %1515 = vmatpush1.msra.mxu0 0.0
        %1516 = vmatprep.subr.mxu0 0.0
        %1517 = vmatpush1.msra.mxu0 0.0
        %1518 = vmatprep.subr.mxu0 0.0
        %1519 = vmatpush1.msra.mxu0 0.0
        %1520 = vmatprep.subr.mxu0 0.0
        %1521 = vmatpush1.msra.mxu0 0.0
        %1522 = vmatprep.subr.mxu0 0.0
        %1523 = vmatpush1.msra.mxu0 0.0
        %1524 = vmatprep.subr.mxu0 0.0
        %1525 = vmatpush1.msra.mxu0 0.0
        %1526 = vmatprep.subr.mxu0 0.0
        %1527 = vmatpush1.msra.mxu0 0.0
        %1528 = vmatprep.mubr.f32.mxu0 0.0
        %v1529 = vand.u32 %v269, 4294901760
        %1530 = vmatmul.mubr.f32.gmra.mrb[0].mxu0 %v1529
        %v1531 = vpop.f32.mrb[0].mxu0
        %v1532 = vadd.f32 %v1361, %v1531
        %v1533 = vpop.f32.mrb[0].mxu0
        %1534 = vmatprep.mubr.f32.mxu0 0.0
        %v1535 = vand.u32 %v270, 4294901760
        %1536 = vmatmul.mubr.f32.gmra.mrb[0].mxu0 %v1535
        %v1537 = vpop.f32.mrb[0].mxu0
        %v1538 = vadd.f32 %v1371, %v1537
        %v1539 = vpop.f32.mrb[0].mxu0
        %1540 = vmatprep.mubr.f32.mxu0 0.0
        %v1541 = vand.u32 %v271, 4294901760
        %1542 = vmatmul.mubr.f32.gmra.mrb[0].mxu0 %v1541
        %v1543 = vpop.f32.mrb[0].mxu0
        %v1544 = vadd.f32 %v1381, %v1543
        %v1545 = vpop.f32.mrb[0].mxu0
        %1546 = vdwg.mxu0
        %1547 = vmatprep.subr.mxu0 0.0
        %v1548 = vand.u32 %v274, 4294901760
        %v1549 = vsub.f32 %v274, %v1548
        %1550 = vmatpush1.msra.mxu0 %v1549
        %1551 = vmatprep.subr.mxu0 0.0
        %v1552 = vand.u32 %v277, 4294901760
        %v1553 = vsub.f32 %v277, %v1552
        %1554 = vmatpush1.msra.mxu0 %v1553
        %1555 = vmatprep.subr.mxu0 0.0
        %v1556 = vand.u32 %v280, 4294901760
        %v1557 = vsub.f32 %v280, %v1556
        %1558 = vmatpush1.msra.mxu0 %v1557
        %1559 = vmatprep.subr.mxu0 0.0
        %v1560 = vand.u32 %v283, 4294901760
        %v1561 = vsub.f32 %v283, %v1560
        %1562 = vmatpush1.msra.mxu0 %v1561
        %1563 = vmatprep.subr.mxu0 0.0
        %v1564 = vand.u32 %v286, 4294901760
        %v1565 = vsub.f32 %v286, %v1564
        %1566 = vmatpush1.msra.mxu0 %v1565
        %1567 = vmatprep.subr.mxu0 0.0
        %v1568 = vand.u32 %v289, 4294901760
        %v1569 = vsub.f32 %v289, %v1568
        %1570 = vmatpush1.msra.mxu0 %v1569
        %1571 = vmatprep.subr.mxu0 0.0
        %v1572 = vand.u32 %v292, 4294901760
        %v1573 = vsub.f32 %v292, %v1572
        %1574 = vmatpush1.msra.mxu0 %v1573
        %1575 = vmatprep.subr.mxu0 0.0
        %v1576 = vand.u32 %v295, 4294901760
        %v1577 = vsub.f32 %v295, %v1576
        %1578 = vmatpush1.msra.mxu0 %v1577
        %1579 = vmatprep.subr.mxu0 0.0
        %v1580 = vand.u32 %v298, 4294901760
        %v1581 = vsub.f32 %v298, %v1580
        %1582 = vmatpush1.msra.mxu0 %v1581
        %1583 = vmatprep.subr.mxu0 0.0
        %v1584 = vand.u32 %v301, 4294901760
        %v1585 = vsub.f32 %v301, %v1584
        %1586 = vmatpush1.msra.mxu0 %v1585
        %1587 = vmatprep.subr.mxu0 0.0
        %v1588 = vand.u32 %v304, 4294901760
        %v1589 = vsub.f32 %v304, %v1588
        %1590 = vmatpush1.msra.mxu0 %v1589
        %1591 = vmatprep.subr.mxu0 0.0
        %v1592 = vand.u32 %v307, 4294901760
        %v1593 = vsub.f32 %v307, %v1592
        %1594 = vmatpush1.msra.mxu0 %v1593
        %1595 = vmatprep.subr.mxu0 0.0
        %v1596 = vand.u32 %v310, 4294901760
        %v1597 = vsub.f32 %v310, %v1596
        %1598 = vmatpush1.msra.mxu0 %v1597
        %1599 = vmatprep.subr.mxu0 0.0
        %v1600 = vand.u32 %v313, 4294901760
        %v1601 = vsub.f32 %v313, %v1600
        %1602 = vmatpush1.msra.mxu0 %v1601
        %1603 = vmatprep.subr.mxu0 0.0
        %v1604 = vand.u32 %v316, 4294901760
        %v1605 = vsub.f32 %v316, %v1604
        %1606 = vmatpush1.msra.mxu0 %v1605
        %1607 = vmatprep.subr.mxu0 0.0
        %v1608 = vand.u32 %v319, 4294901760
        %v1609 = vsub.f32 %v319, %v1608
        %1610 = vmatpush1.msra.mxu0 %v1609
        %1611 = vmatprep.subr.mxu0 0.0
        %1612 = vmatpush1.msra.mxu0 0.0
        %1613 = vmatprep.subr.mxu0 0.0
        %1614 = vmatpush1.msra.mxu0 0.0
        %1615 = vmatprep.subr.mxu0 0.0
        %1616 = vmatpush1.msra.mxu0 0.0
        %1617 = vmatprep.subr.mxu0 0.0
        %1618 = vmatpush1.msra.mxu0 0.0
        %1619 = vmatprep.subr.mxu0 0.0
        %1620 = vmatpush1.msra.mxu0 0.0
        %1621 = vmatprep.subr.mxu0 0.0
        %1622 = vmatpush1.msra.mxu0 0.0
        %1623 = vmatprep.subr.mxu0 0.0
        %1624 = vmatpush1.msra.mxu0 0.0
        %1625 = vmatprep.subr.mxu0 0.0
        %1626 = vmatpush1.msra.mxu0 0.0
        %1627 = vmatprep.subr.mxu0 0.0
        %1628 = vmatpush1.msra.mxu0 0.0
        %1629 = vmatprep.subr.mxu0 0.0
        %1630 = vmatpush1.msra.mxu0 0.0
        %1631 = vmatprep.subr.mxu0 0.0
        %1632 = vmatpush1.msra.mxu0 0.0
        %1633 = vmatprep.subr.mxu0 0.0
        %1634 = vmatpush1.msra.mxu0 0.0
        %1635 = vmatprep.subr.mxu0 0.0
        %1636 = vmatpush1.msra.mxu0 0.0
        %1637 = vmatprep.subr.mxu0 0.0
        %1638 = vmatpush1.msra.mxu0 0.0
        %1639 = vmatprep.subr.mxu0 0.0
        %1640 = vmatpush1.msra.mxu0 0.0
        %1641 = vmatprep.subr.mxu0 0.0
        %1642 = vmatpush1.msra.mxu0 0.0
        %1643 = vmatprep.mubr.f32.mxu0 0.0
        %v1644 = vand.u32 %v269, 4294901760
        %v1645 = vsub.f32 %v269, %v1644
        %1646 = vmatmul.mubr.f32.gmra.mrb[0].mxu0 %v1645
        %v1647 = vpop.f32.mrb[0].mxu0
        %v1648 = vadd.f32 %v1532, %v1647
        %v1649 = vpop.f32.mrb[0].mxu0
        %1650 = vmatprep.mubr.f32.mxu0 0.0
        %v1651 = vand.u32 %v270, 4294901760
        %v1652 = vsub.f32 %v270, %v1651
        %1653 = vmatmul.mubr.f32.gmra.mrb[0].mxu0 %v1652
        %v1654 = vpop.f32.mrb[0].mxu0
        %v1655 = vadd.f32 %v1538, %v1654
        %v1656 = vpop.f32.mrb[0].mxu0
        %1657 = vmatprep.mubr.f32.mxu0 0.0
        %v1658 = vand.u32 %v271, 4294901760
        %v1659 = vsub.f32 %v271, %v1658
        %1660 = vmatmul.mubr.f32.gmra.mrb[0].mxu0 %v1659
        %v1661 = vpop.f32.mrb[0].mxu0
        %v1662 = vadd.f32 %v1544, %v1661
        %v1663 = vpop.f32.mrb[0].mxu0
        %1664 = vdwg.mxu0
        %1665 = vmatprep.subr.mxu0 0.0
        %v1666 = vand.u32 %v274, 4294901760
        %1667 = vmatpush1.msra.mxu0 %v1666
        %1668 = vmatprep.subr.mxu0 0.0
        %v1669 = vand.u32 %v277, 4294901760
        %1670 = vmatpush1.msra.mxu0 %v1669
        %1671 = vmatprep.subr.mxu0 0.0
        %v1672 = vand.u32 %v280, 4294901760
        %1673 = vmatpush1.msra.mxu0 %v1672
        %1674 = vmatprep.subr.mxu0 0.0
        %v1675 = vand.u32 %v283, 4294901760
        %1676 = vmatpush1.msra.mxu0 %v1675
        %1677 = vmatprep.subr.mxu0 0.0
        %v1678 = vand.u32 %v286, 4294901760
        %1679 = vmatpush1.msra.mxu0 %v1678
        %1680 = vmatprep.subr.mxu0 0.0
        %v1681 = vand.u32 %v289, 4294901760
        %1682 = vmatpush1.msra.mxu0 %v1681
        %1683 = vmatprep.subr.mxu0 0.0
        %v1684 = vand.u32 %v292, 4294901760
        %1685 = vmatpush1.msra.mxu0 %v1684
        %1686 = vmatprep.subr.mxu0 0.0
        %v1687 = vand.u32 %v295, 4294901760
        %1688 = vmatpush1.msra.mxu0 %v1687
        %1689 = vmatprep.subr.mxu0 0.0
        %v1690 = vand.u32 %v298, 4294901760
        %1691 = vmatpush1.msra.mxu0 %v1690
        %1692 = vmatprep.subr.mxu0 0.0
        %v1693 = vand.u32 %v301, 4294901760
        %1694 = vmatpush1.msra.mxu0 %v1693
        %1695 = vmatprep.subr.mxu0 0.0
        %v1696 = vand.u32 %v304, 4294901760
        %1697 = vmatpush1.msra.mxu0 %v1696
        %1698 = vmatprep.subr.mxu0 0.0
        %v1699 = vand.u32 %v307, 4294901760
        %1700 = vmatpush1.msra.mxu0 %v1699
        %1701 = vmatprep.subr.mxu0 0.0
        %v1702 = vand.u32 %v310, 4294901760
        %1703 = vmatpush1.msra.mxu0 %v1702
        %1704 = vmatprep.subr.mxu0 0.0
        %v1705 = vand.u32 %v313, 4294901760
        %1706 = vmatpush1.msra.mxu0 %v1705
        %1707 = vmatprep.subr.mxu0 0.0
        %v1708 = vand.u32 %v316, 4294901760
        %1709 = vmatpush1.msra.mxu0 %v1708
        %1710 = vmatprep.subr.mxu0 0.0
        %v1711 = vand.u32 %v319, 4294901760
        %1712 = vmatpush1.msra.mxu0 %v1711
        %1713 = vmatprep.subr.mxu0 0.0
        %1714 = vmatpush1.msra.mxu0 0.0
        %1715 = vmatprep.subr.mxu0 0.0
        %1716 = vmatpush1.msra.mxu0 0.0
        %1717 = vmatprep.subr.mxu0 0.0
        %1718 = vmatpush1.msra.mxu0 0.0
        %1719 = vmatprep.subr.mxu0 0.0
        %1720 = vmatpush1.msra.mxu0 0.0
        %1721 = vmatprep.subr.mxu0 0.0
        %1722 = vmatpush1.msra.mxu0 0.0
        %1723 = vmatprep.subr.mxu0 0.0
        %1724 = vmatpush1.msra.mxu0 0.0
        %1725 = vmatprep.subr.mxu0 0.0
        %1726 = vmatpush1.msra.mxu0 0.0
        %1727 = vmatprep.subr.mxu0 0.0
        %1728 = vmatpush1.msra.mxu0 0.0
        %1729 = vmatprep.subr.mxu0 0.0
        %1730 = vmatpush1.msra.mxu0 0.0
        %1731 = vmatprep.subr.mxu0 0.0
        %1732 = vmatpush1.msra.mxu0 0.0
        %1733 = vmatprep.subr.mxu0 0.0
        %1734 = vmatpush1.msra.mxu0 0.0
        %1735 = vmatprep.subr.mxu0 0.0
        %1736 = vmatpush1.msra.mxu0 0.0
        %1737 = vmatprep.subr.mxu0 0.0
        %1738 = vmatpush1.msra.mxu0 0.0
        %1739 = vmatprep.subr.mxu0 0.0
        %1740 = vmatpush1.msra.mxu0 0.0
        %1741 = vmatprep.subr.mxu0 0.0
        %1742 = vmatpush1.msra.mxu0 0.0
        %1743 = vmatprep.subr.mxu0 0.0
        %1744 = vmatpush1.msra.mxu0 0.0
        %1745 = vmatprep.mubr.f32.mxu0 0.0
        %v1746 = vand.u32 %v269, 4294901760
        %v1747 = vsub.f32 %v269, %v1746
        %v1748 = vand.u32 %v1747, 4294901760
        %1749 = vmatmul.mubr.f32.gmra.mrb[0].mxu0 %v1748
        %v1750 = vpop.f32.mrb[0].mxu0
        %v1751 = vadd.f32 %v1648, %v1750
        %v1752 = vpop.f32.mrb[0].mxu0
        %1753 = vmatprep.mubr.f32.mxu0 0.0
        %v1754 = vand.u32 %v270, 4294901760
        %v1755 = vsub.f32 %v270, %v1754
        %v1756 = vand.u32 %v1755, 4294901760
        %1757 = vmatmul.mubr.f32.gmra.mrb[0].mxu0 %v1756
        %v1758 = vpop.f32.mrb[0].mxu0
        %v1759 = vadd.f32 %v1655, %v1758
        %v1760 = vpop.f32.mrb[0].mxu0
        %1761 = vmatprep.mubr.f32.mxu0 0.0
        %v1762 = vand.u32 %v271, 4294901760
        %v1763 = vsub.f32 %v271, %v1762
        %v1764 = vand.u32 %v1763, 4294901760
        %1765 = vmatmul.mubr.f32.gmra.mrb[0].mxu0 %v1764
        %v1766 = vpop.f32.mrb[0].mxu0
        %v1767 = vadd.f32 %v1662, %v1766
        %v1768 = vpop.f32.mrb[0].mxu0
        %1769 = vdwg.mxu0
        %1770 = vmatprep.subr.mxu0 0.0
        %v1771 = vand.u32 %v274, 4294901760
        %v1772 = vsub.f32 %v274, %v1771
        %v1773 = vand.u32 %v1772, 4294901760
        %1774 = vmatpush1.msra.mxu0 %v1773
        %1775 = vmatprep.subr.mxu0 0.0
        %v1776 = vand.u32 %v277, 4294901760
        %v1777 = vsub.f32 %v277, %v1776
        %v1778 = vand.u32 %v1777, 4294901760
        %1779 = vmatpush1.msra.mxu0 %v1778
        %1780 = vmatprep.subr.mxu0 0.0
        %v1781 = vand.u32 %v280, 4294901760
        %v1782 = vsub.f32 %v280, %v1781
        %v1783 = vand.u32 %v1782, 4294901760
        %1784 = vmatpush1.msra.mxu0 %v1783
        %1785 = vmatprep.subr.mxu0 0.0
        %v1786 = vand.u32 %v283, 4294901760
        %v1787 = vsub.f32 %v283, %v1786
        %v1788 = vand.u32 %v1787, 4294901760
        %1789 = vmatpush1.msra.mxu0 %v1788
        %1790 = vmatprep.subr.mxu0 0.0
        %v1791 = vand.u32 %v286, 4294901760
        %v1792 = vsub.f32 %v286, %v1791
        %v1793 = vand.u32 %v1792, 4294901760
        %1794 = vmatpush1.msra.mxu0 %v1793
        %1795 = vmatprep.subr.mxu0 0.0
        %v1796 = vand.u32 %v289, 4294901760
        %v1797 = vsub.f32 %v289, %v1796
        %v1798 = vand.u32 %v1797, 4294901760
        %1799 = vmatpush1.msra.mxu0 %v1798
        %1800 = vmatprep.subr.mxu0 0.0
        %v1801 = vand.u32 %v292, 4294901760
        %v1802 = vsub.f32 %v292, %v1801
        %v1803 = vand.u32 %v1802, 4294901760
        %1804 = vmatpush1.msra.mxu0 %v1803
        %1805 = vmatprep.subr.mxu0 0.0
        %v1806 = vand.u32 %v295, 4294901760
        %v1807 = vsub.f32 %v295, %v1806
        %v1808 = vand.u32 %v1807, 4294901760
        %1809 = vmatpush1.msra.mxu0 %v1808
        %1810 = vmatprep.subr.mxu0 0.0
        %v1811 = vand.u32 %v298, 4294901760
        %v1812 = vsub.f32 %v298, %v1811
        %v1813 = vand.u32 %v1812, 4294901760
        %1814 = vmatpush1.msra.mxu0 %v1813
        %1815 = vmatprep.subr.mxu0 0.0
        %v1816 = vand.u32 %v301, 4294901760
        %v1817 = vsub.f32 %v301, %v1816
        %v1818 = vand.u32 %v1817, 4294901760
        %1819 = vmatpush1.msra.mxu0 %v1818
        %1820 = vmatprep.subr.mxu0 0.0
        %v1821 = vand.u32 %v304, 4294901760
        %v1822 = vsub.f32 %v304, %v1821
        %v1823 = vand.u32 %v1822, 4294901760
        %1824 = vmatpush1.msra.mxu0 %v1823
        %1825 = vmatprep.subr.mxu0 0.0
        %v1826 = vand.u32 %v307, 4294901760
        %v1827 = vsub.f32 %v307, %v1826
        %v1828 = vand.u32 %v1827, 4294901760
        %1829 = vmatpush1.msra.mxu0 %v1828
        %1830 = vmatprep.subr.mxu0 0.0
        %v1831 = vand.u32 %v310, 4294901760
        %v1832 = vsub.f32 %v310, %v1831
        %v1833 = vand.u32 %v1832, 4294901760
        %1834 = vmatpush1.msra.mxu0 %v1833
        %1835 = vmatprep.subr.mxu0 0.0
        %v1836 = vand.u32 %v313, 4294901760
        %v1837 = vsub.f32 %v313, %v1836
        %v1838 = vand.u32 %v1837, 4294901760
        %1839 = vmatpush1.msra.mxu0 %v1838
        %1840 = vmatprep.subr.mxu0 0.0
        %v1841 = vand.u32 %v316, 4294901760
        %v1842 = vsub.f32 %v316, %v1841
        %v1843 = vand.u32 %v1842, 4294901760
        %1844 = vmatpush1.msra.mxu0 %v1843
        %1845 = vmatprep.subr.mxu0 0.0
        %v1846 = vand.u32 %v319, 4294901760
        %v1847 = vsub.f32 %v319, %v1846
        %v1848 = vand.u32 %v1847, 4294901760
        %1849 = vmatpush1.msra.mxu0 %v1848
        %1850 = vmatprep.subr.mxu0 0.0
        %1851 = vmatpush1.msra.mxu0 0.0
        %1852 = vmatprep.subr.mxu0 0.0
        %1853 = vmatpush1.msra.mxu0 0.0
        %1854 = vmatprep.subr.mxu0 0.0
        %1855 = vmatpush1.msra.mxu0 0.0
        %1856 = vmatprep.subr.mxu0 0.0
        %1857 = vmatpush1.msra.mxu0 0.0
        %1858 = vmatprep.subr.mxu0 0.0
        %1859 = vmatpush1.msra.mxu0 0.0
        %1860 = vmatprep.subr.mxu0 0.0
        %1861 = vmatpush1.msra.mxu0 0.0
        %1862 = vmatprep.subr.mxu0 0.0
        %1863 = vmatpush1.msra.mxu0 0.0
        %1864 = vmatprep.subr.mxu0 0.0
        %1865 = vmatpush1.msra.mxu0 0.0
        %1866 = vmatprep.subr.mxu0 0.0
        %1867 = vmatpush1.msra.mxu0 0.0
        %1868 = vmatprep.subr.mxu0 0.0
        %1869 = vmatpush1.msra.mxu0 0.0
        %1870 = vmatprep.subr.mxu0 0.0
        %1871 = vmatpush1.msra.mxu0 0.0
        %1872 = vmatprep.subr.mxu0 0.0
        %1873 = vmatpush1.msra.mxu0 0.0
        %1874 = vmatprep.subr.mxu0 0.0
        %1875 = vmatpush1.msra.mxu0 0.0
        %1876 = vmatprep.subr.mxu0 0.0
        %1877 = vmatpush1.msra.mxu0 0.0
        %1878 = vmatprep.subr.mxu0 0.0
        %1879 = vmatpush1.msra.mxu0 0.0
        %1880 = vmatprep.subr.mxu0 0.0
        %1881 = vmatpush1.msra.mxu0 0.0
        %1882 = vmatprep.mubr.f32.mxu0 0.0
        %v1883 = vand.u32 %v269, 4294901760
        %1884 = vmatmul.mubr.f32.gmra.mrb[0].mxu0 %v1883
        %v1885 = vpop.f32.mrb[0].mxu0
        %v1886 = vadd.f32 %v1751, %v1885
        %v1887 = vpop.f32.mrb[0].mxu0
        %1888 = vmatprep.mubr.f32.mxu0 0.0
        %v1889 = vand.u32 %v270, 4294901760
        %1890 = vmatmul.mubr.f32.gmra.mrb[0].mxu0 %v1889
        %v1891 = vpop.f32.mrb[0].mxu0
        %v1892 = vadd.f32 %v1759, %v1891
        %v1893 = vpop.f32.mrb[0].mxu0
        %1894 = vmatprep.mubr.f32.mxu0 0.0
        %v1895 = vand.u32 %v271, 4294901760
        %1896 = vmatmul.mubr.f32.gmra.mrb[0].mxu0 %v1895
        %v1897 = vpop.f32.mrb[0].mxu0
        %v1898 = vadd.f32 %v1767, %v1897
        %v1899 = vpop.f32.mrb[0].mxu0
        %1900 = vdwg.mxu0
        %1901 = vmatprep.subr.mxu0 0.0
        %v1902 = vand.u32 %v274, 4294901760
        %1903 = vmatpush1.msra.mxu0 %v1902
        %1904 = vmatprep.subr.mxu0 0.0
        %v1905 = vand.u32 %v277, 4294901760
        %1906 = vmatpush1.msra.mxu0 %v1905
        %1907 = vmatprep.subr.mxu0 0.0
        %v1908 = vand.u32 %v280, 4294901760
        %1909 = vmatpush1.msra.mxu0 %v1908
        %1910 = vmatprep.subr.mxu0 0.0
        %v1911 = vand.u32 %v283, 4294901760
        %1912 = vmatpush1.msra.mxu0 %v1911
        %1913 = vmatprep.subr.mxu0 0.0
        %v1914 = vand.u32 %v286, 4294901760
        %1915 = vmatpush1.msra.mxu0 %v1914
        %1916 = vmatprep.subr.mxu0 0.0
        %v1917 = vand.u32 %v289, 4294901760
        %1918 = vmatpush1.msra.mxu0 %v1917
        %1919 = vmatprep.subr.mxu0 0.0
        %v1920 = vand.u32 %v292, 4294901760
        %1921 = vmatpush1.msra.mxu0 %v1920
        %1922 = vmatprep.subr.mxu0 0.0
        %v1923 = vand.u32 %v295, 4294901760
        %1924 = vmatpush1.msra.mxu0 %v1923
        %1925 = vmatprep.subr.mxu0 0.0
        %v1926 = vand.u32 %v298, 4294901760
        %1927 = vmatpush1.msra.mxu0 %v1926
        %1928 = vmatprep.subr.mxu0 0.0
        %v1929 = vand.u32 %v301, 4294901760
        %1930 = vmatpush1.msra.mxu0 %v1929
        %1931 = vmatprep.subr.mxu0 0.0
        %v1932 = vand.u32 %v304, 4294901760
        %1933 = vmatpush1.msra.mxu0 %v1932
        %1934 = vmatprep.subr.mxu0 0.0
        %v1935 = vand.u32 %v307, 4294901760
        %1936 = vmatpush1.msra.mxu0 %v1935
        %1937 = vmatprep.subr.mxu0 0.0
        %v1938 = vand.u32 %v310, 4294901760
        %1939 = vmatpush1.msra.mxu0 %v1938
        %1940 = vmatprep.subr.mxu0 0.0
        %v1941 = vand.u32 %v313, 4294901760
        %1942 = vmatpush1.msra.mxu0 %v1941
        %1943 = vmatprep.subr.mxu0 0.0
        %v1944 = vand.u32 %v316, 4294901760
        %1945 = vmatpush1.msra.mxu0 %v1944
        %1946 = vmatprep.subr.mxu0 0.0
        %v1947 = vand.u32 %v319, 4294901760
        %1948 = vmatpush1.msra.mxu0 %v1947
        %1949 = vmatprep.subr.mxu0 0.0
        %1950 = vmatpush1.msra.mxu0 0.0
        %1951 = vmatprep.subr.mxu0 0.0
        %1952 = vmatpush1.msra.mxu0 0.0
        %1953 = vmatprep.subr.mxu0 0.0
        %1954 = vmatpush1.msra.mxu0 0.0
        %1955 = vmatprep.subr.mxu0 0.0
        %1956 = vmatpush1.msra.mxu0 0.0
        %1957 = vmatprep.subr.mxu0 0.0
        %1958 = vmatpush1.msra.mxu0 0.0
        %1959 = vmatprep.subr.mxu0 0.0
        %1960 = vmatpush1.msra.mxu0 0.0
        %1961 = vmatprep.subr.mxu0 0.0
        %1962 = vmatpush1.msra.mxu0 0.0
        %1963 = vmatprep.subr.mxu0 0.0
        %1964 = vmatpush1.msra.mxu0 0.0
        %1965 = vmatprep.subr.mxu0 0.0
        %1966 = vmatpush1.msra.mxu0 0.0
        %1967 = vmatprep.subr.mxu0 0.0
        %1968 = vmatpush1.msra.mxu0 0.0
        %1969 = vmatprep.subr.mxu0 0.0
        %1970 = vmatpush1.msra.mxu0 0.0
        %1971 = vmatprep.subr.mxu0 0.0
        %1972 = vmatpush1.msra.mxu0 0.0
        %1973 = vmatprep.subr.mxu0 0.0
        %1974 = vmatpush1.msra.mxu0 0.0
        %1975 = vmatprep.subr.mxu0 0.0
        %1976 = vmatpush1.msra.mxu0 0.0
        %1977 = vmatprep.subr.mxu0 0.0
        %1978 = vmatpush1.msra.mxu0 0.0
        %1979 = vmatprep.subr.mxu0 0.0
        %1980 = vmatpush1.msra.mxu0 0.0
        %1981 = vmatprep.mubr.f32.mxu0 0.0
        %v1982 = vand.u32 %v269, 4294901760
        %1983 = vmatmul.mubr.f32.gmra.mrb[0].mxu0 %v1982
        %v1984 = vpop.f32.mrb[0].mxu0
        %v1985 = vadd.f32 %v1886, %v1984
        %v1986 = vpop.f32.mrb[0].mxu0
        %1987 = vmatprep.mubr.f32.mxu0 0.0
        %v1988 = vand.u32 %v270, 4294901760
        %1989 = vmatmul.mubr.f32.gmra.mrb[0].mxu0 %v1988
        %v1990 = vpop.f32.mrb[0].mxu0
        %v1991 = vadd.f32 %v1892, %v1990
        %v1992 = vpop.f32.mrb[0].mxu0
        %1993 = vmatprep.mubr.f32.mxu0 0.0
        %v1994 = vand.u32 %v271, 4294901760
        %1995 = vmatmul.mubr.f32.gmra.mrb[0].mxu0 %v1994
        %v1996 = vpop.f32.mrb[0].mxu0
        %v1997 = vadd.f32 %v1898, %v1996
        %v1998 = vpop.f32.mrb[0].mxu0
        %1999 = vdwg.mxu0
        %v2000 = vld [vmem:[%s243] sm:$0xff]
        %v2001 = vld [vmem:[%s243 + $0x8] sm:$0xff]
        %v2002 = vld [vmem:[%s243 + $0x10] sm:$0xff]
        %v2003 = vld [vmem:[%s243 + $0x18] sm:$0xff]
        %v2004 = vld [vmem:[%s243 + $0x20] sm:$0xff]
        %v2005 = vld [vmem:[%s243 + $0x28] sm:$0xff]
        %v2006 = vld [vmem:[%s243 + $0x30] sm:$0xff]
        %v2007 = vld [vmem:[%s243 + $0x38] sm:$0xff]
        %v2008 = vld [vmem:[%s243 + $0x40] sm:$0xff]
        %v2009 = vmul.f32 %v2000, %v1255
        %v2010 = vmul.f32 %v2001, %v1257
        %v2011 = vmul.f32 %v2002, %v1985
        %v2012 = vmul.f32 %v2003, %v1262
        %v2013 = vmul.f32 %v2004, %v1264
        %v2014 = vmul.f32 %v2005, %v1991
        %v2015 = vmul.f32 %v2006, %v1269
        %v2016 = vmul.f32 %v2007, %v1271
        %v2017 = vmul.f32 %v2008, %v1997
        %v2018 = vld [vmem:[%s3] sm:$0xff]
        %v2019 = vld [vmem:[%s3 + $0x8] sm:$0xff]
        %v2020 = vld [vmem:[%s3 + $0x10] sm:$0xff]
        %v2021 = vld [vmem:[%s3 + $0x18] sm:$0xff]
        %v2022 = vld [vmem:[%s3 + $0x20] sm:$0xff]
        %v2023 = vld [vmem:[%s3 + $0x28] sm:$0xff]
        %v2024 = vld [vmem:[%s3 + $0x30] sm:$0xff]
        %v2025 = vld [vmem:[%s3 + $0x38] sm:$0xff]
        %v2026 = vld [vmem:[%s3 + $0x40] sm:$0xff]
        %v2027 = vld [vmem:[%s3 + $0x48] sm:$0xff]
        %v2028 = vld [vmem:[%s3 + $0x50] sm:$0xff]
        %v2029 = vld [vmem:[%s3 + $0x58] sm:$0xff]
        %v2030 = vld [vmem:[%s3 + $0x60] sm:$0xff]
        %v2031 = vld [vmem:[%s3 + $0x68] sm:$0xff]
        %v2032 = vld [vmem:[%s3 + $0x70] sm:$0xff]
        %v2033 = vld [vmem:[%s3 + $0x78] sm:$0xff]
        %v2034 = vld [vmem:[%s3 + $0x80] sm:$0xff]
        %v2035 = vld [vmem:[%s3 + $0x88] sm:$0xff]
        %v2036 = vld [vmem:[%s3 + $0x90] sm:$0xff]
        %v2037 = vld [vmem:[%s3 + $0x98] sm:$0xff]
        %v2038 = vld [vmem:[%s3 + $0xa0] sm:$0xff]
        %v2039 = vld [vmem:[%s3 + $0xa8] sm:$0xff]
        %v2040 = vld [vmem:[%s3 + $0xb0] sm:$0xff]
        %v2041 = vld [vmem:[%s3 + $0xb8] sm:$0xff]
        %v2042 = vld [vmem:[%s3 + $0xc0] sm:$0xff]
        %v2043 = vld [vmem:[%s3 + $0xc8] sm:$0xff]
        %v2044 = vld [vmem:[%s3 + $0xd0] sm:$0xff]
        %v2045 = vld [vmem:[%s3 + $0xd8] sm:$0xff]
        %v2046 = vld [vmem:[%s3 + $0xe0] sm:$0xff]
        %v2047 = vld [vmem:[%s3 + $0xe8] sm:$0xff]
        %v2048 = vld [vmem:[%s3 + $0xf0] sm:$0xff]
        %v2049 = vld [vmem:[%s3 + $0xf8] sm:$0xff]
        %v2050 = vld [vmem:[%s3 + $0x100] sm:$0xff]
        %v2051 = vld [vmem:[%s3 + $0x108] sm:$0xff]
        %v2052 = vld [vmem:[%s3 + $0x110] sm:$0xff]
        %v2053 = vld [vmem:[%s3 + $0x118] sm:$0xff]
        %v2054 = vld [vmem:[%s3 + $0x120] sm:$0xff]
        %v2055 = vld [vmem:[%s3 + $0x128] sm:$0xff]
        %v2056 = vld [vmem:[%s3 + $0x130] sm:$0xff]
        %v2057 = vld [vmem:[%s3 + $0x138] sm:$0xff]
        %v2058 = vld [vmem:[%s3 + $0x140] sm:$0xff]
        %v2059 = vld [vmem:[%s3 + $0x148] sm:$0xff]
        %v2060 = vld [vmem:[%s3 + $0x150] sm:$0xff]
        %v2061 = vld [vmem:[%s3 + $0x158] sm:$0xff]
        %v2062 = vld [vmem:[%s3 + $0x160] sm:$0xff]
        %v2063 = vld [vmem:[%s3 + $0x168] sm:$0xff]
        %v2064 = vld [vmem:[%s3 + $0x170] sm:$0xff]
        %v2065 = vld [vmem:[%s3 + $0x178] sm:$0xff]
        %2066 = vmatprep.subr.mxu0 0.0
        %v2067 = vand.u32 %v2018, 4294901760
        %2068 = vmatpush1.msra.mxu0 %v2067
        %2069 = vmatprep.subr.mxu0 0.0
        %v2070 = vand.u32 %v2019, 4294901760
        %2071 = vmatpush1.msra.mxu0 %v2070
        %2072 = vmatprep.subr.mxu0 0.0
        %v2073 = vand.u32 %v2020, 4294901760
        %2074 = vmatpush1.msra.mxu0 %v2073
        %2075 = vmatprep.subr.mxu0 0.0
        %v2076 = vand.u32 %v2021, 4294901760
        %2077 = vmatpush1.msra.mxu0 %v2076
        %2078 = vmatprep.subr.mxu0 0.0
        %v2079 = vand.u32 %v2022, 4294901760
        %2080 = vmatpush1.msra.mxu0 %v2079
        %2081 = vmatprep.subr.mxu0 0.0
        %v2082 = vand.u32 %v2023, 4294901760
        %2083 = vmatpush1.msra.mxu0 %v2082
        %2084 = vmatprep.subr.mxu0 0.0
        %v2085 = vand.u32 %v2024, 4294901760
        %2086 = vmatpush1.msra.mxu0 %v2085
        %2087 = vmatprep.subr.mxu0 0.0
        %v2088 = vand.u32 %v2025, 4294901760
        %2089 = vmatpush1.msra.mxu0 %v2088
        %2090 = vmatprep.subr.mxu0 0.0
        %v2091 = vand.u32 %v2026, 4294901760
        %2092 = vmatpush1.msra.mxu0 %v2091
        %2093 = vmatprep.subr.mxu0 0.0
        %v2094 = vand.u32 %v2027, 4294901760
        %2095 = vmatpush1.msra.mxu0 %v2094
        %2096 = vmatprep.subr.mxu0 0.0
        %v2097 = vand.u32 %v2028, 4294901760
        %2098 = vmatpush1.msra.mxu0 %v2097
        %2099 = vmatprep.subr.mxu0 0.0
        %v2100 = vand.u32 %v2029, 4294901760
        %2101 = vmatpush1.msra.mxu0 %v2100
        %2102 = vmatprep.subr.mxu0 0.0
        %v2103 = vand.u32 %v2030, 4294901760
        %2104 = vmatpush1.msra.mxu0 %v2103
        %2105 = vmatprep.subr.mxu0 0.0
        %v2106 = vand.u32 %v2031, 4294901760
        %2107 = vmatpush1.msra.mxu0 %v2106
        %2108 = vmatprep.subr.mxu0 0.0
        %v2109 = vand.u32 %v2032, 4294901760
        %2110 = vmatpush1.msra.mxu0 %v2109
        %2111 = vmatprep.subr.mxu0 0.0
        %v2112 = vand.u32 %v2033, 4294901760
        %2113 = vmatpush1.msra.mxu0 %v2112
        %2114 = vmatprep.subr.mxu0 0.0
        %v2115 = vand.u32 %v2034, 4294901760
        %2116 = vmatpush1.msra.mxu0 %v2115
        %2117 = vmatprep.subr.mxu0 0.0
        %v2118 = vand.u32 %v2035, 4294901760
        %2119 = vmatpush1.msra.mxu0 %v2118
        %2120 = vmatprep.subr.mxu0 0.0
        %v2121 = vand.u32 %v2036, 4294901760
        %2122 = vmatpush1.msra.mxu0 %v2121
        %2123 = vmatprep.subr.mxu0 0.0
        %v2124 = vand.u32 %v2037, 4294901760
        %2125 = vmatpush1.msra.mxu0 %v2124
        %2126 = vmatprep.subr.mxu0 0.0
        %v2127 = vand.u32 %v2038, 4294901760
        %2128 = vmatpush1.msra.mxu0 %v2127
        %2129 = vmatprep.subr.mxu0 0.0
        %v2130 = vand.u32 %v2039, 4294901760
        %2131 = vmatpush1.msra.mxu0 %v2130
        %2132 = vmatprep.subr.mxu0 0.0
        %v2133 = vand.u32 %v2040, 4294901760
        %2134 = vmatpush1.msra.mxu0 %v2133
        %2135 = vmatprep.subr.mxu0 0.0
        %v2136 = vand.u32 %v2041, 4294901760
        %2137 = vmatpush1.msra.mxu0 %v2136
        %2138 = vmatprep.subr.mxu0 0.0
        %v2139 = vand.u32 %v2042, 4294901760
        %2140 = vmatpush1.msra.mxu0 %v2139
        %2141 = vmatprep.subr.mxu0 0.0
        %v2142 = vand.u32 %v2043, 4294901760
        %2143 = vmatpush1.msra.mxu0 %v2142
        %2144 = vmatprep.subr.mxu0 0.0
        %v2145 = vand.u32 %v2044, 4294901760
        %2146 = vmatpush1.msra.mxu0 %v2145
        %2147 = vmatprep.subr.mxu0 0.0
        %v2148 = vand.u32 %v2045, 4294901760
        %2149 = vmatpush1.msra.mxu0 %v2148
        %2150 = vmatprep.subr.mxu0 0.0
        %v2151 = vand.u32 %v2046, 4294901760
        %2152 = vmatpush1.msra.mxu0 %v2151
        %2153 = vmatprep.subr.mxu0 0.0
        %v2154 = vand.u32 %v2047, 4294901760
        %2155 = vmatpush1.msra.mxu0 %v2154
        %2156 = vmatprep.subr.mxu0 0.0
        %v2157 = vand.u32 %v2048, 4294901760
        %2158 = vmatpush1.msra.mxu0 %v2157
        %2159 = vmatprep.subr.mxu0 0.0
        %v2160 = vand.u32 %v2049, 4294901760
        %2161 = vmatpush1.msra.mxu0 %v2160
        %v2162 = vand.u32 %v2010, 4294901760
        %v2163 = vsub.f32 %v2010, %v2162
        %v2164 = vand.u32 %v2163, 4294901760
        %v2165 = vsub.f32 %v2163, %v2164
        %v2166 = vand.u32 %v2165, 4294901760
        %2167 = vmatprep.mubr.f32.mxu0 %v2166
        %v2168 = vand.u32 %v2009, 4294901760
        %v2169 = vsub.f32 %v2009, %v2168
        %v2170 = vand.u32 %v2169, 4294901760
        %v2171 = vsub.f32 %v2169, %v2170
        %v2172 = vand.u32 %v2171, 4294901760
        %2173 = vmatmul.mubr.f32.gmra.mrb[0].mxu0 %v2172
        %v2174 = vpop.f32.mrb[0].mxu0
        %v2175 = vadd.f32 0.0, %v2174
        %v2176 = vpop.f32.mrb[0].mxu0
        %v2177 = vand.u32 %v2013, 4294901760
        %v2178 = vsub.f32 %v2013, %v2177
        %v2179 = vand.u32 %v2178, 4294901760
        %v2180 = vsub.f32 %v2178, %v2179
        %v2181 = vand.u32 %v2180, 4294901760
        %2182 = vmatprep.mubr.f32.mxu0 %v2181
        %v2183 = vand.u32 %v2012, 4294901760
        %v2184 = vsub.f32 %v2012, %v2183
        %v2185 = vand.u32 %v2184, 4294901760
        %v2186 = vsub.f32 %v2184, %v2185
        %v2187 = vand.u32 %v2186, 4294901760
        %2188 = vmatmul.mubr.f32.gmra.mrb[0].mxu0 %v2187
        %v2189 = vpop.f32.mrb[0].mxu0
        %v2190 = vadd.f32 0.0, %v2189
        %v2191 = vpop.f32.mrb[0].mxu0
        %v2192 = vand.u32 %v2016, 4294901760
        %v2193 = vsub.f32 %v2016, %v2192
        %v2194 = vand.u32 %v2193, 4294901760
        %v2195 = vsub.f32 %v2193, %v2194
        %v2196 = vand.u32 %v2195, 4294901760
        %2197 = vmatprep.mubr.f32.mxu0 %v2196
        %v2198 = vand.u32 %v2015, 4294901760
        %v2199 = vsub.f32 %v2015, %v2198
        %v2200 = vand.u32 %v2199, 4294901760
        %v2201 = vsub.f32 %v2199, %v2200
        %v2202 = vand.u32 %v2201, 4294901760
        %2203 = vmatmul.mubr.f32.gmra.mrb[0].mxu0 %v2202
        %v2204 = vpop.f32.mrb[0].mxu0
        %v2205 = vadd.f32 0.0, %v2204
        %v2206 = vpop.f32.mrb[0].mxu0
        %2207 = vdwg.mxu0
        %2208 = vmatprep.subr.mxu0 0.0
        %v2209 = vand.u32 %v2018, 4294901760
        %v2210 = vsub.f32 %v2018, %v2209
        %v2211 = vand.u32 %v2210, 4294901760
        %v2212 = vsub.f32 %v2210, %v2211
        %v2213 = vand.u32 %v2212, 4294901760
        %2214 = vmatpush1.msra.mxu0 %v2213
        %2215 = vmatprep.subr.mxu0 0.0
        %v2216 = vand.u32 %v2019, 4294901760
        %v2217 = vsub.f32 %v2019, %v2216
        %v2218 = vand.u32 %v2217, 4294901760
        %v2219 = vsub.f32 %v2217, %v2218
        %v2220 = vand.u32 %v2219, 4294901760
        %2221 = vmatpush1.msra.mxu0 %v2220
        %2222 = vmatprep.subr.mxu0 0.0
        %v2223 = vand.u32 %v2020, 4294901760
        %v2224 = vsub.f32 %v2020, %v2223
        %v2225 = vand.u32 %v2224, 4294901760
        %v2226 = vsub.f32 %v2224, %v2225
        %v2227 = vand.u32 %v2226, 4294901760
        %2228 = vmatpush1.msra.mxu0 %v2227
        %2229 = vmatprep.subr.mxu0 0.0
        %v2230 = vand.u32 %v2021, 4294901760
        %v2231 = vsub.f32 %v2021, %v2230
        %v2232 = vand.u32 %v2231, 4294901760
        %v2233 = vsub.f32 %v2231, %v2232
        %v2234 = vand.u32 %v2233, 4294901760
        %2235 = vmatpush1.msra.mxu0 %v2234
        %2236 = vmatprep.subr.mxu0 0.0
        %v2237 = vand.u32 %v2022, 4294901760
        %v2238 = vsub.f32 %v2022, %v2237
        %v2239 = vand.u32 %v2238, 4294901760
        %v2240 = vsub.f32 %v2238, %v2239
        %v2241 = vand.u32 %v2240, 4294901760
        %2242 = vmatpush1.msra.mxu0 %v2241
        %2243 = vmatprep.subr.mxu0 0.0
        %v2244 = vand.u32 %v2023, 4294901760
        %v2245 = vsub.f32 %v2023, %v2244
        %v2246 = vand.u32 %v2245, 4294901760
        %v2247 = vsub.f32 %v2245, %v2246
        %v2248 = vand.u32 %v2247, 4294901760
        %2249 = vmatpush1.msra.mxu0 %v2248
        %2250 = vmatprep.subr.mxu0 0.0
        %v2251 = vand.u32 %v2024, 4294901760
        %v2252 = vsub.f32 %v2024, %v2251
        %v2253 = vand.u32 %v2252, 4294901760
        %v2254 = vsub.f32 %v2252, %v2253
        %v2255 = vand.u32 %v2254, 4294901760
        %2256 = vmatpush1.msra.mxu0 %v2255
        %2257 = vmatprep.subr.mxu0 0.0
        %v2258 = vand.u32 %v2025, 4294901760
        %v2259 = vsub.f32 %v2025, %v2258
        %v2260 = vand.u32 %v2259, 4294901760
        %v2261 = vsub.f32 %v2259, %v2260
        %v2262 = vand.u32 %v2261, 4294901760
        %2263 = vmatpush1.msra.mxu0 %v2262
        %2264 = vmatprep.subr.mxu0 0.0
        %v2265 = vand.u32 %v2026, 4294901760
        %v2266 = vsub.f32 %v2026, %v2265
        %v2267 = vand.u32 %v2266, 4294901760
        %v2268 = vsub.f32 %v2266, %v2267
        %v2269 = vand.u32 %v2268, 4294901760
        %2270 = vmatpush1.msra.mxu0 %v2269
        %2271 = vmatprep.subr.mxu0 0.0
        %v2272 = vand.u32 %v2027, 4294901760
        %v2273 = vsub.f32 %v2027, %v2272
        %v2274 = vand.u32 %v2273, 4294901760
        %v2275 = vsub.f32 %v2273, %v2274
        %v2276 = vand.u32 %v2275, 4294901760
        %2277 = vmatpush1.msra.mxu0 %v2276
        %2278 = vmatprep.subr.mxu0 0.0
        %v2279 = vand.u32 %v2028, 4294901760
        %v2280 = vsub.f32 %v2028, %v2279
        %v2281 = vand.u32 %v2280, 4294901760
        %v2282 = vsub.f32 %v2280, %v2281
        %v2283 = vand.u32 %v2282, 4294901760
        %2284 = vmatpush1.msra.mxu0 %v2283
        %2285 = vmatprep.subr.mxu0 0.0
        %v2286 = vand.u32 %v2029, 4294901760
        %v2287 = vsub.f32 %v2029, %v2286
        %v2288 = vand.u32 %v2287, 4294901760
        %v2289 = vsub.f32 %v2287, %v2288
        %v2290 = vand.u32 %v2289, 4294901760
        %2291 = vmatpush1.msra.mxu0 %v2290
        %2292 = vmatprep.subr.mxu0 0.0
        %v2293 = vand.u32 %v2030, 4294901760
        %v2294 = vsub.f32 %v2030, %v2293
        %v2295 = vand.u32 %v2294, 4294901760
        %v2296 = vsub.f32 %v2294, %v2295
        %v2297 = vand.u32 %v2296, 4294901760
        %2298 = vmatpush1.msra.mxu0 %v2297
        %2299 = vmatprep.subr.mxu0 0.0
        %v2300 = vand.u32 %v2031, 4294901760
        %v2301 = vsub.f32 %v2031, %v2300
        %v2302 = vand.u32 %v2301, 4294901760
        %v2303 = vsub.f32 %v2301, %v2302
        %v2304 = vand.u32 %v2303, 4294901760
        %2305 = vmatpush1.msra.mxu0 %v2304
        %2306 = vmatprep.subr.mxu0 0.0
        %v2307 = vand.u32 %v2032, 4294901760
        %v2308 = vsub.f32 %v2032, %v2307
        %v2309 = vand.u32 %v2308, 4294901760
        %v2310 = vsub.f32 %v2308, %v2309
        %v2311 = vand.u32 %v2310, 4294901760
        %2312 = vmatpush1.msra.mxu0 %v2311
        %2313 = vmatprep.subr.mxu0 0.0
        %v2314 = vand.u32 %v2033, 4294901760
        %v2315 = vsub.f32 %v2033, %v2314
        %v2316 = vand.u32 %v2315, 4294901760
        %v2317 = vsub.f32 %v2315, %v2316
        %v2318 = vand.u32 %v2317, 4294901760
        %2319 = vmatpush1.msra.mxu0 %v2318
        %2320 = vmatprep.subr.mxu0 0.0
        %v2321 = vand.u32 %v2034, 4294901760
        %v2322 = vsub.f32 %v2034, %v2321
        %v2323 = vand.u32 %v2322, 4294901760
        %v2324 = vsub.f32 %v2322, %v2323
        %v2325 = vand.u32 %v2324, 4294901760
        %2326 = vmatpush1.msra.mxu0 %v2325
        %2327 = vmatprep.subr.mxu0 0.0
        %v2328 = vand.u32 %v2035, 4294901760
        %v2329 = vsub.f32 %v2035, %v2328
        %v2330 = vand.u32 %v2329, 4294901760
        %v2331 = vsub.f32 %v2329, %v2330
        %v2332 = vand.u32 %v2331, 4294901760
        %2333 = vmatpush1.msra.mxu0 %v2332
        %2334 = vmatprep.subr.mxu0 0.0
        %v2335 = vand.u32 %v2036, 4294901760
        %v2336 = vsub.f32 %v2036, %v2335
        %v2337 = vand.u32 %v2336, 4294901760
        %v2338 = vsub.f32 %v2336, %v2337
        %v2339 = vand.u32 %v2338, 4294901760
        %2340 = vmatpush1.msra.mxu0 %v2339
        %2341 = vmatprep.subr.mxu0 0.0
        %v2342 = vand.u32 %v2037, 4294901760
        %v2343 = vsub.f32 %v2037, %v2342
        %v2344 = vand.u32 %v2343, 4294901760
        %v2345 = vsub.f32 %v2343, %v2344
        %v2346 = vand.u32 %v2345, 4294901760
        %2347 = vmatpush1.msra.mxu0 %v2346
        %2348 = vmatprep.subr.mxu0 0.0
        %v2349 = vand.u32 %v2038, 4294901760
        %v2350 = vsub.f32 %v2038, %v2349
        %v2351 = vand.u32 %v2350, 4294901760
        %v2352 = vsub.f32 %v2350, %v2351
        %v2353 = vand.u32 %v2352, 4294901760
        %2354 = vmatpush1.msra.mxu0 %v2353
        %2355 = vmatprep.subr.mxu0 0.0
        %v2356 = vand.u32 %v2039, 4294901760
        %v2357 = vsub.f32 %v2039, %v2356
        %v2358 = vand.u32 %v2357, 4294901760
        %v2359 = vsub.f32 %v2357, %v2358
        %v2360 = vand.u32 %v2359, 4294901760
        %2361 = vmatpush1.msra.mxu0 %v2360
        %2362 = vmatprep.subr.mxu0 0.0
        %v2363 = vand.u32 %v2040, 4294901760
        %v2364 = vsub.f32 %v2040, %v2363
        %v2365 = vand.u32 %v2364, 4294901760
        %v2366 = vsub.f32 %v2364, %v2365
        %v2367 = vand.u32 %v2366, 4294901760
        %2368 = vmatpush1.msra.mxu0 %v2367
        %2369 = vmatprep.subr.mxu0 0.0
        %v2370 = vand.u32 %v2041, 4294901760
        %v2371 = vsub.f32 %v2041, %v2370
        %v2372 = vand.u32 %v2371, 4294901760
        %v2373 = vsub.f32 %v2371, %v2372
        %v2374 = vand.u32 %v2373, 4294901760
        %2375 = vmatpush1.msra.mxu0 %v2374
        %2376 = vmatprep.subr.mxu0 0.0
        %v2377 = vand.u32 %v2042, 4294901760
        %v2378 = vsub.f32 %v2042, %v2377
        %v2379 = vand.u32 %v2378, 4294901760
        %v2380 = vsub.f32 %v2378, %v2379
        %v2381 = vand.u32 %v2380, 4294901760
        %2382 = vmatpush1.msra.mxu0 %v2381
        %2383 = vmatprep.subr.mxu0 0.0
        %v2384 = vand.u32 %v2043, 4294901760
        %v2385 = vsub.f32 %v2043, %v2384
        %v2386 = vand.u32 %v2385, 4294901760
        %v2387 = vsub.f32 %v2385, %v2386
        %v2388 = vand.u32 %v2387, 4294901760
        %2389 = vmatpush1.msra.mxu0 %v2388
        %2390 = vmatprep.subr.mxu0 0.0
        %v2391 = vand.u32 %v2044, 4294901760
        %v2392 = vsub.f32 %v2044, %v2391
        %v2393 = vand.u32 %v2392, 4294901760
        %v2394 = vsub.f32 %v2392, %v2393
        %v2395 = vand.u32 %v2394, 4294901760
        %2396 = vmatpush1.msra.mxu0 %v2395
        %2397 = vmatprep.subr.mxu0 0.0
        %v2398 = vand.u32 %v2045, 4294901760
        %v2399 = vsub.f32 %v2045, %v2398
        %v2400 = vand.u32 %v2399, 4294901760
        %v2401 = vsub.f32 %v2399, %v2400
        %v2402 = vand.u32 %v2401, 4294901760
        %2403 = vmatpush1.msra.mxu0 %v2402
        %2404 = vmatprep.subr.mxu0 0.0
        %v2405 = vand.u32 %v2046, 4294901760
        %v2406 = vsub.f32 %v2046, %v2405
        %v2407 = vand.u32 %v2406, 4294901760
        %v2408 = vsub.f32 %v2406, %v2407
        %v2409 = vand.u32 %v2408, 4294901760
        %2410 = vmatpush1.msra.mxu0 %v2409
        %2411 = vmatprep.subr.mxu0 0.0
        %v2412 = vand.u32 %v2047, 4294901760
        %v2413 = vsub.f32 %v2047, %v2412
        %v2414 = vand.u32 %v2413, 4294901760
        %v2415 = vsub.f32 %v2413, %v2414
        %v2416 = vand.u32 %v2415, 4294901760
        %2417 = vmatpush1.msra.mxu0 %v2416
        %2418 = vmatprep.subr.mxu0 0.0
        %v2419 = vand.u32 %v2048, 4294901760
        %v2420 = vsub.f32 %v2048, %v2419
        %v2421 = vand.u32 %v2420, 4294901760
        %v2422 = vsub.f32 %v2420, %v2421
        %v2423 = vand.u32 %v2422, 4294901760
        %2424 = vmatpush1.msra.mxu0 %v2423
        %2425 = vmatprep.subr.mxu0 0.0
        %v2426 = vand.u32 %v2049, 4294901760
        %v2427 = vsub.f32 %v2049, %v2426
        %v2428 = vand.u32 %v2427, 4294901760
        %v2429 = vsub.f32 %v2427, %v2428
        %v2430 = vand.u32 %v2429, 4294901760
        %2431 = vmatpush1.msra.mxu0 %v2430
        %v2432 = vand.u32 %v2010, 4294901760
        %2433 = vmatprep.mubr.f32.mxu0 %v2432
        %v2434 = vand.u32 %v2009, 4294901760
        %2435 = vmatmul.mubr.f32.gmra.mrb[0].mxu0 %v2434
        %v2436 = vpop.f32.mrb[0].mxu0
        %v2437 = vadd.f32 %v2175, %v2436
        %v2438 = vpop.f32.mrb[0].mxu0
        %v2439 = vand.u32 %v2013, 4294901760
        %2440 = vmatprep.mubr.f32.mxu0 %v2439
        %v2441 = vand.u32 %v2012, 4294901760
        %2442 = vmatmul.mubr.f32.gmra.mrb[0].mxu0 %v2441
        %v2443 = vpop.f32.mrb[0].mxu0
        %v2444 = vadd.f32 %v2190, %v2443
        %v2445 = vpop.f32.mrb[0].mxu0
        %v2446 = vand.u32 %v2016, 4294901760
        %2447 = vmatprep.mubr.f32.mxu0 %v2446
        %v2448 = vand.u32 %v2015, 4294901760
        %2449 = vmatmul.mubr.f32.gmra.mrb[0].mxu0 %v2448
        %v2450 = vpop.f32.mrb[0].mxu0
        %v2451 = vadd.f32 %v2205, %v2450
        %v2452 = vpop.f32.mrb[0].mxu0
        %2453 = vdwg.mxu0
        %2454 = vmatprep.subr.mxu0 0.0
        %v2455 = vand.u32 %v2018, 4294901760
        %v2456 = vsub.f32 %v2018, %v2455
        %2457 = vmatpush1.msra.mxu0 %v2456
        %2458 = vmatprep.subr.mxu0 0.0
        %v2459 = vand.u32 %v2019, 4294901760
        %v2460 = vsub.f32 %v2019, %v2459
        %2461 = vmatpush1.msra.mxu0 %v2460
        %2462 = vmatprep.subr.mxu0 0.0
        %v2463 = vand.u32 %v2020, 4294901760
        %v2464 = vsub.f32 %v2020, %v2463
        %2465 = vmatpush1.msra.mxu0 %v2464
        %2466 = vmatprep.subr.mxu0 0.0
        %v2467 = vand.u32 %v2021, 4294901760
        %v2468 = vsub.f32 %v2021, %v2467
        %2469 = vmatpush1.msra.mxu0 %v2468
        %2470 = vmatprep.subr.mxu0 0.0
        %v2471 = vand.u32 %v2022, 4294901760
        %v2472 = vsub.f32 %v2022, %v2471
        %2473 = vmatpush1.msra.mxu0 %v2472
        %2474 = vmatprep.subr.mxu0 0.0
        %v2475 = vand.u32 %v2023, 4294901760
        %v2476 = vsub.f32 %v2023, %v2475
        %2477 = vmatpush1.msra.mxu0 %v2476
        %2478 = vmatprep.subr.mxu0 0.0
        %v2479 = vand.u32 %v2024, 4294901760
        %v2480 = vsub.f32 %v2024, %v2479
        %2481 = vmatpush1.msra.mxu0 %v2480
        %2482 = vmatprep.subr.mxu0 0.0
        %v2483 = vand.u32 %v2025, 4294901760
        %v2484 = vsub.f32 %v2025, %v2483
        %2485 = vmatpush1.msra.mxu0 %v2484
        %2486 = vmatprep.subr.mxu0 0.0
        %v2487 = vand.u32 %v2026, 4294901760
        %v2488 = vsub.f32 %v2026, %v2487
        %2489 = vmatpush1.msra.mxu0 %v2488
        %2490 = vmatprep.subr.mxu0 0.0
        %v2491 = vand.u32 %v2027, 4294901760
        %v2492 = vsub.f32 %v2027, %v2491
        %2493 = vmatpush1.msra.mxu0 %v2492
        %2494 = vmatprep.subr.mxu0 0.0
        %v2495 = vand.u32 %v2028, 4294901760
        %v2496 = vsub.f32 %v2028, %v2495
        %2497 = vmatpush1.msra.mxu0 %v2496
        %2498 = vmatprep.subr.mxu0 0.0
        %v2499 = vand.u32 %v2029, 4294901760
        %v2500 = vsub.f32 %v2029, %v2499
        %2501 = vmatpush1.msra.mxu0 %v2500
        %2502 = vmatprep.subr.mxu0 0.0
        %v2503 = vand.u32 %v2030, 4294901760
        %v2504 = vsub.f32 %v2030, %v2503
        %2505 = vmatpush1.msra.mxu0 %v2504
        %2506 = vmatprep.subr.mxu0 0.0
        %v2507 = vand.u32 %v2031, 4294901760
        %v2508 = vsub.f32 %v2031, %v2507
        %2509 = vmatpush1.msra.mxu0 %v2508
        %2510 = vmatprep.subr.mxu0 0.0
        %v2511 = vand.u32 %v2032, 4294901760
        %v2512 = vsub.f32 %v2032, %v2511
        %2513 = vmatpush1.msra.mxu0 %v2512
        %2514 = vmatprep.subr.mxu0 0.0
        %v2515 = vand.u32 %v2033, 4294901760
        %v2516 = vsub.f32 %v2033, %v2515
        %2517 = vmatpush1.msra.mxu0 %v2516
        %2518 = vmatprep.subr.mxu0 0.0
        %v2519 = vand.u32 %v2034, 4294901760
        %v2520 = vsub.f32 %v2034, %v2519
        %2521 = vmatpush1.msra.mxu0 %v2520
        %2522 = vmatprep.subr.mxu0 0.0
        %v2523 = vand.u32 %v2035, 4294901760
        %v2524 = vsub.f32 %v2035, %v2523
        %2525 = vmatpush1.msra.mxu0 %v2524
        %2526 = vmatprep.subr.mxu0 0.0
        %v2527 = vand.u32 %v2036, 4294901760
        %v2528 = vsub.f32 %v2036, %v2527
        %2529 = vmatpush1.msra.mxu0 %v2528
        %2530 = vmatprep.subr.mxu0 0.0
        %v2531 = vand.u32 %v2037, 4294901760
        %v2532 = vsub.f32 %v2037, %v2531
        %2533 = vmatpush1.msra.mxu0 %v2532
        %2534 = vmatprep.subr.mxu0 0.0
        %v2535 = vand.u32 %v2038, 4294901760
        %v2536 = vsub.f32 %v2038, %v2535
        %2537 = vmatpush1.msra.mxu0 %v2536
        %2538 = vmatprep.subr.mxu0 0.0
        %v2539 = vand.u32 %v2039, 4294901760
        %v2540 = vsub.f32 %v2039, %v2539
        %2541 = vmatpush1.msra.mxu0 %v2540
        %2542 = vmatprep.subr.mxu0 0.0
        %v2543 = vand.u32 %v2040, 4294901760
        %v2544 = vsub.f32 %v2040, %v2543
        %2545 = vmatpush1.msra.mxu0 %v2544
        %2546 = vmatprep.subr.mxu0 0.0
        %v2547 = vand.u32 %v2041, 4294901760
        %v2548 = vsub.f32 %v2041, %v2547
        %2549 = vmatpush1.msra.mxu0 %v2548
        %2550 = vmatprep.subr.mxu0 0.0
        %v2551 = vand.u32 %v2042, 4294901760
        %v2552 = vsub.f32 %v2042, %v2551
        %2553 = vmatpush1.msra.mxu0 %v2552
        %2554 = vmatprep.subr.mxu0 0.0
        %v2555 = vand.u32 %v2043, 4294901760
        %v2556 = vsub.f32 %v2043, %v2555
        %2557 = vmatpush1.msra.mxu0 %v2556
        %2558 = vmatprep.subr.mxu0 0.0
        %v2559 = vand.u32 %v2044, 4294901760
        %v2560 = vsub.f32 %v2044, %v2559
        %2561 = vmatpush1.msra.mxu0 %v2560
        %2562 = vmatprep.subr.mxu0 0.0
        %v2563 = vand.u32 %v2045, 4294901760
        %v2564 = vsub.f32 %v2045, %v2563
        %2565 = vmatpush1.msra.mxu0 %v2564
        %2566 = vmatprep.subr.mxu0 0.0
        %v2567 = vand.u32 %v2046, 4294901760
        %v2568 = vsub.f32 %v2046, %v2567
        %2569 = vmatpush1.msra.mxu0 %v2568
        %2570 = vmatprep.subr.mxu0 0.0
        %v2571 = vand.u32 %v2047, 4294901760
        %v2572 = vsub.f32 %v2047, %v2571
        %2573 = vmatpush1.msra.mxu0 %v2572
        %2574 = vmatprep.subr.mxu0 0.0
        %v2575 = vand.u32 %v2048, 4294901760
        %v2576 = vsub.f32 %v2048, %v2575
        %2577 = vmatpush1.msra.mxu0 %v2576
        %2578 = vmatprep.subr.mxu0 0.0
        %v2579 = vand.u32 %v2049, 4294901760
        %v2580 = vsub.f32 %v2049, %v2579
        %2581 = vmatpush1.msra.mxu0 %v2580
        %v2582 = vand.u32 %v2010, 4294901760
        %v2583 = vsub.f32 %v2010, %v2582
        %2584 = vmatprep.mubr.f32.mxu0 %v2583
        %v2585 = vand.u32 %v2009, 4294901760
        %v2586 = vsub.f32 %v2009, %v2585
        %2587 = vmatmul.mubr.f32.gmra.mrb[0].mxu0 %v2586
        %v2588 = vpop.f32.mrb[0].mxu0
        %v2589 = vadd.f32 %v2437, %v2588
        %v2590 = vpop.f32.mrb[0].mxu0
        %v2591 = vand.u32 %v2013, 4294901760
        %v2592 = vsub.f32 %v2013, %v2591
        %2593 = vmatprep.mubr.f32.mxu0 %v2592
        %v2594 = vand.u32 %v2012, 4294901760
        %v2595 = vsub.f32 %v2012, %v2594
        %2596 = vmatmul.mubr.f32.gmra.mrb[0].mxu0 %v2595
        %v2597 = vpop.f32.mrb[0].mxu0
        %v2598 = vadd.f32 %v2444, %v2597
        %v2599 = vpop.f32.mrb[0].mxu0
        %v2600 = vand.u32 %v2016, 4294901760
        %v2601 = vsub.f32 %v2016, %v2600
        %2602 = vmatprep.mubr.f32.mxu0 %v2601
        %v2603 = vand.u32 %v2015, 4294901760
        %v2604 = vsub.f32 %v2015, %v2603
        %2605 = vmatmul.mubr.f32.gmra.mrb[0].mxu0 %v2604
        %v2606 = vpop.f32.mrb[0].mxu0
        %v2607 = vadd.f32 %v2451, %v2606
        %v2608 = vpop.f32.mrb[0].mxu0
        %2609 = vdwg.mxu0
        %2610 = vmatprep.subr.mxu0 0.0
        %v2611 = vand.u32 %v2018, 4294901760
        %2612 = vmatpush1.msra.mxu0 %v2611
        %2613 = vmatprep.subr.mxu0 0.0
        %v2614 = vand.u32 %v2019, 4294901760
        %2615 = vmatpush1.msra.mxu0 %v2614
        %2616 = vmatprep.subr.mxu0 0.0
        %v2617 = vand.u32 %v2020, 4294901760
        %2618 = vmatpush1.msra.mxu0 %v2617
        %2619 = vmatprep.subr.mxu0 0.0
        %v2620 = vand.u32 %v2021, 4294901760
        %2621 = vmatpush1.msra.mxu0 %v2620
        %2622 = vmatprep.subr.mxu0 0.0
        %v2623 = vand.u32 %v2022, 4294901760
        %2624 = vmatpush1.msra.mxu0 %v2623
        %2625 = vmatprep.subr.mxu0 0.0
        %v2626 = vand.u32 %v2023, 4294901760
        %2627 = vmatpush1.msra.mxu0 %v2626
        %2628 = vmatprep.subr.mxu0 0.0
        %v2629 = vand.u32 %v2024, 4294901760
        %2630 = vmatpush1.msra.mxu0 %v2629
        %2631 = vmatprep.subr.mxu0 0.0
        %v2632 = vand.u32 %v2025, 4294901760
        %2633 = vmatpush1.msra.mxu0 %v2632
        %2634 = vmatprep.subr.mxu0 0.0
        %v2635 = vand.u32 %v2026, 4294901760
        %2636 = vmatpush1.msra.mxu0 %v2635
        %2637 = vmatprep.subr.mxu0 0.0
        %v2638 = vand.u32 %v2027, 4294901760
        %2639 = vmatpush1.msra.mxu0 %v2638
        %2640 = vmatprep.subr.mxu0 0.0
        %v2641 = vand.u32 %v2028, 4294901760
        %2642 = vmatpush1.msra.mxu0 %v2641
        %2643 = vmatprep.subr.mxu0 0.0
        %v2644 = vand.u32 %v2029, 4294901760
        %2645 = vmatpush1.msra.mxu0 %v2644
        %2646 = vmatprep.subr.mxu0 0.0
        %v2647 = vand.u32 %v2030, 4294901760
        %2648 = vmatpush1.msra.mxu0 %v2647
        %2649 = vmatprep.subr.mxu0 0.0
        %v2650 = vand.u32 %v2031, 4294901760
        %2651 = vmatpush1.msra.mxu0 %v2650
        %2652 = vmatprep.subr.mxu0 0.0
        %v2653 = vand.u32 %v2032, 4294901760
        %2654 = vmatpush1.msra.mxu0 %v2653
        %2655 = vmatprep.subr.mxu0 0.0
        %v2656 = vand.u32 %v2033, 4294901760
        %2657 = vmatpush1.msra.mxu0 %v2656
        %2658 = vmatprep.subr.mxu0 0.0
        %v2659 = vand.u32 %v2034, 4294901760
        %2660 = vmatpush1.msra.mxu0 %v2659
        %2661 = vmatprep.subr.mxu0 0.0
        %v2662 = vand.u32 %v2035, 4294901760
        %2663 = vmatpush1.msra.mxu0 %v2662
        %2664 = vmatprep.subr.mxu0 0.0
        %v2665 = vand.u32 %v2036, 4294901760
        %2666 = vmatpush1.msra.mxu0 %v2665
        %2667 = vmatprep.subr.mxu0 0.0
        %v2668 = vand.u32 %v2037, 4294901760
        %2669 = vmatpush1.msra.mxu0 %v2668
        %2670 = vmatprep.subr.mxu0 0.0
        %v2671 = vand.u32 %v2038, 4294901760
        %2672 = vmatpush1.msra.mxu0 %v2671
        %2673 = vmatprep.subr.mxu0 0.0
        %v2674 = vand.u32 %v2039, 4294901760
        %2675 = vmatpush1.msra.mxu0 %v2674
        %2676 = vmatprep.subr.mxu0 0.0
        %v2677 = vand.u32 %v2040, 4294901760
        %2678 = vmatpush1.msra.mxu0 %v2677
        %2679 = vmatprep.subr.mxu0 0.0
        %v2680 = vand.u32 %v2041, 4294901760
        %2681 = vmatpush1.msra.mxu0 %v2680
        %2682 = vmatprep.subr.mxu0 0.0
        %v2683 = vand.u32 %v2042, 4294901760
        %2684 = vmatpush1.msra.mxu0 %v2683
        %2685 = vmatprep.subr.mxu0 0.0
        %v2686 = vand.u32 %v2043, 4294901760
        %2687 = vmatpush1.msra.mxu0 %v2686
        %2688 = vmatprep.subr.mxu0 0.0
        %v2689 = vand.u32 %v2044, 4294901760
        %2690 = vmatpush1.msra.mxu0 %v2689
        %2691 = vmatprep.subr.mxu0 0.0
        %v2692 = vand.u32 %v2045, 4294901760
        %2693 = vmatpush1.msra.mxu0 %v2692
        %2694 = vmatprep.subr.mxu0 0.0
        %v2695 = vand.u32 %v2046, 4294901760
        %2696 = vmatpush1.msra.mxu0 %v2695
        %2697 = vmatprep.subr.mxu0 0.0
        %v2698 = vand.u32 %v2047, 4294901760
        %2699 = vmatpush1.msra.mxu0 %v2698
        %2700 = vmatprep.subr.mxu0 0.0
        %v2701 = vand.u32 %v2048, 4294901760
        %2702 = vmatpush1.msra.mxu0 %v2701
        %2703 = vmatprep.subr.mxu0 0.0
        %v2704 = vand.u32 %v2049, 4294901760
        %2705 = vmatpush1.msra.mxu0 %v2704
        %v2706 = vand.u32 %v2010, 4294901760
        %v2707 = vsub.f32 %v2010, %v2706
        %v2708 = vand.u32 %v2707, 4294901760
        %2709 = vmatprep.mubr.f32.mxu0 %v2708
        %v2710 = vand.u32 %v2009, 4294901760
        %v2711 = vsub.f32 %v2009, %v2710
        %v2712 = vand.u32 %v2711, 4294901760
        %2713 = vmatmul.mubr.f32.gmra.mrb[0].mxu0 %v2712
        %v2714 = vpop.f32.mrb[0].mxu0
        %v2715 = vadd.f32 %v2589, %v2714
        %v2716 = vpop.f32.mrb[0].mxu0
        %v2717 = vand.u32 %v2013, 4294901760
        %v2718 = vsub.f32 %v2013, %v2717
        %v2719 = vand.u32 %v2718, 4294901760
        %2720 = vmatprep.mubr.f32.mxu0 %v2719
        %v2721 = vand.u32 %v2012, 4294901760
        %v2722 = vsub.f32 %v2012, %v2721
        %v2723 = vand.u32 %v2722, 4294901760
        %2724 = vmatmul.mubr.f32.gmra.mrb[0].mxu0 %v2723
        %v2725 = vpop.f32.mrb[0].mxu0
        %v2726 = vadd.f32 %v2598, %v2725
        %v2727 = vpop.f32.mrb[0].mxu0
        %v2728 = vand.u32 %v2016, 4294901760
        %v2729 = vsub.f32 %v2016, %v2728
        %v2730 = vand.u32 %v2729, 4294901760
        %2731 = vmatprep.mubr.f32.mxu0 %v2730
        %v2732 = vand.u32 %v2015, 4294901760
        %v2733 = vsub.f32 %v2015, %v2732
        %v2734 = vand.u32 %v2733, 4294901760
        %2735 = vmatmul.mubr.f32.gmra.mrb[0].mxu0 %v2734
        %v2736 = vpop.f32.mrb[0].mxu0
        %v2737 = vadd.f32 %v2607, %v2736
        %v2738 = vpop.f32.mrb[0].mxu0
        %2739 = vdwg.mxu0
        %2740 = vmatprep.subr.mxu0 0.0
        %v2741 = vand.u32 %v2018, 4294901760
        %v2742 = vsub.f32 %v2018, %v2741
        %v2743 = vand.u32 %v2742, 4294901760
        %2744 = vmatpush1.msra.mxu0 %v2743
        %2745 = vmatprep.subr.mxu0 0.0
        %v2746 = vand.u32 %v2019, 4294901760
        %v2747 = vsub.f32 %v2019, %v2746
        %v2748 = vand.u32 %v2747, 4294901760
        %2749 = vmatpush1.msra.mxu0 %v2748
        %2750 = vmatprep.subr.mxu0 0.0
        %v2751 = vand.u32 %v2020, 4294901760
        %v2752 = vsub.f32 %v2020, %v2751
        %v2753 = vand.u32 %v2752, 4294901760
        %2754 = vmatpush1.msra.mxu0 %v2753
        %2755 = vmatprep.subr.mxu0 0.0
        %v2756 = vand.u32 %v2021, 4294901760
        %v2757 = vsub.f32 %v2021, %v2756
        %v2758 = vand.u32 %v2757, 4294901760
        %2759 = vmatpush1.msra.mxu0 %v2758
        %2760 = vmatprep.subr.mxu0 0.0
        %v2761 = vand.u32 %v2022, 4294901760
        %v2762 = vsub.f32 %v2022, %v2761
        %v2763 = vand.u32 %v2762, 4294901760
        %2764 = vmatpush1.msra.mxu0 %v2763
        %2765 = vmatprep.subr.mxu0 0.0
        %v2766 = vand.u32 %v2023, 4294901760
        %v2767 = vsub.f32 %v2023, %v2766
        %v2768 = vand.u32 %v2767, 4294901760
        %2769 = vmatpush1.msra.mxu0 %v2768
        %2770 = vmatprep.subr.mxu0 0.0
        %v2771 = vand.u32 %v2024, 4294901760
        %v2772 = vsub.f32 %v2024, %v2771
        %v2773 = vand.u32 %v2772, 4294901760
        %2774 = vmatpush1.msra.mxu0 %v2773
        %2775 = vmatprep.subr.mxu0 0.0
        %v2776 = vand.u32 %v2025, 4294901760
        %v2777 = vsub.f32 %v2025, %v2776
        %v2778 = vand.u32 %v2777, 4294901760
        %2779 = vmatpush1.msra.mxu0 %v2778
        %2780 = vmatprep.subr.mxu0 0.0
        %v2781 = vand.u32 %v2026, 4294901760
        %v2782 = vsub.f32 %v2026, %v2781
        %v2783 = vand.u32 %v2782, 4294901760
        %2784 = vmatpush1.msra.mxu0 %v2783
        %2785 = vmatprep.subr.mxu0 0.0
        %v2786 = vand.u32 %v2027, 4294901760
        %v2787 = vsub.f32 %v2027, %v2786
        %v2788 = vand.u32 %v2787, 4294901760
        %2789 = vmatpush1.msra.mxu0 %v2788
        %2790 = vmatprep.subr.mxu0 0.0
        %v2791 = vand.u32 %v2028, 4294901760
        %v2792 = vsub.f32 %v2028, %v2791
        %v2793 = vand.u32 %v2792, 4294901760
        %2794 = vmatpush1.msra.mxu0 %v2793
        %2795 = vmatprep.subr.mxu0 0.0
        %v2796 = vand.u32 %v2029, 4294901760
        %v2797 = vsub.f32 %v2029, %v2796
        %v2798 = vand.u32 %v2797, 4294901760
        %2799 = vmatpush1.msra.mxu0 %v2798
        %2800 = vmatprep.subr.mxu0 0.0
        %v2801 = vand.u32 %v2030, 4294901760
        %v2802 = vsub.f32 %v2030, %v2801
        %v2803 = vand.u32 %v2802, 4294901760
        %2804 = vmatpush1.msra.mxu0 %v2803
        %2805 = vmatprep.subr.mxu0 0.0
        %v2806 = vand.u32 %v2031, 4294901760
        %v2807 = vsub.f32 %v2031, %v2806
        %v2808 = vand.u32 %v2807, 4294901760
        %2809 = vmatpush1.msra.mxu0 %v2808
        %2810 = vmatprep.subr.mxu0 0.0
        %v2811 = vand.u32 %v2032, 4294901760
        %v2812 = vsub.f32 %v2032, %v2811
        %v2813 = vand.u32 %v2812, 4294901760
        %2814 = vmatpush1.msra.mxu0 %v2813
        %2815 = vmatprep.subr.mxu0 0.0
        %v2816 = vand.u32 %v2033, 4294901760
        %v2817 = vsub.f32 %v2033, %v2816
        %v2818 = vand.u32 %v2817, 4294901760
        %2819 = vmatpush1.msra.mxu0 %v2818
        %2820 = vmatprep.subr.mxu0 0.0
        %v2821 = vand.u32 %v2034, 4294901760
        %v2822 = vsub.f32 %v2034, %v2821
        %v2823 = vand.u32 %v2822, 4294901760
        %2824 = vmatpush1.msra.mxu0 %v2823
        %2825 = vmatprep.subr.mxu0 0.0
        %v2826 = vand.u32 %v2035, 4294901760
        %v2827 = vsub.f32 %v2035, %v2826
        %v2828 = vand.u32 %v2827, 4294901760
        %2829 = vmatpush1.msra.mxu0 %v2828
        %2830 = vmatprep.subr.mxu0 0.0
        %v2831 = vand.u32 %v2036, 4294901760
        %v2832 = vsub.f32 %v2036, %v2831
        %v2833 = vand.u32 %v2832, 4294901760
        %2834 = vmatpush1.msra.mxu0 %v2833
        %2835 = vmatprep.subr.mxu0 0.0
        %v2836 = vand.u32 %v2037, 4294901760
        %v2837 = vsub.f32 %v2037, %v2836
        %v2838 = vand.u32 %v2837, 4294901760
        %2839 = vmatpush1.msra.mxu0 %v2838
        %2840 = vmatprep.subr.mxu0 0.0
        %v2841 = vand.u32 %v2038, 4294901760
        %v2842 = vsub.f32 %v2038, %v2841
        %v2843 = vand.u32 %v2842, 4294901760
        %2844 = vmatpush1.msra.mxu0 %v2843
        %2845 = vmatprep.subr.mxu0 0.0
        %v2846 = vand.u32 %v2039, 4294901760
        %v2847 = vsub.f32 %v2039, %v2846
        %v2848 = vand.u32 %v2847, 4294901760
        %2849 = vmatpush1.msra.mxu0 %v2848
        %2850 = vmatprep.subr.mxu0 0.0
        %v2851 = vand.u32 %v2040, 4294901760
        %v2852 = vsub.f32 %v2040, %v2851
        %v2853 = vand.u32 %v2852, 4294901760
        %2854 = vmatpush1.msra.mxu0 %v2853
        %2855 = vmatprep.subr.mxu0 0.0
        %v2856 = vand.u32 %v2041, 4294901760
        %v2857 = vsub.f32 %v2041, %v2856
        %v2858 = vand.u32 %v2857, 4294901760
        %2859 = vmatpush1.msra.mxu0 %v2858
        %2860 = vmatprep.subr.mxu0 0.0
        %v2861 = vand.u32 %v2042, 4294901760
        %v2862 = vsub.f32 %v2042, %v2861
        %v2863 = vand.u32 %v2862, 4294901760
        %2864 = vmatpush1.msra.mxu0 %v2863
        %2865 = vmatprep.subr.mxu0 0.0
        %v2866 = vand.u32 %v2043, 4294901760
        %v2867 = vsub.f32 %v2043, %v2866
        %v2868 = vand.u32 %v2867, 4294901760
        %2869 = vmatpush1.msra.mxu0 %v2868
        %2870 = vmatprep.subr.mxu0 0.0
        %v2871 = vand.u32 %v2044, 4294901760
        %v2872 = vsub.f32 %v2044, %v2871
        %v2873 = vand.u32 %v2872, 4294901760
        %2874 = vmatpush1.msra.mxu0 %v2873
        %2875 = vmatprep.subr.mxu0 0.0
        %v2876 = vand.u32 %v2045, 4294901760
        %v2877 = vsub.f32 %v2045, %v2876
        %v2878 = vand.u32 %v2877, 4294901760
        %2879 = vmatpush1.msra.mxu0 %v2878
        %2880 = vmatprep.subr.mxu0 0.0
        %v2881 = vand.u32 %v2046, 4294901760
        %v2882 = vsub.f32 %v2046, %v2881
        %v2883 = vand.u32 %v2882, 4294901760
        %2884 = vmatpush1.msra.mxu0 %v2883
        %2885 = vmatprep.subr.mxu0 0.0
        %v2886 = vand.u32 %v2047, 4294901760
        %v2887 = vsub.f32 %v2047, %v2886
        %v2888 = vand.u32 %v2887, 4294901760
        %2889 = vmatpush1.msra.mxu0 %v2888
        %2890 = vmatprep.subr.mxu0 0.0
        %v2891 = vand.u32 %v2048, 4294901760
        %v2892 = vsub.f32 %v2048, %v2891
        %v2893 = vand.u32 %v2892, 4294901760
        %2894 = vmatpush1.msra.mxu0 %v2893
        %2895 = vmatprep.subr.mxu0 0.0
        %v2896 = vand.u32 %v2049, 4294901760
        %v2897 = vsub.f32 %v2049, %v2896
        %v2898 = vand.u32 %v2897, 4294901760
        %2899 = vmatpush1.msra.mxu0 %v2898
        %v2900 = vand.u32 %v2010, 4294901760
        %2901 = vmatprep.mubr.f32.mxu0 %v2900
        %v2902 = vand.u32 %v2009, 4294901760
        %2903 = vmatmul.mubr.f32.gmra.mrb[0].mxu0 %v2902
        %v2904 = vpop.f32.mrb[0].mxu0
        %v2905 = vadd.f32 %v2715, %v2904
        %v2906 = vpop.f32.mrb[0].mxu0
        %v2907 = vand.u32 %v2013, 4294901760
        %2908 = vmatprep.mubr.f32.mxu0 %v2907
        %v2909 = vand.u32 %v2012, 4294901760
        %2910 = vmatmul.mubr.f32.gmra.mrb[0].mxu0 %v2909
        %v2911 = vpop.f32.mrb[0].mxu0
        %v2912 = vadd.f32 %v2726, %v2911
        %v2913 = vpop.f32.mrb[0].mxu0
        %v2914 = vand.u32 %v2016, 4294901760
        %2915 = vmatprep.mubr.f32.mxu0 %v2914
        %v2916 = vand.u32 %v2015, 4294901760
        %2917 = vmatmul.mubr.f32.gmra.mrb[0].mxu0 %v2916
        %v2918 = vpop.f32.mrb[0].mxu0
        %v2919 = vadd.f32 %v2737, %v2918
        %v2920 = vpop.f32.mrb[0].mxu0
        %2921 = vdwg.mxu0
        %2922 = vmatprep.subr.mxu0 0.0
        %v2923 = vand.u32 %v2018, 4294901760
        %2924 = vmatpush1.msra.mxu0 %v2923
        %2925 = vmatprep.subr.mxu0 0.0
        %v2926 = vand.u32 %v2019, 4294901760
        %2927 = vmatpush1.msra.mxu0 %v2926
        %2928 = vmatprep.subr.mxu0 0.0
        %v2929 = vand.u32 %v2020, 4294901760
        %2930 = vmatpush1.msra.mxu0 %v2929
        %2931 = vmatprep.subr.mxu0 0.0
        %v2932 = vand.u32 %v2021, 4294901760
        %2933 = vmatpush1.msra.mxu0 %v2932
        %2934 = vmatprep.subr.mxu0 0.0
        %v2935 = vand.u32 %v2022, 4294901760
        %2936 = vmatpush1.msra.mxu0 %v2935
        %2937 = vmatprep.subr.mxu0 0.0
        %v2938 = vand.u32 %v2023, 4294901760
        %2939 = vmatpush1.msra.mxu0 %v2938
        %2940 = vmatprep.subr.mxu0 0.0
        %v2941 = vand.u32 %v2024, 4294901760
        %2942 = vmatpush1.msra.mxu0 %v2941
        %2943 = vmatprep.subr.mxu0 0.0
        %v2944 = vand.u32 %v2025, 4294901760
        %2945 = vmatpush1.msra.mxu0 %v2944
        %2946 = vmatprep.subr.mxu0 0.0
        %v2947 = vand.u32 %v2026, 4294901760
        %2948 = vmatpush1.msra.mxu0 %v2947
        %2949 = vmatprep.subr.mxu0 0.0
        %v2950 = vand.u32 %v2027, 4294901760
        %2951 = vmatpush1.msra.mxu0 %v2950
        %2952 = vmatprep.subr.mxu0 0.0
        %v2953 = vand.u32 %v2028, 4294901760
        %2954 = vmatpush1.msra.mxu0 %v2953
        %2955 = vmatprep.subr.mxu0 0.0
        %v2956 = vand.u32 %v2029, 4294901760
        %2957 = vmatpush1.msra.mxu0 %v2956
        %2958 = vmatprep.subr.mxu0 0.0
        %v2959 = vand.u32 %v2030, 4294901760
        %2960 = vmatpush1.msra.mxu0 %v2959
        %2961 = vmatprep.subr.mxu0 0.0
        %v2962 = vand.u32 %v2031, 4294901760
        %2963 = vmatpush1.msra.mxu0 %v2962
        %2964 = vmatprep.subr.mxu0 0.0
        %v2965 = vand.u32 %v2032, 4294901760
        %2966 = vmatpush1.msra.mxu0 %v2965
        %2967 = vmatprep.subr.mxu0 0.0
        %v2968 = vand.u32 %v2033, 4294901760
        %2969 = vmatpush1.msra.mxu0 %v2968
        %2970 = vmatprep.subr.mxu0 0.0
        %v2971 = vand.u32 %v2034, 4294901760
        %2972 = vmatpush1.msra.mxu0 %v2971
        %2973 = vmatprep.subr.mxu0 0.0
        %v2974 = vand.u32 %v2035, 4294901760
        %2975 = vmatpush1.msra.mxu0 %v2974
        %2976 = vmatprep.subr.mxu0 0.0
        %v2977 = vand.u32 %v2036, 4294901760
        %2978 = vmatpush1.msra.mxu0 %v2977
        %2979 = vmatprep.subr.mxu0 0.0
        %v2980 = vand.u32 %v2037, 4294901760
        %2981 = vmatpush1.msra.mxu0 %v2980
        %2982 = vmatprep.subr.mxu0 0.0
        %v2983 = vand.u32 %v2038, 4294901760
        %2984 = vmatpush1.msra.mxu0 %v2983
        %2985 = vmatprep.subr.mxu0 0.0
        %v2986 = vand.u32 %v2039, 4294901760
        %2987 = vmatpush1.msra.mxu0 %v2986
        %2988 = vmatprep.subr.mxu0 0.0
        %v2989 = vand.u32 %v2040, 4294901760
        %2990 = vmatpush1.msra.mxu0 %v2989
        %2991 = vmatprep.subr.mxu0 0.0
        %v2992 = vand.u32 %v2041, 4294901760
        %2993 = vmatpush1.msra.mxu0 %v2992
        %2994 = vmatprep.subr.mxu0 0.0
        %v2995 = vand.u32 %v2042, 4294901760
        %2996 = vmatpush1.msra.mxu0 %v2995
        %2997 = vmatprep.subr.mxu0 0.0
        %v2998 = vand.u32 %v2043, 4294901760
        %2999 = vmatpush1.msra.mxu0 %v2998
        %3000 = vmatprep.subr.mxu0 0.0
        %v3001 = vand.u32 %v2044, 4294901760
        %3002 = vmatpush1.msra.mxu0 %v3001
        %3003 = vmatprep.subr.mxu0 0.0
        %v3004 = vand.u32 %v2045, 4294901760
        %3005 = vmatpush1.msra.mxu0 %v3004
        %3006 = vmatprep.subr.mxu0 0.0
        %v3007 = vand.u32 %v2046, 4294901760
        %3008 = vmatpush1.msra.mxu0 %v3007
        %3009 = vmatprep.subr.mxu0 0.0
        %v3010 = vand.u32 %v2047, 4294901760
        %3011 = vmatpush1.msra.mxu0 %v3010
        %3012 = vmatprep.subr.mxu0 0.0
        %v3013 = vand.u32 %v2048, 4294901760
        %3014 = vmatpush1.msra.mxu0 %v3013
        %3015 = vmatprep.subr.mxu0 0.0
        %v3016 = vand.u32 %v2049, 4294901760
        %3017 = vmatpush1.msra.mxu0 %v3016
        %v3018 = vand.u32 %v2010, 4294901760
        %3019 = vmatprep.mubr.f32.mxu0 %v3018
        %v3020 = vand.u32 %v2009, 4294901760
        %3021 = vmatmul.mubr.f32.gmra.mrb[0].mxu0 %v3020
        %v3022 = vpop.f32.mrb[0].mxu0
        %v3023 = vadd.f32 %v2905, %v3022
        %v3024 = vpop.f32.mrb[0].mxu0
        %v3025 = vand.u32 %v2013, 4294901760
        %3026 = vmatprep.mubr.f32.mxu0 %v3025
        %v3027 = vand.u32 %v2012, 4294901760
        %3028 = vmatmul.mubr.f32.gmra.mrb[0].mxu0 %v3027
        %v3029 = vpop.f32.mrb[0].mxu0
        %v3030 = vadd.f32 %v2912, %v3029
        %v3031 = vpop.f32.mrb[0].mxu0
        %v3032 = vand.u32 %v2016, 4294901760
        %3033 = vmatprep.mubr.f32.mxu0 %v3032
        %v3034 = vand.u32 %v2015, 4294901760
        %3035 = vmatmul.mubr.f32.gmra.mrb[0].mxu0 %v3034
        %v3036 = vpop.f32.mrb[0].mxu0
        %v3037 = vadd.f32 %v2919, %v3036
        %v3038 = vpop.f32.mrb[0].mxu0
        %3039 = vdwg.mxu0
        %3040 = vmatprep.subr.mxu0 0.0
        %v3041 = vand.u32 %v2050, 4294901760
        %3042 = vmatpush1.msra.mxu0 %v3041
        %3043 = vmatprep.subr.mxu0 0.0
        %v3044 = vand.u32 %v2051, 4294901760
        %3045 = vmatpush1.msra.mxu0 %v3044
        %3046 = vmatprep.subr.mxu0 0.0
        %v3047 = vand.u32 %v2052, 4294901760
        %3048 = vmatpush1.msra.mxu0 %v3047
        %3049 = vmatprep.subr.mxu0 0.0
        %v3050 = vand.u32 %v2053, 4294901760
        %3051 = vmatpush1.msra.mxu0 %v3050
        %3052 = vmatprep.subr.mxu0 0.0
        %v3053 = vand.u32 %v2054, 4294901760
        %3054 = vmatpush1.msra.mxu0 %v3053
        %3055 = vmatprep.subr.mxu0 0.0
        %v3056 = vand.u32 %v2055, 4294901760
        %3057 = vmatpush1.msra.mxu0 %v3056
        %3058 = vmatprep.subr.mxu0 0.0
        %v3059 = vand.u32 %v2056, 4294901760
        %3060 = vmatpush1.msra.mxu0 %v3059
        %3061 = vmatprep.subr.mxu0 0.0
        %v3062 = vand.u32 %v2057, 4294901760
        %3063 = vmatpush1.msra.mxu0 %v3062
        %3064 = vmatprep.subr.mxu0 0.0
        %v3065 = vand.u32 %v2058, 4294901760
        %3066 = vmatpush1.msra.mxu0 %v3065
        %3067 = vmatprep.subr.mxu0 0.0
        %v3068 = vand.u32 %v2059, 4294901760
        %3069 = vmatpush1.msra.mxu0 %v3068
        %3070 = vmatprep.subr.mxu0 0.0
        %v3071 = vand.u32 %v2060, 4294901760
        %3072 = vmatpush1.msra.mxu0 %v3071
        %3073 = vmatprep.subr.mxu0 0.0
        %v3074 = vand.u32 %v2061, 4294901760
        %3075 = vmatpush1.msra.mxu0 %v3074
        %3076 = vmatprep.subr.mxu0 0.0
        %v3077 = vand.u32 %v2062, 4294901760
        %3078 = vmatpush1.msra.mxu0 %v3077
        %3079 = vmatprep.subr.mxu0 0.0
        %v3080 = vand.u32 %v2063, 4294901760
        %3081 = vmatpush1.msra.mxu0 %v3080
        %3082 = vmatprep.subr.mxu0 0.0
        %v3083 = vand.u32 %v2064, 4294901760
        %3084 = vmatpush1.msra.mxu0 %v3083
        %3085 = vmatprep.subr.mxu0 0.0
        %v3086 = vand.u32 %v2065, 4294901760
        %3087 = vmatpush1.msra.mxu0 %v3086
        %3088 = vmatprep.subr.mxu0 0.0
        %3089 = vmatpush1.msra.mxu0 0.0
        %3090 = vmatprep.subr.mxu0 0.0
        %3091 = vmatpush1.msra.mxu0 0.0
        %3092 = vmatprep.subr.mxu0 0.0
        %3093 = vmatpush1.msra.mxu0 0.0
        %3094 = vmatprep.subr.mxu0 0.0
        %3095 = vmatpush1.msra.mxu0 0.0
        %3096 = vmatprep.subr.mxu0 0.0
        %3097 = vmatpush1.msra.mxu0 0.0
        %3098 = vmatprep.subr.mxu0 0.0
        %3099 = vmatpush1.msra.mxu0 0.0
        %3100 = vmatprep.subr.mxu0 0.0
        %3101 = vmatpush1.msra.mxu0 0.0
        %3102 = vmatprep.subr.mxu0 0.0
        %3103 = vmatpush1.msra.mxu0 0.0
        %3104 = vmatprep.subr.mxu0 0.0
        %3105 = vmatpush1.msra.mxu0 0.0
        %3106 = vmatprep.subr.mxu0 0.0
        %3107 = vmatpush1.msra.mxu0 0.0
        %3108 = vmatprep.subr.mxu0 0.0
        %3109 = vmatpush1.msra.mxu0 0.0
        %3110 = vmatprep.subr.mxu0 0.0
        %3111 = vmatpush1.msra.mxu0 0.0
        %3112 = vmatprep.subr.mxu0 0.0
        %3113 = vmatpush1.msra.mxu0 0.0
        %3114 = vmatprep.subr.mxu0 0.0
        %3115 = vmatpush1.msra.mxu0 0.0
        %3116 = vmatprep.subr.mxu0 0.0
        %3117 = vmatpush1.msra.mxu0 0.0
        %3118 = vmatprep.subr.mxu0 0.0
        %3119 = vmatpush1.msra.mxu0 0.0
        %3120 = vmatprep.mubr.f32.mxu0 0.0
        %v3121 = vand.u32 %v2011, 4294901760
        %v3122 = vsub.f32 %v2011, %v3121
        %v3123 = vand.u32 %v3122, 4294901760
        %v3124 = vsub.f32 %v3122, %v3123
        %v3125 = vand.u32 %v3124, 4294901760
        %3126 = vmatmul.mubr.f32.gmra.mrb[0].mxu0 %v3125
        %v3127 = vpop.f32.mrb[0].mxu0
        %v3128 = vadd.f32 %v3023, %v3127
        %v3129 = vpop.f32.mrb[0].mxu0
        %3130 = vmatprep.mubr.f32.mxu0 0.0
        %v3131 = vand.u32 %v2014, 4294901760
        %v3132 = vsub.f32 %v2014, %v3131
        %v3133 = vand.u32 %v3132, 4294901760
        %v3134 = vsub.f32 %v3132, %v3133
        %v3135 = vand.u32 %v3134, 4294901760
        %3136 = vmatmul.mubr.f32.gmra.mrb[0].mxu0 %v3135
        %v3137 = vpop.f32.mrb[0].mxu0
        %v3138 = vadd.f32 %v3030, %v3137
        %v3139 = vpop.f32.mrb[0].mxu0
        %3140 = vmatprep.mubr.f32.mxu0 0.0
        %v3141 = vand.u32 %v2017, 4294901760
        %v3142 = vsub.f32 %v2017, %v3141
        %v3143 = vand.u32 %v3142, 4294901760
        %v3144 = vsub.f32 %v3142, %v3143
        %v3145 = vand.u32 %v3144, 4294901760
        %3146 = vmatmul.mubr.f32.gmra.mrb[0].mxu0 %v3145
        %v3147 = vpop.f32.mrb[0].mxu0
        %v3148 = vadd.f32 %v3037, %v3147
        %v3149 = vpop.f32.mrb[0].mxu0
        %3150 = vdwg.mxu0
        %3151 = vmatprep.subr.mxu0 0.0
        %v3152 = vand.u32 %v2050, 4294901760
        %v3153 = vsub.f32 %v2050, %v3152
        %v3154 = vand.u32 %v3153, 4294901760
        %v3155 = vsub.f32 %v3153, %v3154
        %v3156 = vand.u32 %v3155, 4294901760
        %3157 = vmatpush1.msra.mxu0 %v3156
        %3158 = vmatprep.subr.mxu0 0.0
        %v3159 = vand.u32 %v2051, 4294901760
        %v3160 = vsub.f32 %v2051, %v3159
        %v3161 = vand.u32 %v3160, 4294901760
        %v3162 = vsub.f32 %v3160, %v3161
        %v3163 = vand.u32 %v3162, 4294901760
        %3164 = vmatpush1.msra.mxu0 %v3163
        %3165 = vmatprep.subr.mxu0 0.0
        %v3166 = vand.u32 %v2052, 4294901760
        %v3167 = vsub.f32 %v2052, %v3166
        %v3168 = vand.u32 %v3167, 4294901760
        %v3169 = vsub.f32 %v3167, %v3168
        %v3170 = vand.u32 %v3169, 4294901760
        %3171 = vmatpush1.msra.mxu0 %v3170
        %3172 = vmatprep.subr.mxu0 0.0
        %v3173 = vand.u32 %v2053, 4294901760
        %v3174 = vsub.f32 %v2053, %v3173
        %v3175 = vand.u32 %v3174, 4294901760
        %v3176 = vsub.f32 %v3174, %v3175
        %v3177 = vand.u32 %v3176, 4294901760
        %3178 = vmatpush1.msra.mxu0 %v3177
        %3179 = vmatprep.subr.mxu0 0.0
        %v3180 = vand.u32 %v2054, 4294901760
        %v3181 = vsub.f32 %v2054, %v3180
        %v3182 = vand.u32 %v3181, 4294901760
        %v3183 = vsub.f32 %v3181, %v3182
        %v3184 = vand.u32 %v3183, 4294901760
        %3185 = vmatpush1.msra.mxu0 %v3184
        %3186 = vmatprep.subr.mxu0 0.0
        %v3187 = vand.u32 %v2055, 4294901760
        %v3188 = vsub.f32 %v2055, %v3187
        %v3189 = vand.u32 %v3188, 4294901760
        %v3190 = vsub.f32 %v3188, %v3189
        %v3191 = vand.u32 %v3190, 4294901760
        %3192 = vmatpush1.msra.mxu0 %v3191
        %3193 = vmatprep.subr.mxu0 0.0
        %v3194 = vand.u32 %v2056, 4294901760
        %v3195 = vsub.f32 %v2056, %v3194
        %v3196 = vand.u32 %v3195, 4294901760
        %v3197 = vsub.f32 %v3195, %v3196
        %v3198 = vand.u32 %v3197, 4294901760
        %3199 = vmatpush1.msra.mxu0 %v3198
        %3200 = vmatprep.subr.mxu0 0.0
        %v3201 = vand.u32 %v2057, 4294901760
        %v3202 = vsub.f32 %v2057, %v3201
        %v3203 = vand.u32 %v3202, 4294901760
        %v3204 = vsub.f32 %v3202, %v3203
        %v3205 = vand.u32 %v3204, 4294901760
        %3206 = vmatpush1.msra.mxu0 %v3205
        %3207 = vmatprep.subr.mxu0 0.0
        %v3208 = vand.u32 %v2058, 4294901760
        %v3209 = vsub.f32 %v2058, %v3208
        %v3210 = vand.u32 %v3209, 4294901760
        %v3211 = vsub.f32 %v3209, %v3210
        %v3212 = vand.u32 %v3211, 4294901760
        %3213 = vmatpush1.msra.mxu0 %v3212
        %3214 = vmatprep.subr.mxu0 0.0
        %v3215 = vand.u32 %v2059, 4294901760
        %v3216 = vsub.f32 %v2059, %v3215
        %v3217 = vand.u32 %v3216, 4294901760
        %v3218 = vsub.f32 %v3216, %v3217
        %v3219 = vand.u32 %v3218, 4294901760
        %3220 = vmatpush1.msra.mxu0 %v3219
        %3221 = vmatprep.subr.mxu0 0.0
        %v3222 = vand.u32 %v2060, 4294901760
        %v3223 = vsub.f32 %v2060, %v3222
        %v3224 = vand.u32 %v3223, 4294901760
        %v3225 = vsub.f32 %v3223, %v3224
        %v3226 = vand.u32 %v3225, 4294901760
        %3227 = vmatpush1.msra.mxu0 %v3226
        %3228 = vmatprep.subr.mxu0 0.0
        %v3229 = vand.u32 %v2061, 4294901760
        %v3230 = vsub.f32 %v2061, %v3229
        %v3231 = vand.u32 %v3230, 4294901760
        %v3232 = vsub.f32 %v3230, %v3231
        %v3233 = vand.u32 %v3232, 4294901760
        %3234 = vmatpush1.msra.mxu0 %v3233
        %3235 = vmatprep.subr.mxu0 0.0
        %v3236 = vand.u32 %v2062, 4294901760
        %v3237 = vsub.f32 %v2062, %v3236
        %v3238 = vand.u32 %v3237, 4294901760
        %v3239 = vsub.f32 %v3237, %v3238
        %v3240 = vand.u32 %v3239, 4294901760
        %3241 = vmatpush1.msra.mxu0 %v3240
        %3242 = vmatprep.subr.mxu0 0.0
        %v3243 = vand.u32 %v2063, 4294901760
        %v3244 = vsub.f32 %v2063, %v3243
        %v3245 = vand.u32 %v3244, 4294901760
        %v3246 = vsub.f32 %v3244, %v3245
        %v3247 = vand.u32 %v3246, 4294901760
        %3248 = vmatpush1.msra.mxu0 %v3247
        %3249 = vmatprep.subr.mxu0 0.0
        %v3250 = vand.u32 %v2064, 4294901760
        %v3251 = vsub.f32 %v2064, %v3250
        %v3252 = vand.u32 %v3251, 4294901760
        %v3253 = vsub.f32 %v3251, %v3252
        %v3254 = vand.u32 %v3253, 4294901760
        %3255 = vmatpush1.msra.mxu0 %v3254
        %3256 = vmatprep.subr.mxu0 0.0
        %v3257 = vand.u32 %v2065, 4294901760
        %v3258 = vsub.f32 %v2065, %v3257
        %v3259 = vand.u32 %v3258, 4294901760
        %v3260 = vsub.f32 %v3258, %v3259
        %v3261 = vand.u32 %v3260, 4294901760
        %3262 = vmatpush1.msra.mxu0 %v3261
        %3263 = vmatprep.subr.mxu0 0.0
        %3264 = vmatpush1.msra.mxu0 0.0
        %3265 = vmatprep.subr.mxu0 0.0
        %3266 = vmatpush1.msra.mxu0 0.0
        %3267 = vmatprep.subr.mxu0 0.0
        %3268 = vmatpush1.msra.mxu0 0.0
        %3269 = vmatprep.subr.mxu0 0.0
        %3270 = vmatpush1.msra.mxu0 0.0
        %3271 = vmatprep.subr.mxu0 0.0
        %3272 = vmatpush1.msra.mxu0 0.0
        %3273 = vmatprep.subr.mxu0 0.0
        %3274 = vmatpush1.msra.mxu0 0.0
        %3275 = vmatprep.subr.mxu0 0.0
        %3276 = vmatpush1.msra.mxu0 0.0
        %3277 = vmatprep.subr.mxu0 0.0
        %3278 = vmatpush1.msra.mxu0 0.0
        %3279 = vmatprep.subr.mxu0 0.0
        %3280 = vmatpush1.msra.mxu0 0.0
        %3281 = vmatprep.subr.mxu0 0.0
        %3282 = vmatpush1.msra.mxu0 0.0
        %3283 = vmatprep.subr.mxu0 0.0
        %3284 = vmatpush1.msra.mxu0 0.0
        %3285 = vmatprep.subr.mxu0 0.0
        %3286 = vmatpush1.msra.mxu0 0.0
        %3287 = vmatprep.subr.mxu0 0.0
        %3288 = vmatpush1.msra.mxu0 0.0
        %3289 = vmatprep.subr.mxu0 0.0
        %3290 = vmatpush1.msra.mxu0 0.0
        %3291 = vmatprep.subr.mxu0 0.0
        %3292 = vmatpush1.msra.mxu0 0.0
        %3293 = vmatprep.subr.mxu0 0.0
        %3294 = vmatpush1.msra.mxu0 0.0
        %3295 = vmatprep.mubr.f32.mxu0 0.0
        %v3296 = vand.u32 %v2011, 4294901760
        %3297 = vmatmul.mubr.f32.gmra.mrb[0].mxu0 %v3296
        %v3298 = vpop.f32.mrb[0].mxu0
        %v3299 = vadd.f32 %v3128, %v3298
        %v3300 = vpop.f32.mrb[0].mxu0
        %3301 = vmatprep.mubr.f32.mxu0 0.0
        %v3302 = vand.u32 %v2014, 4294901760
        %3303 = vmatmul.mubr.f32.gmra.mrb[0].mxu0 %v3302
        %v3304 = vpop.f32.mrb[0].mxu0
        %v3305 = vadd.f32 %v3138, %v3304
        %v3306 = vpop.f32.mrb[0].mxu0
        %3307 = vmatprep.mubr.f32.mxu0 0.0
        %v3308 = vand.u32 %v2017, 4294901760
        %3309 = vmatmul.mubr.f32.gmra.mrb[0].mxu0 %v3308
        %v3310 = vpop.f32.mrb[0].mxu0
        %v3311 = vadd.f32 %v3148, %v3310
        %v3312 = vpop.f32.mrb[0].mxu0
        %3313 = vdwg.mxu0
        %3314 = vmatprep.subr.mxu0 0.0
        %v3315 = vand.u32 %v2050, 4294901760
        %v3316 = vsub.f32 %v2050, %v3315
        %3317 = vmatpush1.msra.mxu0 %v3316
        %3318 = vmatprep.subr.mxu0 0.0
        %v3319 = vand.u32 %v2051, 4294901760
        %v3320 = vsub.f32 %v2051, %v3319
        %3321 = vmatpush1.msra.mxu0 %v3320
        %3322 = vmatprep.subr.mxu0 0.0
        %v3323 = vand.u32 %v2052, 4294901760
        %v3324 = vsub.f32 %v2052, %v3323
        %3325 = vmatpush1.msra.mxu0 %v3324
        %3326 = vmatprep.subr.mxu0 0.0
        %v3327 = vand.u32 %v2053, 4294901760
        %v3328 = vsub.f32 %v2053, %v3327
        %3329 = vmatpush1.msra.mxu0 %v3328
        %3330 = vmatprep.subr.mxu0 0.0
        %v3331 = vand.u32 %v2054, 4294901760
        %v3332 = vsub.f32 %v2054, %v3331
        %3333 = vmatpush1.msra.mxu0 %v3332
        %3334 = vmatprep.subr.mxu0 0.0
        %v3335 = vand.u32 %v2055, 4294901760
        %v3336 = vsub.f32 %v2055, %v3335
        %3337 = vmatpush1.msra.mxu0 %v3336
        %3338 = vmatprep.subr.mxu0 0.0
        %v3339 = vand.u32 %v2056, 4294901760
        %v3340 = vsub.f32 %v2056, %v3339
        %3341 = vmatpush1.msra.mxu0 %v3340
        %3342 = vmatprep.subr.mxu0 0.0
        %v3343 = vand.u32 %v2057, 4294901760
        %v3344 = vsub.f32 %v2057, %v3343
        %3345 = vmatpush1.msra.mxu0 %v3344
        %3346 = vmatprep.subr.mxu0 0.0
        %v3347 = vand.u32 %v2058, 4294901760
        %v3348 = vsub.f32 %v2058, %v3347
        %3349 = vmatpush1.msra.mxu0 %v3348
        %3350 = vmatprep.subr.mxu0 0.0
        %v3351 = vand.u32 %v2059, 4294901760
        %v3352 = vsub.f32 %v2059, %v3351
        %3353 = vmatpush1.msra.mxu0 %v3352
        %3354 = vmatprep.subr.mxu0 0.0
        %v3355 = vand.u32 %v2060, 4294901760
        %v3356 = vsub.f32 %v2060, %v3355
        %3357 = vmatpush1.msra.mxu0 %v3356
        %3358 = vmatprep.subr.mxu0 0.0
        %v3359 = vand.u32 %v2061, 4294901760
        %v3360 = vsub.f32 %v2061, %v3359
        %3361 = vmatpush1.msra.mxu0 %v3360
        %3362 = vmatprep.subr.mxu0 0.0
        %v3363 = vand.u32 %v2062, 4294901760
        %v3364 = vsub.f32 %v2062, %v3363
        %3365 = vmatpush1.msra.mxu0 %v3364
        %3366 = vmatprep.subr.mxu0 0.0
        %v3367 = vand.u32 %v2063, 4294901760
        %v3368 = vsub.f32 %v2063, %v3367
        %3369 = vmatpush1.msra.mxu0 %v3368
        %3370 = vmatprep.subr.mxu0 0.0
        %v3371 = vand.u32 %v2064, 4294901760
        %v3372 = vsub.f32 %v2064, %v3371
        %3373 = vmatpush1.msra.mxu0 %v3372
        %3374 = vmatprep.subr.mxu0 0.0
        %v3375 = vand.u32 %v2065, 4294901760
        %v3376 = vsub.f32 %v2065, %v3375
        %3377 = vmatpush1.msra.mxu0 %v3376
        %3378 = vmatprep.subr.mxu0 0.0
        %3379 = vmatpush1.msra.mxu0 0.0
        %3380 = vmatprep.subr.mxu0 0.0
        %3381 = vmatpush1.msra.mxu0 0.0
        %3382 = vmatprep.subr.mxu0 0.0
        %3383 = vmatpush1.msra.mxu0 0.0
        %3384 = vmatprep.subr.mxu0 0.0
        %3385 = vmatpush1.msra.mxu0 0.0
        %3386 = vmatprep.subr.mxu0 0.0
        %3387 = vmatpush1.msra.mxu0 0.0
        %3388 = vmatprep.subr.mxu0 0.0
        %3389 = vmatpush1.msra.mxu0 0.0
        %3390 = vmatprep.subr.mxu0 0.0
        %3391 = vmatpush1.msra.mxu0 0.0
        %3392 = vmatprep.subr.mxu0 0.0
        %3393 = vmatpush1.msra.mxu0 0.0
        %3394 = vmatprep.subr.mxu0 0.0
        %3395 = vmatpush1.msra.mxu0 0.0
        %3396 = vmatprep.subr.mxu0 0.0
        %3397 = vmatpush1.msra.mxu0 0.0
        %3398 = vmatprep.subr.mxu0 0.0
        %3399 = vmatpush1.msra.mxu0 0.0
        %3400 = vmatprep.subr.mxu0 0.0
        %3401 = vmatpush1.msra.mxu0 0.0
        %3402 = vmatprep.subr.mxu0 0.0
        %3403 = vmatpush1.msra.mxu0 0.0
        %3404 = vmatprep.subr.mxu0 0.0
        %3405 = vmatpush1.msra.mxu0 0.0
        %3406 = vmatprep.subr.mxu0 0.0
        %3407 = vmatpush1.msra.mxu0 0.0
        %3408 = vmatprep.subr.mxu0 0.0
        %3409 = vmatpush1.msra.mxu0 0.0
        %3410 = vmatprep.mubr.f32.mxu0 0.0
        %v3411 = vand.u32 %v2011, 4294901760
        %v3412 = vsub.f32 %v2011, %v3411
        %3413 = vmatmul.mubr.f32.gmra.mrb[0].mxu0 %v3412
        %v3414 = vpop.f32.mrb[0].mxu0
        %v3415 = vadd.f32 %v3299, %v3414
        %v3416 = vpop.f32.mrb[0].mxu0
        %3417 = vmatprep.mubr.f32.mxu0 0.0
        %v3418 = vand.u32 %v2014, 4294901760
        %v3419 = vsub.f32 %v2014, %v3418
        %3420 = vmatmul.mubr.f32.gmra.mrb[0].mxu0 %v3419
        %v3421 = vpop.f32.mrb[0].mxu0
        %v3422 = vadd.f32 %v3305, %v3421
        %v3423 = vpop.f32.mrb[0].mxu0
        %3424 = vmatprep.mubr.f32.mxu0 0.0
        %v3425 = vand.u32 %v2017, 4294901760
        %v3426 = vsub.f32 %v2017, %v3425
        %3427 = vmatmul.mubr.f32.gmra.mrb[0].mxu0 %v3426
        %v3428 = vpop.f32.mrb[0].mxu0
        %v3429 = vadd.f32 %v3311, %v3428
        %v3430 = vpop.f32.mrb[0].mxu0
        %3431 = vdwg.mxu0
        %3432 = vmatprep.subr.mxu0 0.0
        %v3433 = vand.u32 %v2050, 4294901760
        %3434 = vmatpush1.msra.mxu0 %v3433
        %3435 = vmatprep.subr.mxu0 0.0
        %v3436 = vand.u32 %v2051, 4294901760
        %3437 = vmatpush1.msra.mxu0 %v3436
        %3438 = vmatprep.subr.mxu0 0.0
        %v3439 = vand.u32 %v2052, 4294901760
        %3440 = vmatpush1.msra.mxu0 %v3439
        %3441 = vmatprep.subr.mxu0 0.0
        %v3442 = vand.u32 %v2053, 4294901760
        %3443 = vmatpush1.msra.mxu0 %v3442
        %3444 = vmatprep.subr.mxu0 0.0
        %v3445 = vand.u32 %v2054, 4294901760
        %3446 = vmatpush1.msra.mxu0 %v3445
        %3447 = vmatprep.subr.mxu0 0.0
        %v3448 = vand.u32 %v2055, 4294901760
        %3449 = vmatpush1.msra.mxu0 %v3448
        %3450 = vmatprep.subr.mxu0 0.0
        %v3451 = vand.u32 %v2056, 4294901760
        %3452 = vmatpush1.msra.mxu0 %v3451
        %3453 = vmatprep.subr.mxu0 0.0
        %v3454 = vand.u32 %v2057, 4294901760
        %3455 = vmatpush1.msra.mxu0 %v3454
        %3456 = vmatprep.subr.mxu0 0.0
        %v3457 = vand.u32 %v2058, 4294901760
        %3458 = vmatpush1.msra.mxu0 %v3457
        %3459 = vmatprep.subr.mxu0 0.0
        %v3460 = vand.u32 %v2059, 4294901760
        %3461 = vmatpush1.msra.mxu0 %v3460
        %3462 = vmatprep.subr.mxu0 0.0
        %v3463 = vand.u32 %v2060, 4294901760
        %3464 = vmatpush1.msra.mxu0 %v3463
        %3465 = vmatprep.subr.mxu0 0.0
        %v3466 = vand.u32 %v2061, 4294901760
        %3467 = vmatpush1.msra.mxu0 %v3466
        %3468 = vmatprep.subr.mxu0 0.0
        %v3469 = vand.u32 %v2062, 4294901760
        %3470 = vmatpush1.msra.mxu0 %v3469
        %3471 = vmatprep.subr.mxu0 0.0
        %v3472 = vand.u32 %v2063, 4294901760
        %3473 = vmatpush1.msra.mxu0 %v3472
        %3474 = vmatprep.subr.mxu0 0.0
        %v3475 = vand.u32 %v2064, 4294901760
        %3476 = vmatpush1.msra.mxu0 %v3475
        %3477 = vmatprep.subr.mxu0 0.0
        %v3478 = vand.u32 %v2065, 4294901760
        %3479 = vmatpush1.msra.mxu0 %v3478
        %3480 = vmatprep.subr.mxu0 0.0
        %3481 = vmatpush1.msra.mxu0 0.0
        %3482 = vmatprep.subr.mxu0 0.0
        %3483 = vmatpush1.msra.mxu0 0.0
        %3484 = vmatprep.subr.mxu0 0.0
        %3485 = vmatpush1.msra.mxu0 0.0
        %3486 = vmatprep.subr.mxu0 0.0
        %3487 = vmatpush1.msra.mxu0 0.0
        %3488 = vmatprep.subr.mxu0 0.0
        %3489 = vmatpush1.msra.mxu0 0.0
        %3490 = vmatprep.subr.mxu0 0.0
        %3491 = vmatpush1.msra.mxu0 0.0
        %3492 = vmatprep.subr.mxu0 0.0
        %3493 = vmatpush1.msra.mxu0 0.0
        %3494 = vmatprep.subr.mxu0 0.0
        %3495 = vmatpush1.msra.mxu0 0.0
        %3496 = vmatprep.subr.mxu0 0.0
        %3497 = vmatpush1.msra.mxu0 0.0
        %3498 = vmatprep.subr.mxu0 0.0
        %3499 = vmatpush1.msra.mxu0 0.0
        %3500 = vmatprep.subr.mxu0 0.0
        %3501 = vmatpush1.msra.mxu0 0.0
        %3502 = vmatprep.subr.mxu0 0.0
        %3503 = vmatpush1.msra.mxu0 0.0
        %3504 = vmatprep.subr.mxu0 0.0
        %3505 = vmatpush1.msra.mxu0 0.0
        %3506 = vmatprep.subr.mxu0 0.0
        %3507 = vmatpush1.msra.mxu0 0.0
        %3508 = vmatprep.subr.mxu0 0.0
        %3509 = vmatpush1.msra.mxu0 0.0
        %3510 = vmatprep.subr.mxu0 0.0
        %3511 = vmatpush1.msra.mxu0 0.0
        %3512 = vmatprep.mubr.f32.mxu0 0.0
        %v3513 = vand.u32 %v2011, 4294901760
        %v3514 = vsub.f32 %v2011, %v3513
        %v3515 = vand.u32 %v3514, 4294901760
        %3516 = vmatmul.mubr.f32.gmra.mrb[0].mxu0 %v3515
        %v3517 = vpop.f32.mrb[0].mxu0
        %v3518 = vadd.f32 %v3415, %v3517
        %v3519 = vpop.f32.mrb[0].mxu0
        %3520 = vmatprep.mubr.f32.mxu0 0.0
        %v3521 = vand.u32 %v2014, 4294901760
        %v3522 = vsub.f32 %v2014, %v3521
        %v3523 = vand.u32 %v3522, 4294901760
        %3524 = vmatmul.mubr.f32.gmra.mrb[0].mxu0 %v3523
        %v3525 = vpop.f32.mrb[0].mxu0
        %v3526 = vadd.f32 %v3422, %v3525
        %v3527 = vpop.f32.mrb[0].mxu0
        %3528 = vmatprep.mubr.f32.mxu0 0.0
        %v3529 = vand.u32 %v2017, 4294901760
        %v3530 = vsub.f32 %v2017, %v3529
        %v3531 = vand.u32 %v3530, 4294901760
        %3532 = vmatmul.mubr.f32.gmra.mrb[0].mxu0 %v3531
        %v3533 = vpop.f32.mrb[0].mxu0
        %v3534 = vadd.f32 %v3429, %v3533
        %v3535 = vpop.f32.mrb[0].mxu0
        %3536 = vdwg.mxu0
        %3537 = vmatprep.subr.mxu0 0.0
        %v3538 = vand.u32 %v2050, 4294901760
        %v3539 = vsub.f32 %v2050, %v3538
        %v3540 = vand.u32 %v3539, 4294901760
        %3541 = vmatpush1.msra.mxu0 %v3540
        %3542 = vmatprep.subr.mxu0 0.0
        %v3543 = vand.u32 %v2051, 4294901760
        %v3544 = vsub.f32 %v2051, %v3543
        %v3545 = vand.u32 %v3544, 4294901760
        %3546 = vmatpush1.msra.mxu0 %v3545
        %3547 = vmatprep.subr.mxu0 0.0
        %v3548 = vand.u32 %v2052, 4294901760
        %v3549 = vsub.f32 %v2052, %v3548
        %v3550 = vand.u32 %v3549, 4294901760
        %3551 = vmatpush1.msra.mxu0 %v3550
        %3552 = vmatprep.subr.mxu0 0.0
        %v3553 = vand.u32 %v2053, 4294901760
        %v3554 = vsub.f32 %v2053, %v3553
        %v3555 = vand.u32 %v3554, 4294901760
        %3556 = vmatpush1.msra.mxu0 %v3555
        %3557 = vmatprep.subr.mxu0 0.0
        %v3558 = vand.u32 %v2054, 4294901760
        %v3559 = vsub.f32 %v2054, %v3558
        %v3560 = vand.u32 %v3559, 4294901760
        %3561 = vmatpush1.msra.mxu0 %v3560
        %3562 = vmatprep.subr.mxu0 0.0
        %v3563 = vand.u32 %v2055, 4294901760
        %v3564 = vsub.f32 %v2055, %v3563
        %v3565 = vand.u32 %v3564, 4294901760
        %3566 = vmatpush1.msra.mxu0 %v3565
        %3567 = vmatprep.subr.mxu0 0.0
        %v3568 = vand.u32 %v2056, 4294901760
        %v3569 = vsub.f32 %v2056, %v3568
        %v3570 = vand.u32 %v3569, 4294901760
        %3571 = vmatpush1.msra.mxu0 %v3570
        %3572 = vmatprep.subr.mxu0 0.0
        %v3573 = vand.u32 %v2057, 4294901760
        %v3574 = vsub.f32 %v2057, %v3573
        %v3575 = vand.u32 %v3574, 4294901760
        %3576 = vmatpush1.msra.mxu0 %v3575
        %3577 = vmatprep.subr.mxu0 0.0
        %v3578 = vand.u32 %v2058, 4294901760
        %v3579 = vsub.f32 %v2058, %v3578
        %v3580 = vand.u32 %v3579, 4294901760
        %3581 = vmatpush1.msra.mxu0 %v3580
        %3582 = vmatprep.subr.mxu0 0.0
        %v3583 = vand.u32 %v2059, 4294901760
        %v3584 = vsub.f32 %v2059, %v3583
        %v3585 = vand.u32 %v3584, 4294901760
        %3586 = vmatpush1.msra.mxu0 %v3585
        %3587 = vmatprep.subr.mxu0 0.0
        %v3588 = vand.u32 %v2060, 4294901760
        %v3589 = vsub.f32 %v2060, %v3588
        %v3590 = vand.u32 %v3589, 4294901760
        %3591 = vmatpush1.msra.mxu0 %v3590
        %3592 = vmatprep.subr.mxu0 0.0
        %v3593 = vand.u32 %v2061, 4294901760
        %v3594 = vsub.f32 %v2061, %v3593
        %v3595 = vand.u32 %v3594, 4294901760
        %3596 = vmatpush1.msra.mxu0 %v3595
        %3597 = vmatprep.subr.mxu0 0.0
        %v3598 = vand.u32 %v2062, 4294901760
        %v3599 = vsub.f32 %v2062, %v3598
        %v3600 = vand.u32 %v3599, 4294901760
        %3601 = vmatpush1.msra.mxu0 %v3600
        %3602 = vmatprep.subr.mxu0 0.0
        %v3603 = vand.u32 %v2063, 4294901760
        %v3604 = vsub.f32 %v2063, %v3603
        %v3605 = vand.u32 %v3604, 4294901760
        %3606 = vmatpush1.msra.mxu0 %v3605
        %3607 = vmatprep.subr.mxu0 0.0
        %v3608 = vand.u32 %v2064, 4294901760
        %v3609 = vsub.f32 %v2064, %v3608
        %v3610 = vand.u32 %v3609, 4294901760
        %3611 = vmatpush1.msra.mxu0 %v3610
        %3612 = vmatprep.subr.mxu0 0.0
        %v3613 = vand.u32 %v2065, 4294901760
        %v3614 = vsub.f32 %v2065, %v3613
        %v3615 = vand.u32 %v3614, 4294901760
        %3616 = vmatpush1.msra.mxu0 %v3615
        %3617 = vmatprep.subr.mxu0 0.0
        %3618 = vmatpush1.msra.mxu0 0.0
        %3619 = vmatprep.subr.mxu0 0.0
        %3620 = vmatpush1.msra.mxu0 0.0
        %3621 = vmatprep.subr.mxu0 0.0
        %3622 = vmatpush1.msra.mxu0 0.0
        %3623 = vmatprep.subr.mxu0 0.0
        %3624 = vmatpush1.msra.mxu0 0.0
        %3625 = vmatprep.subr.mxu0 0.0
        %3626 = vmatpush1.msra.mxu0 0.0
        %3627 = vmatprep.subr.mxu0 0.0
        %3628 = vmatpush1.msra.mxu0 0.0
        %3629 = vmatprep.subr.mxu0 0.0
        %3630 = vmatpush1.msra.mxu0 0.0
        %3631 = vmatprep.subr.mxu0 0.0
        %3632 = vmatpush1.msra.mxu0 0.0
        %3633 = vmatprep.subr.mxu0 0.0
        %3634 = vmatpush1.msra.mxu0 0.0
        %3635 = vmatprep.subr.mxu0 0.0
        %3636 = vmatpush1.msra.mxu0 0.0
        %3637 = vmatprep.subr.mxu0 0.0
        %3638 = vmatpush1.msra.mxu0 0.0
        %3639 = vmatprep.subr.mxu0 0.0
        %3640 = vmatpush1.msra.mxu0 0.0
        %3641 = vmatprep.subr.mxu0 0.0
        %3642 = vmatpush1.msra.mxu0 0.0
        %3643 = vmatprep.subr.mxu0 0.0
        %3644 = vmatpush1.msra.mxu0 0.0
        %3645 = vmatprep.subr.mxu0 0.0
        %3646 = vmatpush1.msra.mxu0 0.0
        %3647 = vmatprep.subr.mxu0 0.0
        %3648 = vmatpush1.msra.mxu0 0.0
        %3649 = vmatprep.mubr.f32.mxu0 0.0
        %v3650 = vand.u32 %v2011, 4294901760
        %3651 = vmatmul.mubr.f32.gmra.mrb[0].mxu0 %v3650
        %v3652 = vpop.f32.mrb[0].mxu0
        %v3653 = vadd.f32 %v3518, %v3652
        %v3654 = vpop.f32.mrb[0].mxu0
        %3655 = vmatprep.mubr.f32.mxu0 0.0
        %v3656 = vand.u32 %v2014, 4294901760
        %3657 = vmatmul.mubr.f32.gmra.mrb[0].mxu0 %v3656
        %v3658 = vpop.f32.mrb[0].mxu0
        %v3659 = vadd.f32 %v3526, %v3658
        %v3660 = vpop.f32.mrb[0].mxu0
        %3661 = vmatprep.mubr.f32.mxu0 0.0
        %v3662 = vand.u32 %v2017, 4294901760
        %3663 = vmatmul.mubr.f32.gmra.mrb[0].mxu0 %v3662
        %v3664 = vpop.f32.mrb[0].mxu0
        %v3665 = vadd.f32 %v3534, %v3664
        %v3666 = vpop.f32.mrb[0].mxu0
        %3667 = vdwg.mxu0
        %3668 = vmatprep.subr.mxu0 0.0
        %v3669 = vand.u32 %v2050, 4294901760
        %3670 = vmatpush1.msra.mxu0 %v3669
        %3671 = vmatprep.subr.mxu0 0.0
        %v3672 = vand.u32 %v2051, 4294901760
        %3673 = vmatpush1.msra.mxu0 %v3672
        %3674 = vmatprep.subr.mxu0 0.0
        %v3675 = vand.u32 %v2052, 4294901760
        %3676 = vmatpush1.msra.mxu0 %v3675
        %3677 = vmatprep.subr.mxu0 0.0
        %v3678 = vand.u32 %v2053, 4294901760
        %3679 = vmatpush1.msra.mxu0 %v3678
        %3680 = vmatprep.subr.mxu0 0.0
        %v3681 = vand.u32 %v2054, 4294901760
        %3682 = vmatpush1.msra.mxu0 %v3681
        %3683 = vmatprep.subr.mxu0 0.0
        %v3684 = vand.u32 %v2055, 4294901760
        %3685 = vmatpush1.msra.mxu0 %v3684
        %3686 = vmatprep.subr.mxu0 0.0
        %v3687 = vand.u32 %v2056, 4294901760
        %3688 = vmatpush1.msra.mxu0 %v3687
        %3689 = vmatprep.subr.mxu0 0.0
        %v3690 = vand.u32 %v2057, 4294901760
        %3691 = vmatpush1.msra.mxu0 %v3690
        %3692 = vmatprep.subr.mxu0 0.0
        %v3693 = vand.u32 %v2058, 4294901760
        %3694 = vmatpush1.msra.mxu0 %v3693
        %3695 = vmatprep.subr.mxu0 0.0
        %v3696 = vand.u32 %v2059, 4294901760
        %3697 = vmatpush1.msra.mxu0 %v3696
        %3698 = vmatprep.subr.mxu0 0.0
        %v3699 = vand.u32 %v2060, 4294901760
        %3700 = vmatpush1.msra.mxu0 %v3699
        %3701 = vmatprep.subr.mxu0 0.0
        %v3702 = vand.u32 %v2061, 4294901760
        %3703 = vmatpush1.msra.mxu0 %v3702
        %3704 = vmatprep.subr.mxu0 0.0
        %v3705 = vand.u32 %v2062, 4294901760
        %3706 = vmatpush1.msra.mxu0 %v3705
        %3707 = vmatprep.subr.mxu0 0.0
        %v3708 = vand.u32 %v2063, 4294901760
        %3709 = vmatpush1.msra.mxu0 %v3708
        %3710 = vmatprep.subr.mxu0 0.0
        %v3711 = vand.u32 %v2064, 4294901760
        %3712 = vmatpush1.msra.mxu0 %v3711
        %3713 = vmatprep.subr.mxu0 0.0
        %v3714 = vand.u32 %v2065, 4294901760
        %3715 = vmatpush1.msra.mxu0 %v3714
        %3716 = vmatprep.subr.mxu0 0.0
        %3717 = vmatpush1.msra.mxu0 0.0
        %3718 = vmatprep.subr.mxu0 0.0
        %3719 = vmatpush1.msra.mxu0 0.0
        %3720 = vmatprep.subr.mxu0 0.0
        %3721 = vmatpush1.msra.mxu0 0.0
        %3722 = vmatprep.subr.mxu0 0.0
        %3723 = vmatpush1.msra.mxu0 0.0
        %3724 = vmatprep.subr.mxu0 0.0
        %3725 = vmatpush1.msra.mxu0 0.0
        %3726 = vmatprep.subr.mxu0 0.0
        %3727 = vmatpush1.msra.mxu0 0.0
        %3728 = vmatprep.subr.mxu0 0.0
        %3729 = vmatpush1.msra.mxu0 0.0
        %3730 = vmatprep.subr.mxu0 0.0
        %3731 = vmatpush1.msra.mxu0 0.0
        %3732 = vmatprep.subr.mxu0 0.0
        %3733 = vmatpush1.msra.mxu0 0.0
        %3734 = vmatprep.subr.mxu0 0.0
        %3735 = vmatpush1.msra.mxu0 0.0
        %3736 = vmatprep.subr.mxu0 0.0
        %3737 = vmatpush1.msra.mxu0 0.0
        %3738 = vmatprep.subr.mxu0 0.0
        %3739 = vmatpush1.msra.mxu0 0.0
        %3740 = vmatprep.subr.mxu0 0.0
        %3741 = vmatpush1.msra.mxu0 0.0
        %3742 = vmatprep.subr.mxu0 0.0
        %3743 = vmatpush1.msra.mxu0 0.0
        %3744 = vmatprep.subr.mxu0 0.0
        %3745 = vmatpush1.msra.mxu0 0.0
        %3746 = vmatprep.subr.mxu0 0.0
        %3747 = vmatpush1.msra.mxu0 0.0
        %3748 = vmatprep.mubr.f32.mxu0 0.0
        %v3749 = vand.u32 %v2011, 4294901760
        %3750 = vmatmul.mubr.f32.gmra.mrb[0].mxu0 %v3749
        %v3751 = vpop.f32.mrb[0].mxu0
        %v3752 = vadd.f32 %v3653, %v3751
        %v3753 = vpop.f32.mrb[0].mxu0
        %3754 = vmatprep.mubr.f32.mxu0 0.0
        %v3755 = vand.u32 %v2014, 4294901760
        %3756 = vmatmul.mubr.f32.gmra.mrb[0].mxu0 %v3755
        %v3757 = vpop.f32.mrb[0].mxu0
        %v3758 = vadd.f32 %v3659, %v3757
        %v3759 = vpop.f32.mrb[0].mxu0
        %3760 = vmatprep.mubr.f32.mxu0 0.0
        %v3761 = vand.u32 %v2017, 4294901760
        %3762 = vmatmul.mubr.f32.gmra.mrb[0].mxu0 %v3761
        %v3763 = vpop.f32.mrb[0].mxu0
        %v3764 = vadd.f32 %v3665, %v3763
        %v3765 = vpop.f32.mrb[0].mxu0
        %3766 = vdwg.mxu0
        %vm3767 = vcmask 392192
        %3768 = vst.msk [vmem:[%s232] sm:$0xff] %vm3767, %v3752
        %3769 = vst.msk [vmem:[%s232 + $0x8] sm:$0xff] %vm3767, %v3758
        %3770 = vst.msk [vmem:[%s232 + $0x10] sm:$0xff] %vm3767, %v3764
        %s3771 = sand.u32 %s117, 1
        %s3772 = sand.u32 %s117, 1
        %s3773 = smul.addr %s3772, 24
        %s3774 = scalar_lea.vmem [#allocation2], %s3773
        // Predicated region
        $region37: #{normal_renderer.1} parent=35 // pred_check
          %p3775 = pneg %p127
        $region38: #{normal_renderer.1} parent=35 // pred_check_branch
          %3777 = sbr.rel (%p3775) target = $region40
        $region39: #{normal_renderer.1} parent=35 // pred_region
          %s3778 = smul.u32 3, %s15
          %s3779 = ssub.s32 5, %s3778
          %p3780 = scmp.lt.s32.totalorder %s3779, 3
          %s3781 = scalar_select %p3780, %s3779, 3
          %s3782 = smul.u32 128, %s3781
          %p3783 = scmp.ne.s32.totalorder 0, %s3782
          %s3784 = smul.addr %s3778, 8
          %s3785 = scalar_lea.vmem %s4, %s3784
          // Predicated region
          $region41: #{normal_renderer.1} parent=39 // pred_check
            %p3786 = pneg %p3783
          $region42: #{normal_renderer.1} parent=39 // pred_check_branch
            %3788 = sbr.rel (%p3786) target = $region44
          $region43: #{normal_renderer.1} parent=39 // pred_region
            // Predicated region
            $region45: #{normal_renderer.1} parent=43 // pred_check
              _
            $region46: #{normal_renderer.1} parent=43 // pred_check_branch
              %3790 = sbr.rel (0) target = $region48
            $region47: #{normal_renderer.1} parent=43 // pred_region
              // Predicated region
              $region67: #{normal_renderer.1} parent=47 // pred_check
                _
              $region68: #{normal_renderer.1} parent=47 // pred_check_branch
                %3844 = sbr.rel (0) target = $region70
              $region69: #{normal_renderer.1} parent=47 // pred_region
                %s3845 = sdiv.u32.pop %s3781, 3
                %s3846 = srem.u32.pop %s3781, 3
                // While loop
                $region71: #{normal_renderer.1} parent=69 // loop_pre_header
                  _
                $region72: #{normal_renderer.1} parent=69 // loop_header
                  %s3848 = sphi 0, %s3850
                  %p3849 = scmp.ge.s32.totalorder %s3848, %s3845
                  %s3853 = sphi 0, %s3864
                  %s3854 = sphi %s3774, %s3867
                  %s3855 = sphi %s3785, %s3868
                $region73: #{normal_renderer.1} parent=69 // loop_header_branch
                  %3852 = sbr.rel (%p3849) target = $region77
                $region74: #{normal_renderer.1} parent=69 // loop_body
                  %v3856 = vld [vmem:[%s3854] sm:$0xff]
                  %3857 = vst [vmem:[%s3855] sm:$0xff] %v3856
                  %v3858 = vld [vmem:[%s3854 + $0x8] sm:$0xff]
                  %3859 = vst [vmem:[%s3855 + $0x8] sm:$0xff] %v3858
                  %v3860 = vld [vmem:[%s3854 + $0x10] sm:$0xff]
                  %3861 = vst [vmem:[%s3855 + $0x10] sm:$0xff] %v3860
                  %s3862 = sadd.s32 1, %s3853
                  %p3863 = scmp.ge.s32.totalorder %s3862, %s3845
                  %s3864 = scalar_select %p3863, 0, %s3862
                  %s3865 = smul.u32 %s3864, 24
                  %s3866 = smul.u32 %s3864, 24
                  %s3867 = scalar_lea.vmem %s3774, %s3865 [#allocation2]
                  %s3868 = scalar_lea.vmem %s3785, %s3866
                $region75: #{normal_renderer.1} parent=69 // loop_footer
                  %s3850 = sadd.s32 %s3848, 1
                $region76: #{normal_renderer.1} parent=69 // loop_footer_branch
                  %3847 = sbr.rel target = $region72
                $region77: #{normal_renderer.1} parent=69 // loop_exit
                  _
                %s3869 = sdiv.u32.pop %s3781, 3
                %s3870 = srem.u32.pop %s3781, 3
                %s3871 = smul.u32 %s3869, 3
                %s3872 = smul.u32 8, %s3871
                %s3873 = scalar_lea.vmem %s3774, %s3872 [#allocation2]
                %s3874 = smul.u32 8, %s3871
                %s3875 = scalar_lea.vmem %s3785, %s3874
                // While loop
                $region78: #{normal_renderer.1} parent=69 // loop_pre_header
                  _
                $region79: #{normal_renderer.1} parent=69 // loop_header
                  %s3877 = sphi 0, %s3879
                  %p3878 = scmp.ge.s32.totalorder %s3877, %s3870
                  %s3882 = sphi 0, %s3889
                  %s3883 = sphi %s3873, %s3892
                  %s3884 = sphi %s3875, %s3893
                $region80: #{normal_renderer.1} parent=69 // loop_header_branch
                  %3881 = sbr.rel (%p3878) target = $region84
                $region81: #{normal_renderer.1} parent=69 // loop_body
                  %v3885 = vld [vmem:[%s3883] sm:$0xff]
                  %3886 = vst [vmem:[%s3884] sm:$0xff] %v3885
                  %s3887 = sadd.s32 1, %s3882
                  %p3888 = scmp.ge.s32.totalorder %s3887, %s3870
                  %s3889 = scalar_select %p3888, 0, %s3887
                  %s3890 = smul.u32 %s3889, 8
                  %s3891 = smul.u32 %s3889, 8
                  %s3892 = scalar_lea.vmem %s3873, %s3890 [#allocation2]
                  %s3893 = scalar_lea.vmem %s3875, %s3891
                $region82: #{normal_renderer.1} parent=69 // loop_footer
                  %s3879 = sadd.s32 %s3877, 1
                $region83: #{normal_renderer.1} parent=69 // loop_footer_branch
                  %3876 = sbr.rel target = $region79
                $region84: #{normal_renderer.1} parent=69 // loop_exit
                  _
              $region70: #{normal_renderer.1} parent=47 // pred_fallthru
                _
              // Predicated region
              $region85: #{normal_renderer.1} parent=47 // pred_check
                _
              $region86: #{normal_renderer.1} parent=47 // pred_check_branch
                %3895 = sbr.rel target = $region88
              $region87: #{normal_renderer.1} parent=47 // pred_region
                _
              $region88: #{normal_renderer.1} parent=47 // pred_fallthru
                _
            $region48: #{normal_renderer.1} parent=43 // pred_fallthru
              _
            // Predicated region
            $region49: #{normal_renderer.1} parent=43 // pred_check
              _
            $region50: #{normal_renderer.1} parent=43 // pred_check_branch
              %3792 = sbr.rel target = $region52
            $region51: #{normal_renderer.1} parent=43 // pred_region
              %s3794 = sdiv.u32.pop %s3781, 3
              %s3795 = srem.u32.pop %s3781, 3
              // While loop
              $region53: #{normal_renderer.1} parent=51 // loop_pre_header
                _
              $region54: #{normal_renderer.1} parent=51 // loop_header
                %s3797 = sphi 0, %s3799
                %p3798 = scmp.ge.s32.totalorder %s3797, %s3794
                %s3802 = sphi 0, %s3813
                %s3803 = sphi %s3774, %s3816
                %s3804 = sphi %s3785, %s3817
              $region55: #{normal_renderer.1} parent=51 // loop_header_branch
                %3801 = sbr.rel (%p3798) target = $region59
              $region56: #{normal_renderer.1} parent=51 // loop_body
                %v3805 = vld [vmem:[%s3803] sm:$0xff]
                %3806 = vst [vmem:[%s3804] sm:$0xff] %v3805
                %v3807 = vld [vmem:[%s3803 + $0x8] sm:$0xff]
                %3808 = vst [vmem:[%s3804 + $0x8] sm:$0xff] %v3807
                %v3809 = vld [vmem:[%s3803 + $0x10] sm:$0xff]
                %3810 = vst [vmem:[%s3804 + $0x10] sm:$0xff] %v3809
                %s3811 = sadd.s32 1, %s3802
                %p3812 = scmp.ge.s32.totalorder %s3811, %s3794
                %s3813 = scalar_select %p3812, 0, %s3811
                %s3814 = smul.u32 %s3813, 24
                %s3815 = smul.u32 %s3813, 24
                %s3816 = scalar_lea.vmem %s3774, %s3814 [#allocation2]
                %s3817 = scalar_lea.vmem %s3785, %s3815
              $region57: #{normal_renderer.1} parent=51 // loop_footer
                %s3799 = sadd.s32 %s3797, 1
              $region58: #{normal_renderer.1} parent=51 // loop_footer_branch
                %3796 = sbr.rel target = $region54
              $region59: #{normal_renderer.1} parent=51 // loop_exit
                _
              %s3818 = sdiv.u32.pop %s3781, 3
              %s3819 = srem.u32.pop %s3781, 3
              %s3820 = smul.u32 %s3818, 3
              %s3821 = smul.u32 8, %s3820
              %s3822 = scalar_lea.vmem %s3774, %s3821 [#allocation2]
              %s3823 = smul.u32 8, %s3820
              %s3824 = scalar_lea.vmem %s3785, %s3823
              // While loop
              $region60: #{normal_renderer.1} parent=51 // loop_pre_header
                _
              $region61: #{normal_renderer.1} parent=51 // loop_header
                %s3826 = sphi 0, %s3828
                %p3827 = scmp.ge.s32.totalorder %s3826, %s3819
                %s3831 = sphi 0, %s3838
                %s3832 = sphi %s3822, %s3841
                %s3833 = sphi %s3824, %s3842
              $region62: #{normal_renderer.1} parent=51 // loop_header_branch
                %3830 = sbr.rel (%p3827) target = $region66
              $region63: #{normal_renderer.1} parent=51 // loop_body
                %v3834 = vld [vmem:[%s3832] sm:$0xff]
                %3835 = vst [vmem:[%s3833] sm:$0xff] %v3834
                %s3836 = sadd.s32 1, %s3831
                %p3837 = scmp.ge.s32.totalorder %s3836, %s3819
                %s3838 = scalar_select %p3837, 0, %s3836
                %s3839 = smul.u32 %s3838, 8
                %s3840 = smul.u32 %s3838, 8
                %s3841 = scalar_lea.vmem %s3822, %s3839 [#allocation2]
                %s3842 = scalar_lea.vmem %s3824, %s3840
              $region64: #{normal_renderer.1} parent=51 // loop_footer
                %s3828 = sadd.s32 %s3826, 1
              $region65: #{normal_renderer.1} parent=51 // loop_footer_branch
                %3825 = sbr.rel target = $region61
              $region66: #{normal_renderer.1} parent=51 // loop_exit
                _
            $region52: #{normal_renderer.1} parent=43 // pred_fallthru
              _
          $region44: #{normal_renderer.1} parent=39 // pred_fallthru
            _
          %3896 = vnop
        $region40: #{normal_renderer.1} parent=35 // pred_fallthru
          _
      $region36: #{normal_renderer.1} parent=5 // pred_fallthru
        _
      %p3897 = scmp.le.s32.totalorder 2, %s10
      // Predicated region
      $region89: #{normal_renderer.1} parent=5 // pred_check
        %p3898 = pneg %p3897
      $region90: #{normal_renderer.1} parent=5 // pred_check_branch
        %3900 = sbr.rel (%p3898) target = $region92
      $region91: #{normal_renderer.1} parent=5 // pred_region
        %s3901 = ssub.s32 %s10, 2
        // Predicated region
        $region93: #{normal_renderer.1} parent=91 // pred_check
          %p3902 = pneg %p133
        $region94: #{normal_renderer.1} parent=91 // pred_check_branch
          %3904 = sbr.rel (%p3902) target = $region96
        $region95: #{normal_renderer.1} parent=91 // pred_region
          %s3905 = sand.u32 %s118, 1
          %s3906 = sand.u32 %s118, 1
          %s3907 = smul.addr %s3906, 24
          %s3908 = scalar_lea.vmem [#allocation2], %s3907
        $region96: #{normal_renderer.1} parent=91 // pred_fallthru
          _
      $region92: #{normal_renderer.1} parent=5 // pred_fallthru
        _
    $region6: #{normal_renderer.1} parent=1 // loop_footer
      %s14 = sadd.s32 1, %s10
    $region7: #{normal_renderer.1} parent=1 // loop_footer_branch
      %9 = sbr.rel target = $region3
    $region8: #{normal_renderer.1} parent=1 // loop_exit
      _

</llo_original>
